<compile_context>
chip_gen: v7x
topology: tpu7x:2x2x1
jax: 0.10.0
libtpu: 0.0.40
codegen_flags: <defaults>
</compile_context>

<pallas_src>
import functools

import jax
import jax.numpy as jnp
from jax import lax
from jax.experimental import pallas as pl
from jax.experimental.pallas import tpu as pltpu


# ----------------------------------------------------------------------------
# Fused Pallas kernel: 2-layer bidirectional LSTM + Linear head
# ----------------------------------------------------------------------------
def bilstm2_head_kernel(x_ref, wih1_ref, whhf1_ref, whhb1_ref, b1_ref,
                        wih2_ref, whhf2_ref, whhb2_ref, b2_ref,
                        linw_ref, linb_ref,
                        scores_ref,
                        midf_scr, midb_scr,
                        *, seq_len, batch):
    """Fused forward pass after the embedding lookup.

    x_ref    : (T*B, E)   bf16   time-major embedded tokens, flattened over (T,B)
    wih1_ref : (E, 8H)    bf16   layer-1 input weights, cols [0:4H]=fwd, [4H:8H]=bwd
    whhf1_ref: (H, 4H)    bf16   layer-1 forward recurrent weights
    whhb1_ref: (H, 4H)    bf16   layer-1 backward recurrent weights
    b1_ref   : (1, 8H)    f32    layer-1 bias (b_ih + b_hh, fwd|bwd)
    wih2_ref : (2H, 8H)   bf16   layer-2 input weights (rows 0:H act on fwd outputs)
    whhf2_ref/whhb2_ref/b2_ref : layer-2 analogues
    linw_ref : (2H, O)    f32    head weights, rows 0:H multiply the BACKWARD hidden
    linb_ref : (1, O)     f32
    scores_ref: (B, O)    f32    output
    midf_scr : (T*B, H)   f32    layer-1 forward hidden states (time-major rows)
    midb_scr : (T*B, H)   f32    layer-1 backward hidden states (time order 0..T-1)
    """
    T, B = seq_len, batch
    H = whhf1_ref.shape[0]
    G = 4 * H
    f32, bf16 = jnp.float32, jnp.bfloat16

    def cell(gates, c_prev):
        # gates: (B, 4H) f32, PyTorch gate order [i, f, g, o].
        sig = jax.nn.sigmoid(gates)   # full-width EUP pass
        tan = jnp.tanh(gates)         # full-width EUP pass
        i_g = sig[:, 0 * H:1 * H]
        f_g = sig[:, 1 * H:2 * H]
        g_g = tan[:, 2 * H:3 * H]
        o_g = sig[:, 3 * H:4 * H]
        c_new = f_g * c_prev + i_g * g_g
        h_new = o_g * jnp.tanh(c_new)
        return h_new, c_new

    zero = jnp.zeros((B, H), f32)

    # ------------------------- Layer 1 -------------------------
    # Hoisted input projection: one (T*B, E) @ (E, 8H) matmul for all timesteps
    # and both directions (bias folded in).
    g1 = jnp.dot(x_ref[...], wih1_ref[...], preferred_element_type=f32) + b1_ref[...]

    h_f = c_f = h_b = c_b = zero
    for t in range(T):                      # trace-time unrolled (T small & static)
        tb = T - 1 - t                      # backward direction walks time reversed
        gf = g1[t * B:(t + 1) * B, 0:G] + jnp.dot(
            h_f.astype(bf16), whhf1_ref[...], preferred_element_type=f32)
        gb = g1[tb * B:(tb + 1) * B, G:2 * G] + jnp.dot(
            h_b.astype(bf16), whhb1_ref[...], preferred_element_type=f32)
        h_f, c_f = cell(gf, c_f)
        h_b, c_b = cell(gb, c_b)
        # Stash layer-1 outputs (needed as layer-2 input); writes are off the
        # recurrence dependence chain.  Backward output is stored in original
        # time order so layer 2 sees the un-reversed sequence.
        midf_scr[t * B:(t + 1) * B, :] = h_f
        midb_scr[tb * B:(tb + 1) * B, :] = h_b

    # ------------------------- Layer 2 -------------------------
    # Input projection from layer-1 outputs.  Splitting W_ih2 into its row halves
    # avoids materializing the (T*B, 2H) fwd/bwd concat.
    g2 = (jnp.dot(midf_scr[...].astype(bf16), wih2_ref[0:H, :],
                  preferred_element_type=f32)
          + jnp.dot(midb_scr[...].astype(bf16), wih2_ref[H:2 * H, :],
                    preferred_element_type=f32)
          + b2_ref[...])

    h_f = c_f = h_b = c_b = zero
    for t in range(T):
        tb = T - 1 - t
        gf = g2[t * B:(t + 1) * B, 0:G] + jnp.dot(
            h_f.astype(bf16), whhf2_ref[...], preferred_element_type=f32)
        gb = g2[tb * B:(tb + 1) * B, G:2 * G] + jnp.dot(
            h_b.astype(bf16), whhb2_ref[...], preferred_element_type=f32)
        h_f, c_f = cell(gf, c_f)
        h_b, c_b = cell(gb, c_b)

    # ------------------------- Head ----------------------------
    # scores = cat([h_last_backward, h_last_forward]) @ W + b
    # (matches PyTorch cat((h_last[-1], h_last[-2]), dim=1)); done as two dots
    # against W's row halves so no lane concat is needed.
    scores_ref[...] = (
        jnp.dot(h_b, linw_ref[0:H, :], preferred_element_type=f32)
        + jnp.dot(h_f, linw_ref[H:2 * H, :], preferred_element_type=f32)
        + linb_ref[...]
    )


# ----------------------------------------------------------------------------
# Wrapper
# ----------------------------------------------------------------------------
def rec_neural_net_forward(params, input_seq):
    """input_seq: (T, B) int32 token ids (time-major, PyTorch nn.LSTM default).
    Returns (B, output_size) scores."""
    assert len(params["lstm"]) == 2, "kernel is specialized to num_layers=2"

    # Embedding lookup (gather) stays in plain JAX.
    x = jnp.take(params["emb"], input_seq, axis=0)            # (T, B, E) f32
    T, B, E = x.shape
    H = params["lstm"][0]["w_hh_f"].shape[0]
    O = params["lin_w"].shape[1]

    bf16 = jnp.bfloat16
    x_flat = x.reshape(T * B, E).astype(bf16)                 # time-major rows

    def pack(lp):
        w_ih = jnp.concatenate([lp["w_ih_f"], lp["w_ih_b"]], axis=1).astype(bf16)
        bias = jnp.concatenate([lp["b_f"], lp["b_b"]], axis=1).astype(jnp.float32)
        return w_ih, lp["w_hh_f"].astype(bf16), lp["w_hh_b"].astype(bf16), bias

    wih1, whhf1, whhb1, b1 = pack(params["lstm"][0])
    wih2, whhf2, whhb2, b2 = pack(params["lstm"][1])

    vmem = pl.BlockSpec(memory_space=pltpu.MemorySpace.VMEM)
    kernel = functools.partial(bilstm2_head_kernel, seq_len=T, batch=B)

    scores = pl.pallas_call(
        kernel,
        out_shape=jax.ShapeDtypeStruct((B, O), jnp.float32),
        in_specs=[vmem] * 11,
        out_specs=vmem,
        scratch_shapes=[
            pltpu.VMEM((T * B, H), jnp.float32),   # layer-1 forward outputs
            pltpu.VMEM((T * B, H), jnp.float32),   # layer-1 backward outputs
        ],
    )(x_flat, wih1, whhf1, whhb1, b1,
      wih2, whhf2, whhb2, b2,
      params["lin_w"].astype(jnp.float32), params["lin_b"].astype(jnp.float32))
    return scores


# ----------------------------------------------------------------------------
# Pure-JAX f32 reference (PyTorch semantics) for sanity check
# ----------------------------------------------------------------------------
def lstm_dir_ref(x_seq, w_ih, w_hh, b):
    H = w_hh.shape[0]
    B = x_seq.shape[1]

    def step(carry, x_t):
        h, c = carry
        gates = x_t @ w_ih + h @ w_hh + b
        i_g = jax.nn.sigmoid(gates[:, 0 * H:1 * H])
        f_g = jax.nn.sigmoid(gates[:, 1 * H:2 * H])
        g_g = jnp.tanh(gates[:, 2 * H:3 * H])
        o_g = jax.nn.sigmoid(gates[:, 3 * H:4 * H])
        c_new = f_g * c + i_g * g_g
        h_new = o_g * jnp.tanh(c_new)
        return (h_new, c_new), h_new

    init = (jnp.zeros((B, H), jnp.float32), jnp.zeros((B, H), jnp.float32))
    (h_last, _), out = lax.scan(step, init, x_seq)
    return out, h_last


def forward_ref(params, input_seq):
    x = jnp.take(params["emb"], input_seq, axis=0)
    layer_input = x
    h_last_fwd = h_last_bwd = None
    for lp in params["lstm"]:
        out_f, h_last_fwd = lstm_dir_ref(layer_input, lp["w_ih_f"], lp["w_hh_f"], lp["b_f"])
        out_b_rev, h_last_bwd = lstm_dir_ref(layer_input[::-1], lp["w_ih_b"], lp["w_hh_b"], lp["b_b"])
        layer_input = jnp.concatenate([out_f, out_b_rev[::-1]], axis=-1)
    # PyTorch: cat((h_last[-1], h_last[-2])) = [last-layer backward, forward]
    h = jnp.concatenate([h_last_bwd, h_last_fwd], axis=1)
    return h @ params["lin_w"] + params["lin_b"]


# ----------------------------------------------------------------------------
# Deterministic parameter construction
# ----------------------------------------------------------------------------
def init_params(key, vocab_size, embedding_size, hidden_size, output_size, num_layers):
    H, E, O = hidden_size, embedding_size, output_size
    k = 1.0 / jnp.sqrt(H)
    keys = jax.random.split(key, 3 + num_layers)

    params = {}
    params["emb"] = jax.random.normal(keys[0], (vocab_size, E), jnp.float32)

    lstm_params = []
    for layer in range(num_layers):
        din = E if layer == 0 else 2 * H
        lk = jax.random.split(keys[1 + layer], 8)

        def u(kk, shape):
            return jax.random.uniform(kk, shape, jnp.float32, -k, k)

        lstm_params.append(
            dict(
                # weights stored transposed: (Din, 4H) / (H, 4H); bias = b_ih + b_hh
                w_ih_f=u(lk[0], (din, 4 * H)),
                w_hh_f=u(lk[1], (H, 4 * H)),
                b_f=u(lk[2], (1, 4 * H)) + u(lk[3], (1, 4 * H)),
                w_ih_b=u(lk[4], (din, 4 * H)),
                w_hh_b=u(lk[5], (H, 4 * H)),
                b_b=u(lk[6], (1, 4 * H)) + u(lk[7], (1, 4 * H)),
            )
        )
    params["lstm"] = lstm_params

    klin = 1.0 / jnp.sqrt(2 * H)
    params["lin_w"] = jax.random.uniform(keys[-2], (2 * H, O), jnp.float32, -klin, klin)
    params["lin_b"] = jax.random.uniform(keys[-1], (1, O), jnp.float32, -klin, klin)
    return params


# ----------------------------------------------------------------------------
if __name__ == "__main__":
    # Small synthetic shapes consistent with the module.
    vocab_size = 1000      # synthetic (real model uses 25002)
    embedding_size = 16
    hidden_size = 32
    output_size = 2
    num_layers = 2
    T, B = 8, 2            # (seq_len, batch) -- PyTorch LSTM time-major layout

    key = jax.random.PRNGKey(0)
    pkey, xkey = jax.random.split(key)
    params = init_params(pkey, vocab_size, embedding_size, hidden_size,
                         output_size, num_layers)
    input_seq = jax.random.randint(xkey, (T, B), 0, vocab_size, dtype=jnp.int32)

    scores = rec_neural_net_forward(params, input_seq)
    scores = jax.block_until_ready(scores)

    ref = jax.block_until_ready(forward_ref(params, input_seq))
    assert scores.shape == (B, output_size)
    # Kernel uses bf16 MXU inputs (f32 accumulation / gate math) -> loose tol vs f32 ref.
    assert jnp.allclose(scores, ref, rtol=5e-2, atol=5e-2), (scores, ref)

    print("KERNEL_OK")
</pallas_src>

<mosaic_0001>
module attributes {stable_mosaic.version = 11 : i64} {
  func.func @bilstm2_head_kernel(%arg0: memref<16x16xbf16, #tpu.memory_space<vmem>>, %arg1: memref<16x256xbf16, #tpu.memory_space<vmem>>, %arg2: memref<32x128xbf16, #tpu.memory_space<vmem>>, %arg3: memref<32x128xbf16, #tpu.memory_space<vmem>>, %arg4: memref<1x256xf32, #tpu.memory_space<vmem>>, %arg5: memref<64x256xbf16, #tpu.memory_space<vmem>>, %arg6: memref<32x128xbf16, #tpu.memory_space<vmem>>, %arg7: memref<32x128xbf16, #tpu.memory_space<vmem>>, %arg8: memref<1x256xf32, #tpu.memory_space<vmem>>, %arg9: memref<64x2xf32, #tpu.memory_space<vmem>>, %arg10: memref<1x2xf32, #tpu.memory_space<vmem>>, %arg11: memref<2x2xf32, #tpu.memory_space<vmem>>, %arg12: memref<16x32xf32, #tpu.memory_space<vmem>>, %arg13: memref<16x32xf32, #tpu.memory_space<vmem>>) attributes {dimension_semantics = [], scalar_prefetch = 0 : i64, scratch_operands = 2 : i64, tpu.core_type = #tpu.core_type<tc>} {
    %cst = arith.constant 0.000000e+00 : f32
    %0 = vector.broadcast %cst : f32 to vector<2x32xf32>
    %c0 = arith.constant 0 : index
    %c0_0 = arith.constant 0 : index
    %1 = vector.load %arg0[%c0, %c0_0] : memref<16x16xbf16, #tpu.memory_space<vmem>>, vector<16x16xbf16>
    %c0_1 = arith.constant 0 : index
    %c0_2 = arith.constant 0 : index
    %2 = vector.load %arg1[%c0_1, %c0_2] : memref<16x256xbf16, #tpu.memory_space<vmem>>, vector<16x256xbf16>
    %cst_3 = arith.constant dense<0.000000e+00> : vector<16x256xf32>
    %3 = tpu.matmul %1, %2, %cst_3 {dimension_numbers = #tpu.dot_dimension_numbers<[1], [0], [0], [1], [0, 0, 1, 1], [], []>} : vector<16x16xbf16>, vector<16x256xbf16>, vector<16x256xf32> -> vector<16x256xf32>
    %c0_4 = arith.constant 0 : index
    %c0_5 = arith.constant 0 : index
    %4 = vector.load %arg4[%c0_4, %c0_5] : memref<1x256xf32, #tpu.memory_space<vmem>>, vector<1x256xf32>
    %5 = vector.broadcast %4 : vector<1x256xf32> to vector<16x256xf32>
    %6 = arith.addf %3, %5 : vector<16x256xf32>
    %7 = vector.extract_strided_slice %6 {offsets = [0, 0], sizes = [2, 128], strides = [1, 1]} : vector<16x256xf32> to vector<2x128xf32>
    %8 = arith.truncf %0 : vector<2x32xf32> to vector<2x32xbf16>
    %c0_6 = arith.constant 0 : index
    %c0_7 = arith.constant 0 : index
    %9 = vector.load %arg2[%c0_6, %c0_7] : memref<32x128xbf16, #tpu.memory_space<vmem>>, vector<32x128xbf16>
    %cst_8 = arith.constant dense<0.000000e+00> : vector<2x128xf32>
    %10 = tpu.matmul %8, %9, %cst_8 {dimension_numbers = #tpu.dot_dimension_numbers<[1], [0], [0], [1], [0, 0, 1, 1], [], []>} : vector<2x32xbf16>, vector<32x128xbf16>, vector<2x128xf32> -> vector<2x128xf32>
    %11 = arith.addf %7, %10 : vector<2x128xf32>
    %12 = vector.extract_strided_slice %6 {offsets = [14, 128], sizes = [2, 128], strides = [1, 1]} : vector<16x256xf32> to vector<2x128xf32>
    %13 = arith.truncf %0 : vector<2x32xf32> to vector<2x32xbf16>
    %c0_9 = arith.constant 0 : index
    %c0_10 = arith.constant 0 : index
    %14 = vector.load %arg3[%c0_9, %c0_10] : memref<32x128xbf16, #tpu.memory_space<vmem>>, vector<32x128xbf16>
    %cst_11 = arith.constant dense<0.000000e+00> : vector<2x128xf32>
    %15 = tpu.matmul %13, %14, %cst_11 {dimension_numbers = #tpu.dot_dimension_numbers<[1], [0], [0], [1], [0, 0, 1, 1], [], []>} : vector<2x32xbf16>, vector<32x128xbf16>, vector<2x128xf32> -> vector<2x128xf32>
    %16 = arith.addf %12, %15 : vector<2x128xf32>
    %17 = arith.negf %11 : vector<2x128xf32>
    %18 = math.exp %17 : vector<2x128xf32>
    %cst_12 = arith.constant 1.000000e+00 : f32
    %19 = vector.broadcast %cst_12 : f32 to vector<2x128xf32>
    %20 = arith.addf %19, %18 : vector<2x128xf32>
    %21 = arith.divf %19, %20 : vector<2x128xf32>
    %22 = math.tanh %11 : vector<2x128xf32>
    %23 = vector.extract_strided_slice %21 {offsets = [0, 0], sizes = [2, 32], strides = [1, 1]} : vector<2x128xf32> to vector<2x32xf32>
    %24 = vector.extract_strided_slice %21 {offsets = [0, 32], sizes = [2, 32], strides = [1, 1]} : vector<2x128xf32> to vector<2x32xf32>
    %25 = vector.extract_strided_slice %22 {offsets = [0, 64], sizes = [2, 32], strides = [1, 1]} : vector<2x128xf32> to vector<2x32xf32>
    %26 = vector.extract_strided_slice %21 {offsets = [0, 96], sizes = [2, 32], strides = [1, 1]} : vector<2x128xf32> to vector<2x32xf32>
    %27 = arith.mulf %24, %0 : vector<2x32xf32>
    %28 = arith.mulf %23, %25 : vector<2x32xf32>
    %29 = arith.addf %27, %28 : vector<2x32xf32>
    %30 = math.tanh %29 : vector<2x32xf32>
    %31 = arith.mulf %26, %30 : vector<2x32xf32>
    %32 = arith.negf %16 : vector<2x128xf32>
    %33 = math.exp %32 : vector<2x128xf32>
    %cst_13 = arith.constant 1.000000e+00 : f32
    %34 = vector.broadcast %cst_13 : f32 to vector<2x128xf32>
    %35 = arith.addf %34, %33 : vector<2x128xf32>
    %36 = arith.divf %34, %35 : vector<2x128xf32>
    %37 = math.tanh %16 : vector<2x128xf32>
    %38 = vector.extract_strided_slice %36 {offsets = [0, 0], sizes = [2, 32], strides = [1, 1]} : vector<2x128xf32> to vector<2x32xf32>
    %39 = vector.extract_strided_slice %36 {offsets = [0, 32], sizes = [2, 32], strides = [1, 1]} : vector<2x128xf32> to vector<2x32xf32>
    %40 = vector.extract_strided_slice %37 {offsets = [0, 64], sizes = [2, 32], strides = [1, 1]} : vector<2x128xf32> to vector<2x32xf32>
    %41 = vector.extract_strided_slice %36 {offsets = [0, 96], sizes = [2, 32], strides = [1, 1]} : vector<2x128xf32> to vector<2x32xf32>
    %42 = arith.mulf %39, %0 : vector<2x32xf32>
    %43 = arith.mulf %38, %40 : vector<2x32xf32>
    %44 = arith.addf %42, %43 : vector<2x32xf32>
    %45 = math.tanh %44 : vector<2x32xf32>
    %46 = arith.mulf %41, %45 : vector<2x32xf32>
    %c0_14 = arith.constant 0 : index
    %c0_15 = arith.constant 0 : index
    %47 = vector.load %arg12[%c0_14, %c0_15] : memref<16x32xf32, #tpu.memory_space<vmem>>, vector<2x32xf32>
    tpu.vector_store %arg12[%c0_14, %c0_15], %31 {strides = array<i32>} : memref<16x32xf32, #tpu.memory_space<vmem>>, vector<2x32xf32>,
    %c14 = arith.constant 14 : index
    %c0_16 = arith.constant 0 : index
    %48 = vector.load %arg13[%c14, %c0_16] : memref<16x32xf32, #tpu.memory_space<vmem>>, vector<2x32xf32>
    tpu.vector_store %arg13[%c14, %c0_16], %46 {strides = array<i32>} : memref<16x32xf32, #tpu.memory_space<vmem>>, vector<2x32xf32>,
    %49 = vector.extract_strided_slice %6 {offsets = [2, 0], sizes = [2, 128], strides = [1, 1]} : vector<16x256xf32> to vector<2x128xf32>
    %50 = arith.truncf %31 : vector<2x32xf32> to vector<2x32xbf16>
    %c0_17 = arith.constant 0 : index
    %c0_18 = arith.constant 0 : index
    %51 = vector.load %arg2[%c0_17, %c0_18] : memref<32x128xbf16, #tpu.memory_space<vmem>>, vector<32x128xbf16>
    %cst_19 = arith.constant dense<0.000000e+00> : vector<2x128xf32>
    %52 = tpu.matmul %50, %51, %cst_19 {dimension_numbers = #tpu.dot_dimension_numbers<[1], [0], [0], [1], [0, 0, 1, 1], [], []>} : vector<2x32xbf16>, vector<32x128xbf16>, vector<2x128xf32> -> vector<2x128xf32>
    %53 = arith.addf %49, %52 : vector<2x128xf32>
    %54 = vector.extract_strided_slice %6 {offsets = [12, 128], sizes = [2, 128], strides = [1, 1]} : vector<16x256xf32> to vector<2x128xf32>
    %55 = arith.truncf %46 : vector<2x32xf32> to vector<2x32xbf16>
    %c0_20 = arith.constant 0 : index
    %c0_21 = arith.constant 0 : index
    %56 = vector.load %arg3[%c0_20, %c0_21] : memref<32x128xbf16, #tpu.memory_space<vmem>>, vector<32x128xbf16>
    %cst_22 = arith.constant dense<0.000000e+00> : vector<2x128xf32>
    %57 = tpu.matmul %55, %56, %cst_22 {dimension_numbers = #tpu.dot_dimension_numbers<[1], [0], [0], [1], [0, 0, 1, 1], [], []>} : vector<2x32xbf16>, vector<32x128xbf16>, vector<2x128xf32> -> vector<2x128xf32>
    %58 = arith.addf %54, %57 : vector<2x128xf32>
    %59 = arith.negf %53 : vector<2x128xf32>
    %60 = math.exp %59 : vector<2x128xf32>
    %cst_23 = arith.constant 1.000000e+00 : f32
    %61 = vector.broadcast %cst_23 : f32 to vector<2x128xf32>
    %62 = arith.addf %61, %60 : vector<2x128xf32>
    %63 = arith.divf %61, %62 : vector<2x128xf32>
    %64 = math.tanh %53 : vector<2x128xf32>
    %65 = vector.extract_strided_slice %63 {offsets = [0, 0], sizes = [2, 32], strides = [1, 1]} : vector<2x128xf32> to vector<2x32xf32>
    %66 = vector.extract_strided_slice %63 {offsets = [0, 32], sizes = [2, 32], strides = [1, 1]} : vector<2x128xf32> to vector<2x32xf32>
    %67 = vector.extract_strided_slice %64 {offsets = [0, 64], sizes = [2, 32], strides = [1, 1]} : vector<2x128xf32> to vector<2x32xf32>
    %68 = vector.extract_strided_slice %63 {offsets = [0, 96], sizes = [2, 32], strides = [1, 1]} : vector<2x128xf32> to vector<2x32xf32>
    %69 = arith.mulf %66, %29 : vector<2x32xf32>
    %70 = arith.mulf %65, %67 : vector<2x32xf32>
    %71 = arith.addf %69, %70 : vector<2x32xf32>
    %72 = math.tanh %71 : vector<2x32xf32>
    %73 = arith.mulf %68, %72 : vector<2x32xf32>
    %74 = arith.negf %58 : vector<2x128xf32>
    %75 = math.exp %74 : vector<2x128xf32>
    %cst_24 = arith.constant 1.000000e+00 : f32
    %76 = vector.broadcast %cst_24 : f32 to vector<2x128xf32>
    %77 = arith.addf %76, %75 : vector<2x128xf32>
    %78 = arith.divf %76, %77 : vector<2x128xf32>
    %79 = math.tanh %58 : vector<2x128xf32>
    %80 = vector.extract_strided_slice %78 {offsets = [0, 0], sizes = [2, 32], strides = [1, 1]} : vector<2x128xf32> to vector<2x32xf32>
    %81 = vector.extract_strided_slice %78 {offsets = [0, 32], sizes = [2, 32], strides = [1, 1]} : vector<2x128xf32> to vector<2x32xf32>
    %82 = vector.extract_strided_slice %79 {offsets = [0, 64], sizes = [2, 32], strides = [1, 1]} : vector<2x128xf32> to vector<2x32xf32>
    %83 = vector.extract_strided_slice %78 {offsets = [0, 96], sizes = [2, 32], strides = [1, 1]} : vector<2x128xf32> to vector<2x32xf32>
    %84 = arith.mulf %81, %44 : vector<2x32xf32>
    %85 = arith.mulf %80, %82 : vector<2x32xf32>
    %86 = arith.addf %84, %85 : vector<2x32xf32>
    %87 = math.tanh %86 : vector<2x32xf32>
    %88 = arith.mulf %83, %87 : vector<2x32xf32>
    %c2 = arith.constant 2 : index
    %c0_25 = arith.constant 0 : index
    %89 = vector.load %arg12[%c2, %c0_25] : memref<16x32xf32, #tpu.memory_space<vmem>>, vector<2x32xf32>
    tpu.vector_store %arg12[%c2, %c0_25], %73 {strides = array<i32>} : memref<16x32xf32, #tpu.memory_space<vmem>>, vector<2x32xf32>,
    %c12 = arith.constant 12 : index
    %c0_26 = arith.constant 0 : index
    %90 = vector.load %arg13[%c12, %c0_26] : memref<16x32xf32, #tpu.memory_space<vmem>>, vector<2x32xf32>
    tpu.vector_store %arg13[%c12, %c0_26], %88 {strides = array<i32>} : memref<16x32xf32, #tpu.memory_space<vmem>>, vector<2x32xf32>,
    %91 = vector.extract_strided_slice %6 {offsets = [4, 0], sizes = [2, 128], strides = [1, 1]} : vector<16x256xf32> to vector<2x128xf32>
    %92 = arith.truncf %73 : vector<2x32xf32> to vector<2x32xbf16>
    %c0_27 = arith.constant 0 : index
    %c0_28 = arith.constant 0 : index
    %93 = vector.load %arg2[%c0_27, %c0_28] : memref<32x128xbf16, #tpu.memory_space<vmem>>, vector<32x128xbf16>
    %cst_29 = arith.constant dense<0.000000e+00> : vector<2x128xf32>
    %94 = tpu.matmul %92, %93, %cst_29 {dimension_numbers = #tpu.dot_dimension_numbers<[1], [0], [0], [1], [0, 0, 1, 1], [], []>} : vector<2x32xbf16>, vector<32x128xbf16>, vector<2x128xf32> -> vector<2x128xf32>
    %95 = arith.addf %91, %94 : vector<2x128xf32>
    %96 = vector.extract_strided_slice %6 {offsets = [10, 128], sizes = [2, 128], strides = [1, 1]} : vector<16x256xf32> to vector<2x128xf32>
    %97 = arith.truncf %88 : vector<2x32xf32> to vector<2x32xbf16>
    %c0_30 = arith.constant 0 : index
    %c0_31 = arith.constant 0 : index
    %98 = vector.load %arg3[%c0_30, %c0_31] : memref<32x128xbf16, #tpu.memory_space<vmem>>, vector<32x128xbf16>
    %cst_32 = arith.constant dense<0.000000e+00> : vector<2x128xf32>
    %99 = tpu.matmul %97, %98, %cst_32 {dimension_numbers = #tpu.dot_dimension_numbers<[1], [0], [0], [1], [0, 0, 1, 1], [], []>} : vector<2x32xbf16>, vector<32x128xbf16>, vector<2x128xf32> -> vector<2x128xf32>
    %100 = arith.addf %96, %99 : vector<2x128xf32>
    %101 = arith.negf %95 : vector<2x128xf32>
    %102 = math.exp %101 : vector<2x128xf32>
    %cst_33 = arith.constant 1.000000e+00 : f32
    %103 = vector.broadcast %cst_33 : f32 to vector<2x128xf32>
    %104 = arith.addf %103, %102 : vector<2x128xf32>
    %105 = arith.divf %103, %104 : vector<2x128xf32>
    %106 = math.tanh %95 : vector<2x128xf32>
    %107 = vector.extract_strided_slice %105 {offsets = [0, 0], sizes = [2, 32], strides = [1, 1]} : vector<2x128xf32> to vector<2x32xf32>
    %108 = vector.extract_strided_slice %105 {offsets = [0, 32], sizes = [2, 32], strides = [1, 1]} : vector<2x128xf32> to vector<2x32xf32>
    %109 = vector.extract_strided_slice %106 {offsets = [0, 64], sizes = [2, 32], strides = [1, 1]} : vector<2x128xf32> to vector<2x32xf32>
    %110 = vector.extract_strided_slice %105 {offsets = [0, 96], sizes = [2, 32], strides = [1, 1]} : vector<2x128xf32> to vector<2x32xf32>
    %111 = arith.mulf %108, %71 : vector<2x32xf32>
    %112 = arith.mulf %107, %109 : vector<2x32xf32>
    %113 = arith.addf %111, %112 : vector<2x32xf32>
    %114 = math.tanh %113 : vector<2x32xf32>
    %115 = arith.mulf %110, %114 : vector<2x32xf32>
    %116 = arith.negf %100 : vector<2x128xf32>
    %117 = math.exp %116 : vector<2x128xf32>
    %cst_34 = arith.constant 1.000000e+00 : f32
    %118 = vector.broadcast %cst_34 : f32 to vector<2x128xf32>
    %119 = arith.addf %118, %117 : vector<2x128xf32>
    %120 = arith.divf %118, %119 : vector<2x128xf32>
    %121 = math.tanh %100 : vector<2x128xf32>
    %122 = vector.extract_strided_slice %120 {offsets = [0, 0], sizes = [2, 32], strides = [1, 1]} : vector<2x128xf32> to vector<2x32xf32>
    %123 = vector.extract_strided_slice %120 {offsets = [0, 32], sizes = [2, 32], strides = [1, 1]} : vector<2x128xf32> to vector<2x32xf32>
    %124 = vector.extract_strided_slice %121 {offsets = [0, 64], sizes = [2, 32], strides = [1, 1]} : vector<2x128xf32> to vector<2x32xf32>
    %125 = vector.extract_strided_slice %120 {offsets = [0, 96], sizes = [2, 32], strides = [1, 1]} : vector<2x128xf32> to vector<2x32xf32>
    %126 = arith.mulf %123, %86 : vector<2x32xf32>
    %127 = arith.mulf %122, %124 : vector<2x32xf32>
    %128 = arith.addf %126, %127 : vector<2x32xf32>
    %129 = math.tanh %128 : vector<2x32xf32>
    %130 = arith.mulf %125, %129 : vector<2x32xf32>
    %c4 = arith.constant 4 : index
    %c0_35 = arith.constant 0 : index
    %131 = vector.load %arg12[%c4, %c0_35] : memref<16x32xf32, #tpu.memory_space<vmem>>, vector<2x32xf32>
    tpu.vector_store %arg12[%c4, %c0_35], %115 {strides = array<i32>} : memref<16x32xf32, #tpu.memory_space<vmem>>, vector<2x32xf32>,
    %c10 = arith.constant 10 : index
    %c0_36 = arith.constant 0 : index
    %132 = vector.load %arg13[%c10, %c0_36] : memref<16x32xf32, #tpu.memory_space<vmem>>, vector<2x32xf32>
    tpu.vector_store %arg13[%c10, %c0_36], %130 {strides = array<i32>} : memref<16x32xf32, #tpu.memory_space<vmem>>, vector<2x32xf32>,
    %133 = vector.extract_strided_slice %6 {offsets = [6, 0], sizes = [2, 128], strides = [1, 1]} : vector<16x256xf32> to vector<2x128xf32>
    %134 = arith.truncf %115 : vector<2x32xf32> to vector<2x32xbf16>
    %c0_37 = arith.constant 0 : index
    %c0_38 = arith.constant 0 : index
    %135 = vector.load %arg2[%c0_37, %c0_38] : memref<32x128xbf16, #tpu.memory_space<vmem>>, vector<32x128xbf16>
    %cst_39 = arith.constant dense<0.000000e+00> : vector<2x128xf32>
    %136 = tpu.matmul %134, %135, %cst_39 {dimension_numbers = #tpu.dot_dimension_numbers<[1], [0], [0], [1], [0, 0, 1, 1], [], []>} : vector<2x32xbf16>, vector<32x128xbf16>, vector<2x128xf32> -> vector<2x128xf32>
    %137 = arith.addf %133, %136 : vector<2x128xf32>
    %138 = vector.extract_strided_slice %6 {offsets = [8, 128], sizes = [2, 128], strides = [1, 1]} : vector<16x256xf32> to vector<2x128xf32>
    %139 = arith.truncf %130 : vector<2x32xf32> to vector<2x32xbf16>
    %c0_40 = arith.constant 0 : index
    %c0_41 = arith.constant 0 : index
    %140 = vector.load %arg3[%c0_40, %c0_41] : memref<32x128xbf16, #tpu.memory_space<vmem>>, vector<32x128xbf16>
    %cst_42 = arith.constant dense<0.000000e+00> : vector<2x128xf32>
    %141 = tpu.matmul %139, %140, %cst_42 {dimension_numbers = #tpu.dot_dimension_numbers<[1], [0], [0], [1], [0, 0, 1, 1], [], []>} : vector<2x32xbf16>, vector<32x128xbf16>, vector<2x128xf32> -> vector<2x128xf32>
    %142 = arith.addf %138, %141 : vector<2x128xf32>
    %143 = arith.negf %137 : vector<2x128xf32>
    %144 = math.exp %143 : vector<2x128xf32>
    %cst_43 = arith.constant 1.000000e+00 : f32
    %145 = vector.broadcast %cst_43 : f32 to vector<2x128xf32>
    %146 = arith.addf %145, %144 : vector<2x128xf32>
    %147 = arith.divf %145, %146 : vector<2x128xf32>
    %148 = math.tanh %137 : vector<2x128xf32>
    %149 = vector.extract_strided_slice %147 {offsets = [0, 0], sizes = [2, 32], strides = [1, 1]} : vector<2x128xf32> to vector<2x32xf32>
    %150 = vector.extract_strided_slice %147 {offsets = [0, 32], sizes = [2, 32], strides = [1, 1]} : vector<2x128xf32> to vector<2x32xf32>
    %151 = vector.extract_strided_slice %148 {offsets = [0, 64], sizes = [2, 32], strides = [1, 1]} : vector<2x128xf32> to vector<2x32xf32>
    %152 = vector.extract_strided_slice %147 {offsets = [0, 96], sizes = [2, 32], strides = [1, 1]} : vector<2x128xf32> to vector<2x32xf32>
    %153 = arith.mulf %150, %113 : vector<2x32xf32>
    %154 = arith.mulf %149, %151 : vector<2x32xf32>
    %155 = arith.addf %153, %154 : vector<2x32xf32>
    %156 = math.tanh %155 : vector<2x32xf32>
    %157 = arith.mulf %152, %156 : vector<2x32xf32>
    %158 = arith.negf %142 : vector<2x128xf32>
    %159 = math.exp %158 : vector<2x128xf32>
    %cst_44 = arith.constant 1.000000e+00 : f32
    %160 = vector.broadcast %cst_44 : f32 to vector<2x128xf32>
    %161 = arith.addf %160, %159 : vector<2x128xf32>
    %162 = arith.divf %160, %161 : vector<2x128xf32>
    %163 = math.tanh %142 : vector<2x128xf32>
    %164 = vector.extract_strided_slice %162 {offsets = [0, 0], sizes = [2, 32], strides = [1, 1]} : vector<2x128xf32> to vector<2x32xf32>
    %165 = vector.extract_strided_slice %162 {offsets = [0, 32], sizes = [2, 32], strides = [1, 1]} : vector<2x128xf32> to vector<2x32xf32>
    %166 = vector.extract_strided_slice %163 {offsets = [0, 64], sizes = [2, 32], strides = [1, 1]} : vector<2x128xf32> to vector<2x32xf32>
    %167 = vector.extract_strided_slice %162 {offsets = [0, 96], sizes = [2, 32], strides = [1, 1]} : vector<2x128xf32> to vector<2x32xf32>
    %168 = arith.mulf %165, %128 : vector<2x32xf32>
    %169 = arith.mulf %164, %166 : vector<2x32xf32>
    %170 = arith.addf %168, %169 : vector<2x32xf32>
    %171 = math.tanh %170 : vector<2x32xf32>
    %172 = arith.mulf %167, %171 : vector<2x32xf32>
    %c6 = arith.constant 6 : index
    %c0_45 = arith.constant 0 : index
    %173 = vector.load %arg12[%c6, %c0_45] : memref<16x32xf32, #tpu.memory_space<vmem>>, vector<2x32xf32>
    tpu.vector_store %arg12[%c6, %c0_45], %157 {strides = array<i32>} : memref<16x32xf32, #tpu.memory_space<vmem>>, vector<2x32xf32>,
    %c8 = arith.constant 8 : index
    %c0_46 = arith.constant 0 : index
    %174 = vector.load %arg13[%c8, %c0_46] : memref<16x32xf32, #tpu.memory_space<vmem>>, vector<2x32xf32>
    tpu.vector_store %arg13[%c8, %c0_46], %172 {strides = array<i32>} : memref<16x32xf32, #tpu.memory_space<vmem>>, vector<2x32xf32>,
    %175 = vector.extract_strided_slice %6 {offsets = [8, 0], sizes = [2, 128], strides = [1, 1]} : vector<16x256xf32> to vector<2x128xf32>
    %176 = arith.truncf %157 : vector<2x32xf32> to vector<2x32xbf16>
    %c0_47 = arith.constant 0 : index
    %c0_48 = arith.constant 0 : index
    %177 = vector.load %arg2[%c0_47, %c0_48] : memref<32x128xbf16, #tpu.memory_space<vmem>>, vector<32x128xbf16>
    %cst_49 = arith.constant dense<0.000000e+00> : vector<2x128xf32>
    %178 = tpu.matmul %176, %177, %cst_49 {dimension_numbers = #tpu.dot_dimension_numbers<[1], [0], [0], [1], [0, 0, 1, 1], [], []>} : vector<2x32xbf16>, vector<32x128xbf16>, vector<2x128xf32> -> vector<2x128xf32>
    %179 = arith.addf %175, %178 : vector<2x128xf32>
    %180 = vector.extract_strided_slice %6 {offsets = [6, 128], sizes = [2, 128], strides = [1, 1]} : vector<16x256xf32> to vector<2x128xf32>
    %181 = arith.truncf %172 : vector<2x32xf32> to vector<2x32xbf16>
    %c0_50 = arith.constant 0 : index
    %c0_51 = arith.constant 0 : index
    %182 = vector.load %arg3[%c0_50, %c0_51] : memref<32x128xbf16, #tpu.memory_space<vmem>>, vector<32x128xbf16>
    %cst_52 = arith.constant dense<0.000000e+00> : vector<2x128xf32>
    %183 = tpu.matmul %181, %182, %cst_52 {dimension_numbers = #tpu.dot_dimension_numbers<[1], [0], [0], [1], [0, 0, 1, 1], [], []>} : vector<2x32xbf16>, vector<32x128xbf16>, vector<2x128xf32> -> vector<2x128xf32>
    %184 = arith.addf %180, %183 : vector<2x128xf32>
    %185 = arith.negf %179 : vector<2x128xf32>
    %186 = math.exp %185 : vector<2x128xf32>
    %cst_53 = arith.constant 1.000000e+00 : f32
    %187 = vector.broadcast %cst_53 : f32 to vector<2x128xf32>
    %188 = arith.addf %187, %186 : vector<2x128xf32>
    %189 = arith.divf %187, %188 : vector<2x128xf32>
    %190 = math.tanh %179 : vector<2x128xf32>
    %191 = vector.extract_strided_slice %189 {offsets = [0, 0], sizes = [2, 32], strides = [1, 1]} : vector<2x128xf32> to vector<2x32xf32>
    %192 = vector.extract_strided_slice %189 {offsets = [0, 32], sizes = [2, 32], strides = [1, 1]} : vector<2x128xf32> to vector<2x32xf32>
    %193 = vector.extract_strided_slice %190 {offsets = [0, 64], sizes = [2, 32], strides = [1, 1]} : vector<2x128xf32> to vector<2x32xf32>
    %194 = vector.extract_strided_slice %189 {offsets = [0, 96], sizes = [2, 32], strides = [1, 1]} : vector<2x128xf32> to vector<2x32xf32>
    %195 = arith.mulf %192, %155 : vector<2x32xf32>
    %196 = arith.mulf %191, %193 : vector<2x32xf32>
    %197 = arith.addf %195, %196 : vector<2x32xf32>
    %198 = math.tanh %197 : vector<2x32xf32>
    %199 = arith.mulf %194, %198 : vector<2x32xf32>
    %200 = arith.negf %184 : vector<2x128xf32>
    %201 = math.exp %200 : vector<2x128xf32>
    %cst_54 = arith.constant 1.000000e+00 : f32
    %202 = vector.broadcast %cst_54 : f32 to vector<2x128xf32>
    %203 = arith.addf %202, %201 : vector<2x128xf32>
    %204 = arith.divf %202, %203 : vector<2x128xf32>
    %205 = math.tanh %184 : vector<2x128xf32>
    %206 = vector.extract_strided_slice %204 {offsets = [0, 0], sizes = [2, 32], strides = [1, 1]} : vector<2x128xf32> to vector<2x32xf32>
    %207 = vector.extract_strided_slice %204 {offsets = [0, 32], sizes = [2, 32], strides = [1, 1]} : vector<2x128xf32> to vector<2x32xf32>
    %208 = vector.extract_strided_slice %205 {offsets = [0, 64], sizes = [2, 32], strides = [1, 1]} : vector<2x128xf32> to vector<2x32xf32>
    %209 = vector.extract_strided_slice %204 {offsets = [0, 96], sizes = [2, 32], strides = [1, 1]} : vector<2x128xf32> to vector<2x32xf32>
    %210 = arith.mulf %207, %170 : vector<2x32xf32>
    %211 = arith.mulf %206, %208 : vector<2x32xf32>
    %212 = arith.addf %210, %211 : vector<2x32xf32>
    %213 = math.tanh %212 : vector<2x32xf32>
    %214 = arith.mulf %209, %213 : vector<2x32xf32>
    %c8_55 = arith.constant 8 : index
    %c0_56 = arith.constant 0 : index
    %215 = vector.load %arg12[%c8_55, %c0_56] : memref<16x32xf32, #tpu.memory_space<vmem>>, vector<2x32xf32>
    tpu.vector_store %arg12[%c8_55, %c0_56], %199 {strides = array<i32>} : memref<16x32xf32, #tpu.memory_space<vmem>>, vector<2x32xf32>,
    %c6_57 = arith.constant 6 : index
    %c0_58 = arith.constant 0 : index
    %216 = vector.load %arg13[%c6_57, %c0_58] : memref<16x32xf32, #tpu.memory_space<vmem>>, vector<2x32xf32>
    tpu.vector_store %arg13[%c6_57, %c0_58], %214 {strides = array<i32>} : memref<16x32xf32, #tpu.memory_space<vmem>>, vector<2x32xf32>,
    %217 = vector.extract_strided_slice %6 {offsets = [10, 0], sizes = [2, 128], strides = [1, 1]} : vector<16x256xf32> to vector<2x128xf32>
    %218 = arith.truncf %199 : vector<2x32xf32> to vector<2x32xbf16>
    %c0_59 = arith.constant 0 : index
    %c0_60 = arith.constant 0 : index
    %219 = vector.load %arg2[%c0_59, %c0_60] : memref<32x128xbf16, #tpu.memory_space<vmem>>, vector<32x128xbf16>
    %cst_61 = arith.constant dense<0.000000e+00> : vector<2x128xf32>
    %220 = tpu.matmul %218, %219, %cst_61 {dimension_numbers = #tpu.dot_dimension_numbers<[1], [0], [0], [1], [0, 0, 1, 1], [], []>} : vector<2x32xbf16>, vector<32x128xbf16>, vector<2x128xf32> -> vector<2x128xf32>
    %221 = arith.addf %217, %220 : vector<2x128xf32>
    %222 = vector.extract_strided_slice %6 {offsets = [4, 128], sizes = [2, 128], strides = [1, 1]} : vector<16x256xf32> to vector<2x128xf32>
    %223 = arith.truncf %214 : vector<2x32xf32> to vector<2x32xbf16>
    %c0_62 = arith.constant 0 : index
    %c0_63 = arith.constant 0 : index
    %224 = vector.load %arg3[%c0_62, %c0_63] : memref<32x128xbf16, #tpu.memory_space<vmem>>, vector<32x128xbf16>
    %cst_64 = arith.constant dense<0.000000e+00> : vector<2x128xf32>
    %225 = tpu.matmul %223, %224, %cst_64 {dimension_numbers = #tpu.dot_dimension_numbers<[1], [0], [0], [1], [0, 0, 1, 1], [], []>} : vector<2x32xbf16>, vector<32x128xbf16>, vector<2x128xf32> -> vector<2x128xf32>
    %226 = arith.addf %222, %225 : vector<2x128xf32>
    %227 = arith.negf %221 : vector<2x128xf32>
    %228 = math.exp %227 : vector<2x128xf32>
    %cst_65 = arith.constant 1.000000e+00 : f32
    %229 = vector.broadcast %cst_65 : f32 to vector<2x128xf32>
    %230 = arith.addf %229, %228 : vector<2x128xf32>
    %231 = arith.divf %229, %230 : vector<2x128xf32>
    %232 = math.tanh %221 : vector<2x128xf32>
    %233 = vector.extract_strided_slice %231 {offsets = [0, 0], sizes = [2, 32], strides = [1, 1]} : vector<2x128xf32> to vector<2x32xf32>
    %234 = vector.extract_strided_slice %231 {offsets = [0, 32], sizes = [2, 32], strides = [1, 1]} : vector<2x128xf32> to vector<2x32xf32>
    %235 = vector.extract_strided_slice %232 {offsets = [0, 64], sizes = [2, 32], strides = [1, 1]} : vector<2x128xf32> to vector<2x32xf32>
    %236 = vector.extract_strided_slice %231 {offsets = [0, 96], sizes = [2, 32], strides = [1, 1]} : vector<2x128xf32> to vector<2x32xf32>
    %237 = arith.mulf %234, %197 : vector<2x32xf32>
    %238 = arith.mulf %233, %235 : vector<2x32xf32>
    %239 = arith.addf %237, %238 : vector<2x32xf32>
    %240 = math.tanh %239 : vector<2x32xf32>
    %241 = arith.mulf %236, %240 : vector<2x32xf32>
    %242 = arith.negf %226 : vector<2x128xf32>
    %243 = math.exp %242 : vector<2x128xf32>
    %cst_66 = arith.constant 1.000000e+00 : f32
    %244 = vector.broadcast %cst_66 : f32 to vector<2x128xf32>
    %245 = arith.addf %244, %243 : vector<2x128xf32>
    %246 = arith.divf %244, %245 : vector<2x128xf32>
    %247 = math.tanh %226 : vector<2x128xf32>
    %248 = vector.extract_strided_slice %246 {offsets = [0, 0], sizes = [2, 32], strides = [1, 1]} : vector<2x128xf32> to vector<2x32xf32>
    %249 = vector.extract_strided_slice %246 {offsets = [0, 32], sizes = [2, 32], strides = [1, 1]} : vector<2x128xf32> to vector<2x32xf32>
    %250 = vector.extract_strided_slice %247 {offsets = [0, 64], sizes = [2, 32], strides = [1, 1]} : vector<2x128xf32> to vector<2x32xf32>
    %251 = vector.extract_strided_slice %246 {offsets = [0, 96], sizes = [2, 32], strides = [1, 1]} : vector<2x128xf32> to vector<2x32xf32>
    %252 = arith.mulf %249, %212 : vector<2x32xf32>
    %253 = arith.mulf %248, %250 : vector<2x32xf32>
    %254 = arith.addf %252, %253 : vector<2x32xf32>
    %255 = math.tanh %254 : vector<2x32xf32>
    %256 = arith.mulf %251, %255 : vector<2x32xf32>
    %c10_67 = arith.constant 10 : index
    %c0_68 = arith.constant 0 : index
    %257 = vector.load %arg12[%c10_67, %c0_68] : memref<16x32xf32, #tpu.memory_space<vmem>>, vector<2x32xf32>
    tpu.vector_store %arg12[%c10_67, %c0_68], %241 {strides = array<i32>} : memref<16x32xf32, #tpu.memory_space<vmem>>, vector<2x32xf32>,
    %c4_69 = arith.constant 4 : index
    %c0_70 = arith.constant 0 : index
    %258 = vector.load %arg13[%c4_69, %c0_70] : memref<16x32xf32, #tpu.memory_space<vmem>>, vector<2x32xf32>
    tpu.vector_store %arg13[%c4_69, %c0_70], %256 {strides = array<i32>} : memref<16x32xf32, #tpu.memory_space<vmem>>, vector<2x32xf32>,
    %259 = vector.extract_strided_slice %6 {offsets = [12, 0], sizes = [2, 128], strides = [1, 1]} : vector<16x256xf32> to vector<2x128xf32>
    %260 = arith.truncf %241 : vector<2x32xf32> to vector<2x32xbf16>
    %c0_71 = arith.constant 0 : index
    %c0_72 = arith.constant 0 : index
    %261 = vector.load %arg2[%c0_71, %c0_72] : memref<32x128xbf16, #tpu.memory_space<vmem>>, vector<32x128xbf16>
    %cst_73 = arith.constant dense<0.000000e+00> : vector<2x128xf32>
    %262 = tpu.matmul %260, %261, %cst_73 {dimension_numbers = #tpu.dot_dimension_numbers<[1], [0], [0], [1], [0, 0, 1, 1], [], []>} : vector<2x32xbf16>, vector<32x128xbf16>, vector<2x128xf32> -> vector<2x128xf32>
    %263 = arith.addf %259, %262 : vector<2x128xf32>
    %264 = vector.extract_strided_slice %6 {offsets = [2, 128], sizes = [2, 128], strides = [1, 1]} : vector<16x256xf32> to vector<2x128xf32>
    %265 = arith.truncf %256 : vector<2x32xf32> to vector<2x32xbf16>
    %c0_74 = arith.constant 0 : index
    %c0_75 = arith.constant 0 : index
    %266 = vector.load %arg3[%c0_74, %c0_75] : memref<32x128xbf16, #tpu.memory_space<vmem>>, vector<32x128xbf16>
    %cst_76 = arith.constant dense<0.000000e+00> : vector<2x128xf32>
    %267 = tpu.matmul %265, %266, %cst_76 {dimension_numbers = #tpu.dot_dimension_numbers<[1], [0], [0], [1], [0, 0, 1, 1], [], []>} : vector<2x32xbf16>, vector<32x128xbf16>, vector<2x128xf32> -> vector<2x128xf32>
    %268 = arith.addf %264, %267 : vector<2x128xf32>
    %269 = arith.negf %263 : vector<2x128xf32>
    %270 = math.exp %269 : vector<2x128xf32>
    %cst_77 = arith.constant 1.000000e+00 : f32
    %271 = vector.broadcast %cst_77 : f32 to vector<2x128xf32>
    %272 = arith.addf %271, %270 : vector<2x128xf32>
    %273 = arith.divf %271, %272 : vector<2x128xf32>
    %274 = math.tanh %263 : vector<2x128xf32>
    %275 = vector.extract_strided_slice %273 {offsets = [0, 0], sizes = [2, 32], strides = [1, 1]} : vector<2x128xf32> to vector<2x32xf32>
    %276 = vector.extract_strided_slice %273 {offsets = [0, 32], sizes = [2, 32], strides = [1, 1]} : vector<2x128xf32> to vector<2x32xf32>
    %277 = vector.extract_strided_slice %274 {offsets = [0, 64], sizes = [2, 32], strides = [1, 1]} : vector<2x128xf32> to vector<2x32xf32>
    %278 = vector.extract_strided_slice %273 {offsets = [0, 96], sizes = [2, 32], strides = [1, 1]} : vector<2x128xf32> to vector<2x32xf32>
    %279 = arith.mulf %276, %239 : vector<2x32xf32>
    %280 = arith.mulf %275, %277 : vector<2x32xf32>
    %281 = arith.addf %279, %280 : vector<2x32xf32>
    %282 = math.tanh %281 : vector<2x32xf32>
    %283 = arith.mulf %278, %282 : vector<2x32xf32>
    %284 = arith.negf %268 : vector<2x128xf32>
    %285 = math.exp %284 : vector<2x128xf32>
    %cst_78 = arith.constant 1.000000e+00 : f32
    %286 = vector.broadcast %cst_78 : f32 to vector<2x128xf32>
    %287 = arith.addf %286, %285 : vector<2x128xf32>
    %288 = arith.divf %286, %287 : vector<2x128xf32>
    %289 = math.tanh %268 : vector<2x128xf32>
    %290 = vector.extract_strided_slice %288 {offsets = [0, 0], sizes = [2, 32], strides = [1, 1]} : vector<2x128xf32> to vector<2x32xf32>
    %291 = vector.extract_strided_slice %288 {offsets = [0, 32], sizes = [2, 32], strides = [1, 1]} : vector<2x128xf32> to vector<2x32xf32>
    %292 = vector.extract_strided_slice %289 {offsets = [0, 64], sizes = [2, 32], strides = [1, 1]} : vector<2x128xf32> to vector<2x32xf32>
    %293 = vector.extract_strided_slice %288 {offsets = [0, 96], sizes = [2, 32], strides = [1, 1]} : vector<2x128xf32> to vector<2x32xf32>
    %294 = arith.mulf %291, %254 : vector<2x32xf32>
    %295 = arith.mulf %290, %292 : vector<2x32xf32>
    %296 = arith.addf %294, %295 : vector<2x32xf32>
    %297 = math.tanh %296 : vector<2x32xf32>
    %298 = arith.mulf %293, %297 : vector<2x32xf32>
    %c12_79 = arith.constant 12 : index
    %c0_80 = arith.constant 0 : index
    %299 = vector.load %arg12[%c12_79, %c0_80] : memref<16x32xf32, #tpu.memory_space<vmem>>, vector<2x32xf32>
    tpu.vector_store %arg12[%c12_79, %c0_80], %283 {strides = array<i32>} : memref<16x32xf32, #tpu.memory_space<vmem>>, vector<2x32xf32>,
    %c2_81 = arith.constant 2 : index
    %c0_82 = arith.constant 0 : index
    %300 = vector.load %arg13[%c2_81, %c0_82] : memref<16x32xf32, #tpu.memory_space<vmem>>, vector<2x32xf32>
    tpu.vector_store %arg13[%c2_81, %c0_82], %298 {strides = array<i32>} : memref<16x32xf32, #tpu.memory_space<vmem>>, vector<2x32xf32>,
    %301 = vector.extract_strided_slice %6 {offsets = [14, 0], sizes = [2, 128], strides = [1, 1]} : vector<16x256xf32> to vector<2x128xf32>
    %302 = arith.truncf %283 : vector<2x32xf32> to vector<2x32xbf16>
    %c0_83 = arith.constant 0 : index
    %c0_84 = arith.constant 0 : index
    %303 = vector.load %arg2[%c0_83, %c0_84] : memref<32x128xbf16, #tpu.memory_space<vmem>>, vector<32x128xbf16>
    %cst_85 = arith.constant dense<0.000000e+00> : vector<2x128xf32>
    %304 = tpu.matmul %302, %303, %cst_85 {dimension_numbers = #tpu.dot_dimension_numbers<[1], [0], [0], [1], [0, 0, 1, 1], [], []>} : vector<2x32xbf16>, vector<32x128xbf16>, vector<2x128xf32> -> vector<2x128xf32>
    %305 = arith.addf %301, %304 : vector<2x128xf32>
    %306 = vector.extract_strided_slice %6 {offsets = [0, 128], sizes = [2, 128], strides = [1, 1]} : vector<16x256xf32> to vector<2x128xf32>
    %307 = arith.truncf %298 : vector<2x32xf32> to vector<2x32xbf16>
    %c0_86 = arith.constant 0 : index
    %c0_87 = arith.constant 0 : index
    %308 = vector.load %arg3[%c0_86, %c0_87] : memref<32x128xbf16, #tpu.memory_space<vmem>>, vector<32x128xbf16>
    %cst_88 = arith.constant dense<0.000000e+00> : vector<2x128xf32>
    %309 = tpu.matmul %307, %308, %cst_88 {dimension_numbers = #tpu.dot_dimension_numbers<[1], [0], [0], [1], [0, 0, 1, 1], [], []>} : vector<2x32xbf16>, vector<32x128xbf16>, vector<2x128xf32> -> vector<2x128xf32>
    %310 = arith.addf %306, %309 : vector<2x128xf32>
    %311 = arith.negf %305 : vector<2x128xf32>
    %312 = math.exp %311 : vector<2x128xf32>
    %cst_89 = arith.constant 1.000000e+00 : f32
    %313 = vector.broadcast %cst_89 : f32 to vector<2x128xf32>
    %314 = arith.addf %313, %312 : vector<2x128xf32>
    %315 = arith.divf %313, %314 : vector<2x128xf32>
    %316 = math.tanh %305 : vector<2x128xf32>
    %317 = vector.extract_strided_slice %315 {offsets = [0, 0], sizes = [2, 32], strides = [1, 1]} : vector<2x128xf32> to vector<2x32xf32>
    %318 = vector.extract_strided_slice %315 {offsets = [0, 32], sizes = [2, 32], strides = [1, 1]} : vector<2x128xf32> to vector<2x32xf32>
    %319 = vector.extract_strided_slice %316 {offsets = [0, 64], sizes = [2, 32], strides = [1, 1]} : vector<2x128xf32> to vector<2x32xf32>
    %320 = vector.extract_strided_slice %315 {offsets = [0, 96], sizes = [2, 32], strides = [1, 1]} : vector<2x128xf32> to vector<2x32xf32>
    %321 = arith.mulf %318, %281 : vector<2x32xf32>
    %322 = arith.mulf %317, %319 : vector<2x32xf32>
    %323 = arith.addf %321, %322 : vector<2x32xf32>
    %324 = math.tanh %323 : vector<2x32xf32>
    %325 = arith.mulf %320, %324 : vector<2x32xf32>
    %326 = arith.negf %310 : vector<2x128xf32>
    %327 = math.exp %326 : vector<2x128xf32>
    %cst_90 = arith.constant 1.000000e+00 : f32
    %328 = vector.broadcast %cst_90 : f32 to vector<2x128xf32>
    %329 = arith.addf %328, %327 : vector<2x128xf32>
    %330 = arith.divf %328, %329 : vector<2x128xf32>
    %331 = math.tanh %310 : vector<2x128xf32>
    %332 = vector.extract_strided_slice %330 {offsets = [0, 0], sizes = [2, 32], strides = [1, 1]} : vector<2x128xf32> to vector<2x32xf32>
    %333 = vector.extract_strided_slice %330 {offsets = [0, 32], sizes = [2, 32], strides = [1, 1]} : vector<2x128xf32> to vector<2x32xf32>
    %334 = vector.extract_strided_slice %331 {offsets = [0, 64], sizes = [2, 32], strides = [1, 1]} : vector<2x128xf32> to vector<2x32xf32>
    %335 = vector.extract_strided_slice %330 {offsets = [0, 96], sizes = [2, 32], strides = [1, 1]} : vector<2x128xf32> to vector<2x32xf32>
    %336 = arith.mulf %333, %296 : vector<2x32xf32>
    %337 = arith.mulf %332, %334 : vector<2x32xf32>
    %338 = arith.addf %336, %337 : vector<2x32xf32>
    %339 = math.tanh %338 : vector<2x32xf32>
    %340 = arith.mulf %335, %339 : vector<2x32xf32>
    %c14_91 = arith.constant 14 : index
    %c0_92 = arith.constant 0 : index
    %341 = vector.load %arg12[%c14_91, %c0_92] : memref<16x32xf32, #tpu.memory_space<vmem>>, vector<2x32xf32>
    tpu.vector_store %arg12[%c14_91, %c0_92], %325 {strides = array<i32>} : memref<16x32xf32, #tpu.memory_space<vmem>>, vector<2x32xf32>,
    %c0_93 = arith.constant 0 : index
    %c0_94 = arith.constant 0 : index
    %342 = vector.load %arg13[%c0_93, %c0_94] : memref<16x32xf32, #tpu.memory_space<vmem>>, vector<2x32xf32>
    tpu.vector_store %arg13[%c0_93, %c0_94], %340 {strides = array<i32>} : memref<16x32xf32, #tpu.memory_space<vmem>>, vector<2x32xf32>,
    %c0_95 = arith.constant 0 : index
    %c0_96 = arith.constant 0 : index
    %343 = vector.load %arg12[%c0_95, %c0_96] : memref<16x32xf32, #tpu.memory_space<vmem>>, vector<16x32xf32>
    %344 = arith.truncf %343 : vector<16x32xf32> to vector<16x32xbf16>
    %c0_97 = arith.constant 0 : index
    %c0_98 = arith.constant 0 : index
    %345 = vector.load %arg5[%c0_97, %c0_98] : memref<64x256xbf16, #tpu.memory_space<vmem>>, vector<32x256xbf16>
    %cst_99 = arith.constant dense<0.000000e+00> : vector<16x256xf32>
    %346 = tpu.matmul %344, %345, %cst_99 {dimension_numbers = #tpu.dot_dimension_numbers<[1], [0], [0], [1], [0, 0, 1, 1], [], []>} : vector<16x32xbf16>, vector<32x256xbf16>, vector<16x256xf32> -> vector<16x256xf32>
    %c0_100 = arith.constant 0 : index
    %c0_101 = arith.constant 0 : index
    %347 = vector.load %arg13[%c0_100, %c0_101] : memref<16x32xf32, #tpu.memory_space<vmem>>, vector<16x32xf32>
    %348 = arith.truncf %347 : vector<16x32xf32> to vector<16x32xbf16>
    %c32 = arith.constant 32 : index
    %c0_102 = arith.constant 0 : index
    %349 = vector.load %arg5[%c32, %c0_102] : memref<64x256xbf16, #tpu.memory_space<vmem>>, vector<32x256xbf16>
    %cst_103 = arith.constant dense<0.000000e+00> : vector<16x256xf32>
    %350 = tpu.matmul %348, %349, %cst_103 {dimension_numbers = #tpu.dot_dimension_numbers<[1], [0], [0], [1], [0, 0, 1, 1], [], []>} : vector<16x32xbf16>, vector<32x256xbf16>, vector<16x256xf32> -> vector<16x256xf32>
    %351 = arith.addf %346, %350 : vector<16x256xf32>
    %c0_104 = arith.constant 0 : index
    %c0_105 = arith.constant 0 : index
    %352 = vector.load %arg8[%c0_104, %c0_105] : memref<1x256xf32, #tpu.memory_space<vmem>>, vector<1x256xf32>
    %353 = vector.broadcast %352 : vector<1x256xf32> to vector<16x256xf32>
    %354 = arith.addf %351, %353 : vector<16x256xf32>
    %355 = vector.extract_strided_slice %354 {offsets = [0, 0], sizes = [2, 128], strides = [1, 1]} : vector<16x256xf32> to vector<2x128xf32>
    %356 = arith.truncf %0 : vector<2x32xf32> to vector<2x32xbf16>
    %c0_106 = arith.constant 0 : index
    %c0_107 = arith.constant 0 : index
    %357 = vector.load %arg6[%c0_106, %c0_107] : memref<32x128xbf16, #tpu.memory_space<vmem>>, vector<32x128xbf16>
    %cst_108 = arith.constant dense<0.000000e+00> : vector<2x128xf32>
    %358 = tpu.matmul %356, %357, %cst_108 {dimension_numbers = #tpu.dot_dimension_numbers<[1], [0], [0], [1], [0, 0, 1, 1], [], []>} : vector<2x32xbf16>, vector<32x128xbf16>, vector<2x128xf32> -> vector<2x128xf32>
    %359 = arith.addf %355, %358 : vector<2x128xf32>
    %360 = vector.extract_strided_slice %354 {offsets = [14, 128], sizes = [2, 128], strides = [1, 1]} : vector<16x256xf32> to vector<2x128xf32>
    %361 = arith.truncf %0 : vector<2x32xf32> to vector<2x32xbf16>
    %c0_109 = arith.constant 0 : index
    %c0_110 = arith.constant 0 : index
    %362 = vector.load %arg7[%c0_109, %c0_110] : memref<32x128xbf16, #tpu.memory_space<vmem>>, vector<32x128xbf16>
    %cst_111 = arith.constant dense<0.000000e+00> : vector<2x128xf32>
    %363 = tpu.matmul %361, %362, %cst_111 {dimension_numbers = #tpu.dot_dimension_numbers<[1], [0], [0], [1], [0, 0, 1, 1], [], []>} : vector<2x32xbf16>, vector<32x128xbf16>, vector<2x128xf32> -> vector<2x128xf32>
    %364 = arith.addf %360, %363 : vector<2x128xf32>
    %365 = arith.negf %359 : vector<2x128xf32>
    %366 = math.exp %365 : vector<2x128xf32>
    %cst_112 = arith.constant 1.000000e+00 : f32
    %367 = vector.broadcast %cst_112 : f32 to vector<2x128xf32>
    %368 = arith.addf %367, %366 : vector<2x128xf32>
    %369 = arith.divf %367, %368 : vector<2x128xf32>
    %370 = math.tanh %359 : vector<2x128xf32>
    %371 = vector.extract_strided_slice %369 {offsets = [0, 0], sizes = [2, 32], strides = [1, 1]} : vector<2x128xf32> to vector<2x32xf32>
    %372 = vector.extract_strided_slice %369 {offsets = [0, 32], sizes = [2, 32], strides = [1, 1]} : vector<2x128xf32> to vector<2x32xf32>
    %373 = vector.extract_strided_slice %370 {offsets = [0, 64], sizes = [2, 32], strides = [1, 1]} : vector<2x128xf32> to vector<2x32xf32>
    %374 = vector.extract_strided_slice %369 {offsets = [0, 96], sizes = [2, 32], strides = [1, 1]} : vector<2x128xf32> to vector<2x32xf32>
    %375 = arith.mulf %372, %0 : vector<2x32xf32>
    %376 = arith.mulf %371, %373 : vector<2x32xf32>
    %377 = arith.addf %375, %376 : vector<2x32xf32>
    %378 = math.tanh %377 : vector<2x32xf32>
    %379 = arith.mulf %374, %378 : vector<2x32xf32>
    %380 = arith.negf %364 : vector<2x128xf32>
    %381 = math.exp %380 : vector<2x128xf32>
    %cst_113 = arith.constant 1.000000e+00 : f32
    %382 = vector.broadcast %cst_113 : f32 to vector<2x128xf32>
    %383 = arith.addf %382, %381 : vector<2x128xf32>
    %384 = arith.divf %382, %383 : vector<2x128xf32>
    %385 = math.tanh %364 : vector<2x128xf32>
    %386 = vector.extract_strided_slice %384 {offsets = [0, 0], sizes = [2, 32], strides = [1, 1]} : vector<2x128xf32> to vector<2x32xf32>
    %387 = vector.extract_strided_slice %384 {offsets = [0, 32], sizes = [2, 32], strides = [1, 1]} : vector<2x128xf32> to vector<2x32xf32>
    %388 = vector.extract_strided_slice %385 {offsets = [0, 64], sizes = [2, 32], strides = [1, 1]} : vector<2x128xf32> to vector<2x32xf32>
    %389 = vector.extract_strided_slice %384 {offsets = [0, 96], sizes = [2, 32], strides = [1, 1]} : vector<2x128xf32> to vector<2x32xf32>
    %390 = arith.mulf %387, %0 : vector<2x32xf32>
    %391 = arith.mulf %386, %388 : vector<2x32xf32>
    %392 = arith.addf %390, %391 : vector<2x32xf32>
    %393 = math.tanh %392 : vector<2x32xf32>
    %394 = arith.mulf %389, %393 : vector<2x32xf32>
    %395 = vector.extract_strided_slice %354 {offsets = [2, 0], sizes = [2, 128], strides = [1, 1]} : vector<16x256xf32> to vector<2x128xf32>
    %396 = arith.truncf %379 : vector<2x32xf32> to vector<2x32xbf16>
    %c0_114 = arith.constant 0 : index
    %c0_115 = arith.constant 0 : index
    %397 = vector.load %arg6[%c0_114, %c0_115] : memref<32x128xbf16, #tpu.memory_space<vmem>>, vector<32x128xbf16>
    %cst_116 = arith.constant dense<0.000000e+00> : vector<2x128xf32>
    %398 = tpu.matmul %396, %397, %cst_116 {dimension_numbers = #tpu.dot_dimension_numbers<[1], [0], [0], [1], [0, 0, 1, 1], [], []>} : vector<2x32xbf16>, vector<32x128xbf16>, vector<2x128xf32> -> vector<2x128xf32>
    %399 = arith.addf %395, %398 : vector<2x128xf32>
    %400 = vector.extract_strided_slice %354 {offsets = [12, 128], sizes = [2, 128], strides = [1, 1]} : vector<16x256xf32> to vector<2x128xf32>
    %401 = arith.truncf %394 : vector<2x32xf32> to vector<2x32xbf16>
    %c0_117 = arith.constant 0 : index
    %c0_118 = arith.constant 0 : index
    %402 = vector.load %arg7[%c0_117, %c0_118] : memref<32x128xbf16, #tpu.memory_space<vmem>>, vector<32x128xbf16>
    %cst_119 = arith.constant dense<0.000000e+00> : vector<2x128xf32>
    %403 = tpu.matmul %401, %402, %cst_119 {dimension_numbers = #tpu.dot_dimension_numbers<[1], [0], [0], [1], [0, 0, 1, 1], [], []>} : vector<2x32xbf16>, vector<32x128xbf16>, vector<2x128xf32> -> vector<2x128xf32>
    %404 = arith.addf %400, %403 : vector<2x128xf32>
    %405 = arith.negf %399 : vector<2x128xf32>
    %406 = math.exp %405 : vector<2x128xf32>
    %cst_120 = arith.constant 1.000000e+00 : f32
    %407 = vector.broadcast %cst_120 : f32 to vector<2x128xf32>
    %408 = arith.addf %407, %406 : vector<2x128xf32>
    %409 = arith.divf %407, %408 : vector<2x128xf32>
    %410 = math.tanh %399 : vector<2x128xf32>
    %411 = vector.extract_strided_slice %409 {offsets = [0, 0], sizes = [2, 32], strides = [1, 1]} : vector<2x128xf32> to vector<2x32xf32>
    %412 = vector.extract_strided_slice %409 {offsets = [0, 32], sizes = [2, 32], strides = [1, 1]} : vector<2x128xf32> to vector<2x32xf32>
    %413 = vector.extract_strided_slice %410 {offsets = [0, 64], sizes = [2, 32], strides = [1, 1]} : vector<2x128xf32> to vector<2x32xf32>
    %414 = vector.extract_strided_slice %409 {offsets = [0, 96], sizes = [2, 32], strides = [1, 1]} : vector<2x128xf32> to vector<2x32xf32>
    %415 = arith.mulf %412, %377 : vector<2x32xf32>
    %416 = arith.mulf %411, %413 : vector<2x32xf32>
    %417 = arith.addf %415, %416 : vector<2x32xf32>
    %418 = math.tanh %417 : vector<2x32xf32>
    %419 = arith.mulf %414, %418 : vector<2x32xf32>
    %420 = arith.negf %404 : vector<2x128xf32>
    %421 = math.exp %420 : vector<2x128xf32>
    %cst_121 = arith.constant 1.000000e+00 : f32
    %422 = vector.broadcast %cst_121 : f32 to vector<2x128xf32>
    %423 = arith.addf %422, %421 : vector<2x128xf32>
    %424 = arith.divf %422, %423 : vector<2x128xf32>
    %425 = math.tanh %404 : vector<2x128xf32>
    %426 = vector.extract_strided_slice %424 {offsets = [0, 0], sizes = [2, 32], strides = [1, 1]} : vector<2x128xf32> to vector<2x32xf32>
    %427 = vector.extract_strided_slice %424 {offsets = [0, 32], sizes = [2, 32], strides = [1, 1]} : vector<2x128xf32> to vector<2x32xf32>
    %428 = vector.extract_strided_slice %425 {offsets = [0, 64], sizes = [2, 32], strides = [1, 1]} : vector<2x128xf32> to vector<2x32xf32>
    %429 = vector.extract_strided_slice %424 {offsets = [0, 96], sizes = [2, 32], strides = [1, 1]} : vector<2x128xf32> to vector<2x32xf32>
    %430 = arith.mulf %427, %392 : vector<2x32xf32>
    %431 = arith.mulf %426, %428 : vector<2x32xf32>
    %432 = arith.addf %430, %431 : vector<2x32xf32>
    %433 = math.tanh %432 : vector<2x32xf32>
    %434 = arith.mulf %429, %433 : vector<2x32xf32>
    %435 = vector.extract_strided_slice %354 {offsets = [4, 0], sizes = [2, 128], strides = [1, 1]} : vector<16x256xf32> to vector<2x128xf32>
    %436 = arith.truncf %419 : vector<2x32xf32> to vector<2x32xbf16>
    %c0_122 = arith.constant 0 : index
    %c0_123 = arith.constant 0 : index
    %437 = vector.load %arg6[%c0_122, %c0_123] : memref<32x128xbf16, #tpu.memory_space<vmem>>, vector<32x128xbf16>
    %cst_124 = arith.constant dense<0.000000e+00> : vector<2x128xf32>
    %438 = tpu.matmul %436, %437, %cst_124 {dimension_numbers = #tpu.dot_dimension_numbers<[1], [0], [0], [1], [0, 0, 1, 1], [], []>} : vector<2x32xbf16>, vector<32x128xbf16>, vector<2x128xf32> -> vector<2x128xf32>
    %439 = arith.addf %435, %438 : vector<2x128xf32>
    %440 = vector.extract_strided_slice %354 {offsets = [10, 128], sizes = [2, 128], strides = [1, 1]} : vector<16x256xf32> to vector<2x128xf32>
    %441 = arith.truncf %434 : vector<2x32xf32> to vector<2x32xbf16>
    %c0_125 = arith.constant 0 : index
    %c0_126 = arith.constant 0 : index
    %442 = vector.load %arg7[%c0_125, %c0_126] : memref<32x128xbf16, #tpu.memory_space<vmem>>, vector<32x128xbf16>
    %cst_127 = arith.constant dense<0.000000e+00> : vector<2x128xf32>
    %443 = tpu.matmul %441, %442, %cst_127 {dimension_numbers = #tpu.dot_dimension_numbers<[1], [0], [0], [1], [0, 0, 1, 1], [], []>} : vector<2x32xbf16>, vector<32x128xbf16>, vector<2x128xf32> -> vector<2x128xf32>
    %444 = arith.addf %440, %443 : vector<2x128xf32>
    %445 = arith.negf %439 : vector<2x128xf32>
    %446 = math.exp %445 : vector<2x128xf32>
    %cst_128 = arith.constant 1.000000e+00 : f32
    %447 = vector.broadcast %cst_128 : f32 to vector<2x128xf32>
    %448 = arith.addf %447, %446 : vector<2x128xf32>
    %449 = arith.divf %447, %448 : vector<2x128xf32>
    %450 = math.tanh %439 : vector<2x128xf32>
    %451 = vector.extract_strided_slice %449 {offsets = [0, 0], sizes = [2, 32], strides = [1, 1]} : vector<2x128xf32> to vector<2x32xf32>
    %452 = vector.extract_strided_slice %449 {offsets = [0, 32], sizes = [2, 32], strides = [1, 1]} : vector<2x128xf32> to vector<2x32xf32>
    %453 = vector.extract_strided_slice %450 {offsets = [0, 64], sizes = [2, 32], strides = [1, 1]} : vector<2x128xf32> to vector<2x32xf32>
    %454 = vector.extract_strided_slice %449 {offsets = [0, 96], sizes = [2, 32], strides = [1, 1]} : vector<2x128xf32> to vector<2x32xf32>
    %455 = arith.mulf %452, %417 : vector<2x32xf32>
    %456 = arith.mulf %451, %453 : vector<2x32xf32>
    %457 = arith.addf %455, %456 : vector<2x32xf32>
    %458 = math.tanh %457 : vector<2x32xf32>
    %459 = arith.mulf %454, %458 : vector<2x32xf32>
    %460 = arith.negf %444 : vector<2x128xf32>
    %461 = math.exp %460 : vector<2x128xf32>
    %cst_129 = arith.constant 1.000000e+00 : f32
    %462 = vector.broadcast %cst_129 : f32 to vector<2x128xf32>
    %463 = arith.addf %462, %461 : vector<2x128xf32>
    %464 = arith.divf %462, %463 : vector<2x128xf32>
    %465 = math.tanh %444 : vector<2x128xf32>
    %466 = vector.extract_strided_slice %464 {offsets = [0, 0], sizes = [2, 32], strides = [1, 1]} : vector<2x128xf32> to vector<2x32xf32>
    %467 = vector.extract_strided_slice %464 {offsets = [0, 32], sizes = [2, 32], strides = [1, 1]} : vector<2x128xf32> to vector<2x32xf32>
    %468 = vector.extract_strided_slice %465 {offsets = [0, 64], sizes = [2, 32], strides = [1, 1]} : vector<2x128xf32> to vector<2x32xf32>
    %469 = vector.extract_strided_slice %464 {offsets = [0, 96], sizes = [2, 32], strides = [1, 1]} : vector<2x128xf32> to vector<2x32xf32>
    %470 = arith.mulf %467, %432 : vector<2x32xf32>
    %471 = arith.mulf %466, %468 : vector<2x32xf32>
    %472 = arith.addf %470, %471 : vector<2x32xf32>
    %473 = math.tanh %472 : vector<2x32xf32>
    %474 = arith.mulf %469, %473 : vector<2x32xf32>
    %475 = vector.extract_strided_slice %354 {offsets = [6, 0], sizes = [2, 128], strides = [1, 1]} : vector<16x256xf32> to vector<2x128xf32>
    %476 = arith.truncf %459 : vector<2x32xf32> to vector<2x32xbf16>
    %c0_130 = arith.constant 0 : index
    %c0_131 = arith.constant 0 : index
    %477 = vector.load %arg6[%c0_130, %c0_131] : memref<32x128xbf16, #tpu.memory_space<vmem>>, vector<32x128xbf16>
    %cst_132 = arith.constant dense<0.000000e+00> : vector<2x128xf32>
    %478 = tpu.matmul %476, %477, %cst_132 {dimension_numbers = #tpu.dot_dimension_numbers<[1], [0], [0], [1], [0, 0, 1, 1], [], []>} : vector<2x32xbf16>, vector<32x128xbf16>, vector<2x128xf32> -> vector<2x128xf32>
    %479 = arith.addf %475, %478 : vector<2x128xf32>
    %480 = vector.extract_strided_slice %354 {offsets = [8, 128], sizes = [2, 128], strides = [1, 1]} : vector<16x256xf32> to vector<2x128xf32>
    %481 = arith.truncf %474 : vector<2x32xf32> to vector<2x32xbf16>
    %c0_133 = arith.constant 0 : index
    %c0_134 = arith.constant 0 : index
    %482 = vector.load %arg7[%c0_133, %c0_134] : memref<32x128xbf16, #tpu.memory_space<vmem>>, vector<32x128xbf16>
    %cst_135 = arith.constant dense<0.000000e+00> : vector<2x128xf32>
    %483 = tpu.matmul %481, %482, %cst_135 {dimension_numbers = #tpu.dot_dimension_numbers<[1], [0], [0], [1], [0, 0, 1, 1], [], []>} : vector<2x32xbf16>, vector<32x128xbf16>, vector<2x128xf32> -> vector<2x128xf32>
    %484 = arith.addf %480, %483 : vector<2x128xf32>
    %485 = arith.negf %479 : vector<2x128xf32>
    %486 = math.exp %485 : vector<2x128xf32>
    %cst_136 = arith.constant 1.000000e+00 : f32
    %487 = vector.broadcast %cst_136 : f32 to vector<2x128xf32>
    %488 = arith.addf %487, %486 : vector<2x128xf32>
    %489 = arith.divf %487, %488 : vector<2x128xf32>
    %490 = math.tanh %479 : vector<2x128xf32>
    %491 = vector.extract_strided_slice %489 {offsets = [0, 0], sizes = [2, 32], strides = [1, 1]} : vector<2x128xf32> to vector<2x32xf32>
    %492 = vector.extract_strided_slice %489 {offsets = [0, 32], sizes = [2, 32], strides = [1, 1]} : vector<2x128xf32> to vector<2x32xf32>
    %493 = vector.extract_strided_slice %490 {offsets = [0, 64], sizes = [2, 32], strides = [1, 1]} : vector<2x128xf32> to vector<2x32xf32>
    %494 = vector.extract_strided_slice %489 {offsets = [0, 96], sizes = [2, 32], strides = [1, 1]} : vector<2x128xf32> to vector<2x32xf32>
    %495 = arith.mulf %492, %457 : vector<2x32xf32>
    %496 = arith.mulf %491, %493 : vector<2x32xf32>
    %497 = arith.addf %495, %496 : vector<2x32xf32>
    %498 = math.tanh %497 : vector<2x32xf32>
    %499 = arith.mulf %494, %498 : vector<2x32xf32>
    %500 = arith.negf %484 : vector<2x128xf32>
    %501 = math.exp %500 : vector<2x128xf32>
    %cst_137 = arith.constant 1.000000e+00 : f32
    %502 = vector.broadcast %cst_137 : f32 to vector<2x128xf32>
    %503 = arith.addf %502, %501 : vector<2x128xf32>
    %504 = arith.divf %502, %503 : vector<2x128xf32>
    %505 = math.tanh %484 : vector<2x128xf32>
    %506 = vector.extract_strided_slice %504 {offsets = [0, 0], sizes = [2, 32], strides = [1, 1]} : vector<2x128xf32> to vector<2x32xf32>
    %507 = vector.extract_strided_slice %504 {offsets = [0, 32], sizes = [2, 32], strides = [1, 1]} : vector<2x128xf32> to vector<2x32xf32>
    %508 = vector.extract_strided_slice %505 {offsets = [0, 64], sizes = [2, 32], strides = [1, 1]} : vector<2x128xf32> to vector<2x32xf32>
    %509 = vector.extract_strided_slice %504 {offsets = [0, 96], sizes = [2, 32], strides = [1, 1]} : vector<2x128xf32> to vector<2x32xf32>
    %510 = arith.mulf %507, %472 : vector<2x32xf32>
    %511 = arith.mulf %506, %508 : vector<2x32xf32>
    %512 = arith.addf %510, %511 : vector<2x32xf32>
    %513 = math.tanh %512 : vector<2x32xf32>
    %514 = arith.mulf %509, %513 : vector<2x32xf32>
    %515 = vector.extract_strided_slice %354 {offsets = [8, 0], sizes = [2, 128], strides = [1, 1]} : vector<16x256xf32> to vector<2x128xf32>
    %516 = arith.truncf %499 : vector<2x32xf32> to vector<2x32xbf16>
    %c0_138 = arith.constant 0 : index
    %c0_139 = arith.constant 0 : index
    %517 = vector.load %arg6[%c0_138, %c0_139] : memref<32x128xbf16, #tpu.memory_space<vmem>>, vector<32x128xbf16>
    %cst_140 = arith.constant dense<0.000000e+00> : vector<2x128xf32>
    %518 = tpu.matmul %516, %517, %cst_140 {dimension_numbers = #tpu.dot_dimension_numbers<[1], [0], [0], [1], [0, 0, 1, 1], [], []>} : vector<2x32xbf16>, vector<32x128xbf16>, vector<2x128xf32> -> vector<2x128xf32>
    %519 = arith.addf %515, %518 : vector<2x128xf32>
    %520 = vector.extract_strided_slice %354 {offsets = [6, 128], sizes = [2, 128], strides = [1, 1]} : vector<16x256xf32> to vector<2x128xf32>
    %521 = arith.truncf %514 : vector<2x32xf32> to vector<2x32xbf16>
    %c0_141 = arith.constant 0 : index
    %c0_142 = arith.constant 0 : index
    %522 = vector.load %arg7[%c0_141, %c0_142] : memref<32x128xbf16, #tpu.memory_space<vmem>>, vector<32x128xbf16>
    %cst_143 = arith.constant dense<0.000000e+00> : vector<2x128xf32>
    %523 = tpu.matmul %521, %522, %cst_143 {dimension_numbers = #tpu.dot_dimension_numbers<[1], [0], [0], [1], [0, 0, 1, 1], [], []>} : vector<2x32xbf16>, vector<32x128xbf16>, vector<2x128xf32> -> vector<2x128xf32>
    %524 = arith.addf %520, %523 : vector<2x128xf32>
    %525 = arith.negf %519 : vector<2x128xf32>
    %526 = math.exp %525 : vector<2x128xf32>
    %cst_144 = arith.constant 1.000000e+00 : f32
    %527 = vector.broadcast %cst_144 : f32 to vector<2x128xf32>
    %528 = arith.addf %527, %526 : vector<2x128xf32>
    %529 = arith.divf %527, %528 : vector<2x128xf32>
    %530 = math.tanh %519 : vector<2x128xf32>
    %531 = vector.extract_strided_slice %529 {offsets = [0, 0], sizes = [2, 32], strides = [1, 1]} : vector<2x128xf32> to vector<2x32xf32>
    %532 = vector.extract_strided_slice %529 {offsets = [0, 32], sizes = [2, 32], strides = [1, 1]} : vector<2x128xf32> to vector<2x32xf32>
    %533 = vector.extract_strided_slice %530 {offsets = [0, 64], sizes = [2, 32], strides = [1, 1]} : vector<2x128xf32> to vector<2x32xf32>
    %534 = vector.extract_strided_slice %529 {offsets = [0, 96], sizes = [2, 32], strides = [1, 1]} : vector<2x128xf32> to vector<2x32xf32>
    %535 = arith.mulf %532, %497 : vector<2x32xf32>
    %536 = arith.mulf %531, %533 : vector<2x32xf32>
    %537 = arith.addf %535, %536 : vector<2x32xf32>
    %538 = math.tanh %537 : vector<2x32xf32>
    %539 = arith.mulf %534, %538 : vector<2x32xf32>
    %540 = arith.negf %524 : vector<2x128xf32>
    %541 = math.exp %540 : vector<2x128xf32>
    %cst_145 = arith.constant 1.000000e+00 : f32
    %542 = vector.broadcast %cst_145 : f32 to vector<2x128xf32>
    %543 = arith.addf %542, %541 : vector<2x128xf32>
    %544 = arith.divf %542, %543 : vector<2x128xf32>
    %545 = math.tanh %524 : vector<2x128xf32>
    %546 = vector.extract_strided_slice %544 {offsets = [0, 0], sizes = [2, 32], strides = [1, 1]} : vector<2x128xf32> to vector<2x32xf32>
    %547 = vector.extract_strided_slice %544 {offsets = [0, 32], sizes = [2, 32], strides = [1, 1]} : vector<2x128xf32> to vector<2x32xf32>
    %548 = vector.extract_strided_slice %545 {offsets = [0, 64], sizes = [2, 32], strides = [1, 1]} : vector<2x128xf32> to vector<2x32xf32>
    %549 = vector.extract_strided_slice %544 {offsets = [0, 96], sizes = [2, 32], strides = [1, 1]} : vector<2x128xf32> to vector<2x32xf32>
    %550 = arith.mulf %547, %512 : vector<2x32xf32>
    %551 = arith.mulf %546, %548 : vector<2x32xf32>
    %552 = arith.addf %550, %551 : vector<2x32xf32>
    %553 = math.tanh %552 : vector<2x32xf32>
    %554 = arith.mulf %549, %553 : vector<2x32xf32>
    %555 = vector.extract_strided_slice %354 {offsets = [10, 0], sizes = [2, 128], strides = [1, 1]} : vector<16x256xf32> to vector<2x128xf32>
    %556 = arith.truncf %539 : vector<2x32xf32> to vector<2x32xbf16>
    %c0_146 = arith.constant 0 : index
    %c0_147 = arith.constant 0 : index
    %557 = vector.load %arg6[%c0_146, %c0_147] : memref<32x128xbf16, #tpu.memory_space<vmem>>, vector<32x128xbf16>
    %cst_148 = arith.constant dense<0.000000e+00> : vector<2x128xf32>
    %558 = tpu.matmul %556, %557, %cst_148 {dimension_numbers = #tpu.dot_dimension_numbers<[1], [0], [0], [1], [0, 0, 1, 1], [], []>} : vector<2x32xbf16>, vector<32x128xbf16>, vector<2x128xf32> -> vector<2x128xf32>
    %559 = arith.addf %555, %558 : vector<2x128xf32>
    %560 = vector.extract_strided_slice %354 {offsets = [4, 128], sizes = [2, 128], strides = [1, 1]} : vector<16x256xf32> to vector<2x128xf32>
    %561 = arith.truncf %554 : vector<2x32xf32> to vector<2x32xbf16>
    %c0_149 = arith.constant 0 : index
    %c0_150 = arith.constant 0 : index
    %562 = vector.load %arg7[%c0_149, %c0_150] : memref<32x128xbf16, #tpu.memory_space<vmem>>, vector<32x128xbf16>
    %cst_151 = arith.constant dense<0.000000e+00> : vector<2x128xf32>
    %563 = tpu.matmul %561, %562, %cst_151 {dimension_numbers = #tpu.dot_dimension_numbers<[1], [0], [0], [1], [0, 0, 1, 1], [], []>} : vector<2x32xbf16>, vector<32x128xbf16>, vector<2x128xf32> -> vector<2x128xf32>
    %564 = arith.addf %560, %563 : vector<2x128xf32>
    %565 = arith.negf %559 : vector<2x128xf32>
    %566 = math.exp %565 : vector<2x128xf32>
    %cst_152 = arith.constant 1.000000e+00 : f32
    %567 = vector.broadcast %cst_152 : f32 to vector<2x128xf32>
    %568 = arith.addf %567, %566 : vector<2x128xf32>
    %569 = arith.divf %567, %568 : vector<2x128xf32>
    %570 = math.tanh %559 : vector<2x128xf32>
    %571 = vector.extract_strided_slice %569 {offsets = [0, 0], sizes = [2, 32], strides = [1, 1]} : vector<2x128xf32> to vector<2x32xf32>
    %572 = vector.extract_strided_slice %569 {offsets = [0, 32], sizes = [2, 32], strides = [1, 1]} : vector<2x128xf32> to vector<2x32xf32>
    %573 = vector.extract_strided_slice %570 {offsets = [0, 64], sizes = [2, 32], strides = [1, 1]} : vector<2x128xf32> to vector<2x32xf32>
    %574 = vector.extract_strided_slice %569 {offsets = [0, 96], sizes = [2, 32], strides = [1, 1]} : vector<2x128xf32> to vector<2x32xf32>
    %575 = arith.mulf %572, %537 : vector<2x32xf32>
    %576 = arith.mulf %571, %573 : vector<2x32xf32>
    %577 = arith.addf %575, %576 : vector<2x32xf32>
    %578 = math.tanh %577 : vector<2x32xf32>
    %579 = arith.mulf %574, %578 : vector<2x32xf32>
    %580 = arith.negf %564 : vector<2x128xf32>
    %581 = math.exp %580 : vector<2x128xf32>
    %cst_153 = arith.constant 1.000000e+00 : f32
    %582 = vector.broadcast %cst_153 : f32 to vector<2x128xf32>
    %583 = arith.addf %582, %581 : vector<2x128xf32>
    %584 = arith.divf %582, %583 : vector<2x128xf32>
    %585 = math.tanh %564 : vector<2x128xf32>
    %586 = vector.extract_strided_slice %584 {offsets = [0, 0], sizes = [2, 32], strides = [1, 1]} : vector<2x128xf32> to vector<2x32xf32>
    %587 = vector.extract_strided_slice %584 {offsets = [0, 32], sizes = [2, 32], strides = [1, 1]} : vector<2x128xf32> to vector<2x32xf32>
    %588 = vector.extract_strided_slice %585 {offsets = [0, 64], sizes = [2, 32], strides = [1, 1]} : vector<2x128xf32> to vector<2x32xf32>
    %589 = vector.extract_strided_slice %584 {offsets = [0, 96], sizes = [2, 32], strides = [1, 1]} : vector<2x128xf32> to vector<2x32xf32>
    %590 = arith.mulf %587, %552 : vector<2x32xf32>
    %591 = arith.mulf %586, %588 : vector<2x32xf32>
    %592 = arith.addf %590, %591 : vector<2x32xf32>
    %593 = math.tanh %592 : vector<2x32xf32>
    %594 = arith.mulf %589, %593 : vector<2x32xf32>
    %595 = vector.extract_strided_slice %354 {offsets = [12, 0], sizes = [2, 128], strides = [1, 1]} : vector<16x256xf32> to vector<2x128xf32>
    %596 = arith.truncf %579 : vector<2x32xf32> to vector<2x32xbf16>
    %c0_154 = arith.constant 0 : index
    %c0_155 = arith.constant 0 : index
    %597 = vector.load %arg6[%c0_154, %c0_155] : memref<32x128xbf16, #tpu.memory_space<vmem>>, vector<32x128xbf16>
    %cst_156 = arith.constant dense<0.000000e+00> : vector<2x128xf32>
    %598 = tpu.matmul %596, %597, %cst_156 {dimension_numbers = #tpu.dot_dimension_numbers<[1], [0], [0], [1], [0, 0, 1, 1], [], []>} : vector<2x32xbf16>, vector<32x128xbf16>, vector<2x128xf32> -> vector<2x128xf32>
    %599 = arith.addf %595, %598 : vector<2x128xf32>
    %600 = vector.extract_strided_slice %354 {offsets = [2, 128], sizes = [2, 128], strides = [1, 1]} : vector<16x256xf32> to vector<2x128xf32>
    %601 = arith.truncf %594 : vector<2x32xf32> to vector<2x32xbf16>
    %c0_157 = arith.constant 0 : index
    %c0_158 = arith.constant 0 : index
    %602 = vector.load %arg7[%c0_157, %c0_158] : memref<32x128xbf16, #tpu.memory_space<vmem>>, vector<32x128xbf16>
    %cst_159 = arith.constant dense<0.000000e+00> : vector<2x128xf32>
    %603 = tpu.matmul %601, %602, %cst_159 {dimension_numbers = #tpu.dot_dimension_numbers<[1], [0], [0], [1], [0, 0, 1, 1], [], []>} : vector<2x32xbf16>, vector<32x128xbf16>, vector<2x128xf32> -> vector<2x128xf32>
    %604 = arith.addf %600, %603 : vector<2x128xf32>
    %605 = arith.negf %599 : vector<2x128xf32>
    %606 = math.exp %605 : vector<2x128xf32>
    %cst_160 = arith.constant 1.000000e+00 : f32
    %607 = vector.broadcast %cst_160 : f32 to vector<2x128xf32>
    %608 = arith.addf %607, %606 : vector<2x128xf32>
    %609 = arith.divf %607, %608 : vector<2x128xf32>
    %610 = math.tanh %599 : vector<2x128xf32>
    %611 = vector.extract_strided_slice %609 {offsets = [0, 0], sizes = [2, 32], strides = [1, 1]} : vector<2x128xf32> to vector<2x32xf32>
    %612 = vector.extract_strided_slice %609 {offsets = [0, 32], sizes = [2, 32], strides = [1, 1]} : vector<2x128xf32> to vector<2x32xf32>
    %613 = vector.extract_strided_slice %610 {offsets = [0, 64], sizes = [2, 32], strides = [1, 1]} : vector<2x128xf32> to vector<2x32xf32>
    %614 = vector.extract_strided_slice %609 {offsets = [0, 96], sizes = [2, 32], strides = [1, 1]} : vector<2x128xf32> to vector<2x32xf32>
    %615 = arith.mulf %612, %577 : vector<2x32xf32>
    %616 = arith.mulf %611, %613 : vector<2x32xf32>
    %617 = arith.addf %615, %616 : vector<2x32xf32>
    %618 = math.tanh %617 : vector<2x32xf32>
    %619 = arith.mulf %614, %618 : vector<2x32xf32>
    %620 = arith.negf %604 : vector<2x128xf32>
    %621 = math.exp %620 : vector<2x128xf32>
    %cst_161 = arith.constant 1.000000e+00 : f32
    %622 = vector.broadcast %cst_161 : f32 to vector<2x128xf32>
    %623 = arith.addf %622, %621 : vector<2x128xf32>
    %624 = arith.divf %622, %623 : vector<2x128xf32>
    %625 = math.tanh %604 : vector<2x128xf32>
    %626 = vector.extract_strided_slice %624 {offsets = [0, 0], sizes = [2, 32], strides = [1, 1]} : vector<2x128xf32> to vector<2x32xf32>
    %627 = vector.extract_strided_slice %624 {offsets = [0, 32], sizes = [2, 32], strides = [1, 1]} : vector<2x128xf32> to vector<2x32xf32>
    %628 = vector.extract_strided_slice %625 {offsets = [0, 64], sizes = [2, 32], strides = [1, 1]} : vector<2x128xf32> to vector<2x32xf32>
    %629 = vector.extract_strided_slice %624 {offsets = [0, 96], sizes = [2, 32], strides = [1, 1]} : vector<2x128xf32> to vector<2x32xf32>
    %630 = arith.mulf %627, %592 : vector<2x32xf32>
    %631 = arith.mulf %626, %628 : vector<2x32xf32>
    %632 = arith.addf %630, %631 : vector<2x32xf32>
    %633 = math.tanh %632 : vector<2x32xf32>
    %634 = arith.mulf %629, %633 : vector<2x32xf32>
    %635 = vector.extract_strided_slice %354 {offsets = [14, 0], sizes = [2, 128], strides = [1, 1]} : vector<16x256xf32> to vector<2x128xf32>
    %636 = arith.truncf %619 : vector<2x32xf32> to vector<2x32xbf16>
    %c0_162 = arith.constant 0 : index
    %c0_163 = arith.constant 0 : index
    %637 = vector.load %arg6[%c0_162, %c0_163] : memref<32x128xbf16, #tpu.memory_space<vmem>>, vector<32x128xbf16>
    %cst_164 = arith.constant dense<0.000000e+00> : vector<2x128xf32>
    %638 = tpu.matmul %636, %637, %cst_164 {dimension_numbers = #tpu.dot_dimension_numbers<[1], [0], [0], [1], [0, 0, 1, 1], [], []>} : vector<2x32xbf16>, vector<32x128xbf16>, vector<2x128xf32> -> vector<2x128xf32>
    %639 = arith.addf %635, %638 : vector<2x128xf32>
    %640 = vector.extract_strided_slice %354 {offsets = [0, 128], sizes = [2, 128], strides = [1, 1]} : vector<16x256xf32> to vector<2x128xf32>
    %641 = arith.truncf %634 : vector<2x32xf32> to vector<2x32xbf16>
    %c0_165 = arith.constant 0 : index
    %c0_166 = arith.constant 0 : index
    %642 = vector.load %arg7[%c0_165, %c0_166] : memref<32x128xbf16, #tpu.memory_space<vmem>>, vector<32x128xbf16>
    %cst_167 = arith.constant dense<0.000000e+00> : vector<2x128xf32>
    %643 = tpu.matmul %641, %642, %cst_167 {dimension_numbers = #tpu.dot_dimension_numbers<[1], [0], [0], [1], [0, 0, 1, 1], [], []>} : vector<2x32xbf16>, vector<32x128xbf16>, vector<2x128xf32> -> vector<2x128xf32>
    %644 = arith.addf %640, %643 : vector<2x128xf32>
    %645 = arith.negf %639 : vector<2x128xf32>
    %646 = math.exp %645 : vector<2x128xf32>
    %cst_168 = arith.constant 1.000000e+00 : f32
    %647 = vector.broadcast %cst_168 : f32 to vector<2x128xf32>
    %648 = arith.addf %647, %646 : vector<2x128xf32>
    %649 = arith.divf %647, %648 : vector<2x128xf32>
    %650 = math.tanh %639 : vector<2x128xf32>
    %651 = vector.extract_strided_slice %649 {offsets = [0, 0], sizes = [2, 32], strides = [1, 1]} : vector<2x128xf32> to vector<2x32xf32>
    %652 = vector.extract_strided_slice %649 {offsets = [0, 32], sizes = [2, 32], strides = [1, 1]} : vector<2x128xf32> to vector<2x32xf32>
    %653 = vector.extract_strided_slice %650 {offsets = [0, 64], sizes = [2, 32], strides = [1, 1]} : vector<2x128xf32> to vector<2x32xf32>
    %654 = vector.extract_strided_slice %649 {offsets = [0, 96], sizes = [2, 32], strides = [1, 1]} : vector<2x128xf32> to vector<2x32xf32>
    %655 = arith.mulf %652, %617 : vector<2x32xf32>
    %656 = arith.mulf %651, %653 : vector<2x32xf32>
    %657 = arith.addf %655, %656 : vector<2x32xf32>
    %658 = math.tanh %657 : vector<2x32xf32>
    %659 = arith.mulf %654, %658 : vector<2x32xf32>
    %660 = arith.negf %644 : vector<2x128xf32>
    %661 = math.exp %660 : vector<2x128xf32>
    %cst_169 = arith.constant 1.000000e+00 : f32
    %662 = vector.broadcast %cst_169 : f32 to vector<2x128xf32>
    %663 = arith.addf %662, %661 : vector<2x128xf32>
    %664 = arith.divf %662, %663 : vector<2x128xf32>
    %665 = math.tanh %644 : vector<2x128xf32>
    %666 = vector.extract_strided_slice %664 {offsets = [0, 0], sizes = [2, 32], strides = [1, 1]} : vector<2x128xf32> to vector<2x32xf32>
    %667 = vector.extract_strided_slice %664 {offsets = [0, 32], sizes = [2, 32], strides = [1, 1]} : vector<2x128xf32> to vector<2x32xf32>
    %668 = vector.extract_strided_slice %665 {offsets = [0, 64], sizes = [2, 32], strides = [1, 1]} : vector<2x128xf32> to vector<2x32xf32>
    %669 = vector.extract_strided_slice %664 {offsets = [0, 96], sizes = [2, 32], strides = [1, 1]} : vector<2x128xf32> to vector<2x32xf32>
    %670 = arith.mulf %667, %632 : vector<2x32xf32>
    %671 = arith.mulf %666, %668 : vector<2x32xf32>
    %672 = arith.addf %670, %671 : vector<2x32xf32>
    %673 = math.tanh %672 : vector<2x32xf32>
    %674 = arith.mulf %669, %673 : vector<2x32xf32>
    %c0_170 = arith.constant 0 : index
    %c0_171 = arith.constant 0 : index
    %675 = vector.load %arg9[%c0_170, %c0_171] : memref<64x2xf32, #tpu.memory_space<vmem>>, vector<32x2xf32>
    %cst_172 = arith.constant dense<0.000000e+00> : vector<2x2xf32>
    %676 = tpu.matmul %674, %675, %cst_172 {dimension_numbers = #tpu.dot_dimension_numbers<[1], [0], [0], [1], [0, 0, 1, 1], [], []>} : vector<2x32xf32>, vector<32x2xf32>, vector<2x2xf32> -> vector<2x2xf32>
    %c32_173 = arith.constant 32 : index
    %c0_174 = arith.constant 0 : index
    %677 = vector.load %arg9[%c32_173, %c0_174] : memref<64x2xf32, #tpu.memory_space<vmem>>, vector<32x2xf32>
    %cst_175 = arith.constant dense<0.000000e+00> : vector<2x2xf32>
    %678 = tpu.matmul %659, %677, %cst_175 {dimension_numbers = #tpu.dot_dimension_numbers<[1], [0], [0], [1], [0, 0, 1, 1], [], []>} : vector<2x32xf32>, vector<32x2xf32>, vector<2x2xf32> -> vector<2x2xf32>
    %679 = arith.addf %676, %678 : vector<2x2xf32>
    %c0_176 = arith.constant 0 : index
    %c0_177 = arith.constant 0 : index
    %680 = vector.load %arg10[%c0_176, %c0_177] : memref<1x2xf32, #tpu.memory_space<vmem>>, vector<1x2xf32>
    %681 = vector.broadcast %680 : vector<1x2xf32> to vector<2x2xf32>
    %682 = arith.addf %679, %681 : vector<2x2xf32>
    %c0_178 = arith.constant 0 : index
    %c0_179 = arith.constant 0 : index
    %683 = vector.load %arg11[%c0_178, %c0_179] : memref<2x2xf32, #tpu.memory_space<vmem>>, vector<2x2xf32>
    tpu.vector_store %arg11[%c0_178, %c0_179], %682 {strides = array<i32>} : memref<2x2xf32, #tpu.memory_space<vmem>>, vector<2x2xf32>,
    return
  }
}

</mosaic_0001>

<llo_original>
// kernel: tpu_custom_call.1
$region0: #{tpu_custom_call.1}
  #allocation0 [shape = 'u32[]', space=smem, size = 0x4, offset = 0x4, fixed_abs, tag = 'smem constant byte address 0x4 - core index']
  #allocation1 [shape = 'u32[144,128]{1,0:T(1,128)}', space=vmem, size = 0x12000, scoped, tag = 'internal scratch']
  #allocation2 [shape = 'f32[16,32]{1,0:T(8,128)}', space=vmem, size = 0x2000, scoped, tag = 'scratch operand']
  #allocation3 [shape = 'f32[16,32]{1,0:T(8,128)}', space=vmem, size = 0x2000, scoped, tag = 'scratch operand']
  %s0 = inlined_call_operand.hbm [shape: bf16[16,16], index: 0, kind: input, shape index: {}]
  %s1 = inlined_call_operand.vmem [shape: bf16[16,256], index: 1, kind: input, shape index: {}]
  %s2 = inlined_call_operand.hbm [shape: bf16[32,128], index: 2, kind: input, shape index: {}]
  %s3 = inlined_call_operand.hbm [shape: bf16[32,128], index: 3, kind: input, shape index: {}]
  %s4 = inlined_call_operand.vmem [shape: f32[1,256], index: 4, kind: input, shape index: {}]
  %s5 = inlined_call_operand.vmem [shape: bf16[64,256], index: 5, kind: input, shape index: {}]
  %s6 = inlined_call_operand.hbm [shape: bf16[32,128], index: 6, kind: input, shape index: {}]
  %s7 = inlined_call_operand.hbm [shape: bf16[32,128], index: 7, kind: input, shape index: {}]
  %s8 = inlined_call_operand.vmem [shape: f32[1,256], index: 8, kind: input, shape index: {}]
  %s9 = inlined_call_operand.vmem [shape: f32[64,2], index: 9, kind: input, shape index: {}]
  %s10 = inlined_call_operand.vmem [shape: f32[1,2], index: 10, kind: input, shape index: {}]
  %s11 = inlined_call_operand.hbm [shape: f32[2,2], index: 11, kind: output, shape index: {}]
  %s12 = sld [smem:[#allocation0]]
  $region74: #{tpu_custom_call.1} parent=0
    _
  %s14 = ssub.s32 1, %s12
  %s15 = scalar_select 0, %s14, %s12
  $region1: #{tpu_custom_call.1} parent=0
    #allocation4 [shape = 'u8[4096]{0}', space=vmem, size = 0x1000, scoped, tag = 'input window, operand 0, single buffered']
    #allocation5 [shape = 's32[1]{0}', space=sflag, size = 0x4, scoped, tag = 'scoped memory for tpu_custom_call.1']
    #allocation6 [shape = 's32[1]{0}', space=sflag, size = 0x4, scoped, tag = 'scoped memory for tpu_custom_call.1']
    #allocation7 [shape = 'u8[8192]{0}', space=vmem, size = 0x2000, scoped, tag = 'input window, operand 2, single buffered']
    #allocation8 [shape = 's32[1]{0}', space=sflag, size = 0x4, scoped, tag = 'scoped memory for tpu_custom_call.1']
    #allocation9 [shape = 'u8[8192]{0}', space=vmem, size = 0x2000, scoped, tag = 'input window, operand 3, single buffered']
    #allocation10 [shape = 'u8[8192]{0}', space=vmem, size = 0x2000, scoped, tag = 'input window, operand 6, single buffered']
    #allocation11 [shape = 's32[1]{0}', space=sflag, size = 0x4, scoped, tag = 'scoped memory for tpu_custom_call.1']
    #allocation12 [shape = 'u8[8192]{0}', space=vmem, size = 0x2000, scoped, tag = 'input window, operand 7, single buffered']
    #allocation13 [shape = 'u8[1024]{0}', space=vmem, size = 0x400, scoped, tag = 'output window, operand 0, single buffered']
    %16 = vsyncpa [#allocation5], 0
    %17 = vsyncpa [#allocation8], 0
    %18 = vsyncpa [#allocation11], 0
    %19 = vsyncpa [#allocation6], 0
    // Predicated region
    $region2: #{tpu_custom_call.1} parent=1 // pred_check
      _
    $region3: #{tpu_custom_call.1} parent=1 // pred_check_branch
      %21 = sbr.rel (0) target = $region5
    $region4: #{tpu_custom_call.1} parent=1 // pred_region
      %s23 = ssub.s32 128, 128
      %24 = vsyncadd [#allocation5], %s23
      %s25 = sshll.u32 [#allocation4], 4
      %s26 = int_to_ptr.vmem [resolvable:$true] %s25
      %31 = dma.hbm_to_vmem [thread:$0]  %s0, 128, %s26, [#allocation5], 64, 64, 4
    $region5: #{tpu_custom_call.1} parent=1 // pred_fallthru
      _
    // Predicated region
    $region6: #{tpu_custom_call.1} parent=1 // pred_check
      _
    $region7: #{tpu_custom_call.1} parent=1 // pred_check_branch
      %33 = sbr.rel (0) target = $region9
    $region8: #{tpu_custom_call.1} parent=1 // pred_region
      _
    $region9: #{tpu_custom_call.1} parent=1 // pred_fallthru
      _
    // Predicated region
    $region10: #{tpu_custom_call.1} parent=1 // pred_check
      _
    $region11: #{tpu_custom_call.1} parent=1 // pred_check_branch
      %35 = sbr.rel (0) target = $region13
    $region12: #{tpu_custom_call.1} parent=1 // pred_region
      %s37 = ssub.s32 256, 256
      %38 = vsyncadd [#allocation8], %s37
      %s39 = sshll.u32 [#allocation7], 4
      %s40 = int_to_ptr.vmem [resolvable:$true] %s39
      %45 = dma.hbm_to_vmem [thread:$0]  %s2, 256, %s40, [#allocation8], 64, 64, 4
    $region13: #{tpu_custom_call.1} parent=1 // pred_fallthru
      _
    // Predicated region
    $region14: #{tpu_custom_call.1} parent=1 // pred_check
      _
    $region15: #{tpu_custom_call.1} parent=1 // pred_check_branch
      %47 = sbr.rel (0) target = $region17
    $region16: #{tpu_custom_call.1} parent=1 // pred_region
      %s49 = ssub.s32 256, 256
      %50 = vsyncadd [#allocation8], %s49
      %s51 = sshll.u32 [#allocation9], 4
      %s52 = int_to_ptr.vmem [resolvable:$true] %s51
      %57 = dma.hbm_to_vmem [thread:$0]  %s3, 256, %s52, [#allocation8], 64, 64, 4
    $region17: #{tpu_custom_call.1} parent=1 // pred_fallthru
      _
    // Predicated region
    $region18: #{tpu_custom_call.1} parent=1 // pred_check
      _
    $region19: #{tpu_custom_call.1} parent=1 // pred_check_branch
      %59 = sbr.rel (0) target = $region21
    $region20: #{tpu_custom_call.1} parent=1 // pred_region
      _
    $region21: #{tpu_custom_call.1} parent=1 // pred_fallthru
      _
    // Predicated region
    $region22: #{tpu_custom_call.1} parent=1 // pred_check
      _
    $region23: #{tpu_custom_call.1} parent=1 // pred_check_branch
      %61 = sbr.rel (0) target = $region25
    $region24: #{tpu_custom_call.1} parent=1 // pred_region
      _
    $region25: #{tpu_custom_call.1} parent=1 // pred_fallthru
      _
    // Predicated region
    $region26: #{tpu_custom_call.1} parent=1 // pred_check
      _
    $region27: #{tpu_custom_call.1} parent=1 // pred_check_branch
      %63 = sbr.rel (0) target = $region29
    $region28: #{tpu_custom_call.1} parent=1 // pred_region
      %s65 = ssub.s32 256, 256
      %66 = vsyncadd [#allocation11], %s65
      %s67 = sshll.u32 [#allocation10], 4
      %s68 = int_to_ptr.vmem [resolvable:$true] %s67
      %73 = dma.hbm_to_vmem [thread:$0]  %s6, 256, %s68, [#allocation11], 64, 64, 4
    $region29: #{tpu_custom_call.1} parent=1 // pred_fallthru
      _
    // Predicated region
    $region30: #{tpu_custom_call.1} parent=1 // pred_check
      _
    $region31: #{tpu_custom_call.1} parent=1 // pred_check_branch
      %75 = sbr.rel (0) target = $region33
    $region32: #{tpu_custom_call.1} parent=1 // pred_region
      %s77 = ssub.s32 256, 256
      %78 = vsyncadd [#allocation11], %s77
      %s79 = sshll.u32 [#allocation12], 4
      %s80 = int_to_ptr.vmem [resolvable:$true] %s79
      %85 = dma.hbm_to_vmem [thread:$0]  %s7, 256, %s80, [#allocation11], 64, 64, 4
    $region33: #{tpu_custom_call.1} parent=1 // pred_fallthru
      _
    // Predicated region
    $region34: #{tpu_custom_call.1} parent=1 // pred_check
      _
    $region35: #{tpu_custom_call.1} parent=1 // pred_check_branch
      %87 = sbr.rel (0) target = $region37
    $region36: #{tpu_custom_call.1} parent=1 // pred_region
      _
    $region37: #{tpu_custom_call.1} parent=1 // pred_fallthru
      _
    // Predicated region
    $region38: #{tpu_custom_call.1} parent=1 // pred_check
      _
    $region39: #{tpu_custom_call.1} parent=1 // pred_check_branch
      %89 = sbr.rel (0) target = $region41
    $region40: #{tpu_custom_call.1} parent=1 // pred_region
      _
    $region41: #{tpu_custom_call.1} parent=1 // pred_fallthru
      _
    // Predicated region
    $region42: #{tpu_custom_call.1} parent=1 // pred_check
      _
    $region43: #{tpu_custom_call.1} parent=1 // pred_check_branch
      %91 = sbr.rel (0) target = $region45
    $region44: #{tpu_custom_call.1} parent=1 // pred_region
      _
    $region45: #{tpu_custom_call.1} parent=1 // pred_fallthru
      _
    // Predicated region
    $region46: #{tpu_custom_call.1} parent=1 // pred_check
      _
    $region47: #{tpu_custom_call.1} parent=1 // pred_check_branch
      %93 = sbr.rel (0) target = $region49
    $region48: #{tpu_custom_call.1} parent=1 // pred_region
      %94 = dma.done [#allocation5], 128
    $region49: #{tpu_custom_call.1} parent=1 // pred_fallthru
      _
    // Predicated region
    $region50: #{tpu_custom_call.1} parent=1 // pred_check
      _
    $region51: #{tpu_custom_call.1} parent=1 // pred_check_branch
      %96 = sbr.rel (0) target = $region53
    $region52: #{tpu_custom_call.1} parent=1 // pred_region
      %97 = dma.done [#allocation8], 256
    $region53: #{tpu_custom_call.1} parent=1 // pred_fallthru
      _
    // Predicated region
    $region54: #{tpu_custom_call.1} parent=1 // pred_check
      _
    $region55: #{tpu_custom_call.1} parent=1 // pred_check_branch
      %99 = sbr.rel (0) target = $region57
    $region56: #{tpu_custom_call.1} parent=1 // pred_region
      %100 = dma.done [#allocation8], 256
    $region57: #{tpu_custom_call.1} parent=1 // pred_fallthru
      _
    // Predicated region
    $region58: #{tpu_custom_call.1} parent=1 // pred_check
      _
    $region59: #{tpu_custom_call.1} parent=1 // pred_check_branch
      %102 = sbr.rel (0) target = $region61
    $region60: #{tpu_custom_call.1} parent=1 // pred_region
      %103 = dma.done [#allocation11], 256
    $region61: #{tpu_custom_call.1} parent=1 // pred_fallthru
      _
    // Predicated region
    $region62: #{tpu_custom_call.1} parent=1 // pred_check
      _
    $region63: #{tpu_custom_call.1} parent=1 // pred_check_branch
      %105 = sbr.rel (0) target = $region65
    $region64: #{tpu_custom_call.1} parent=1 // pred_region
      %106 = dma.done [#allocation11], 256
    $region65: #{tpu_custom_call.1} parent=1 // pred_fallthru
      _
    %v108 = vld [vmem:[#allocation4] sm:$0xf]
    %v109 = vld [vmem:[#allocation4 + $0x4] sm:$0xf]
    %v110 = vld [vmem:[%s1] sm:$0xff]
    %v111 = vld [vmem:[%s1 + $0x8] sm:$0xff]
    %v112 = vld [vmem:[%s4] sm:$0x3]
    %v114 = vlaneseq
    %v115 = vshrl.u32 %v114, 7
    %v116 = vsub.s32 0, %v115
    %v117 = vrot.slane %v112, %v116
    %v118 = vlaneseq
    %v119 = vshrl.u32 %v118, 7
    %v120 = vsub.s32 1, %v119
    %v121 = vrot.slane %v112, %v120
    %v126 = vunpack.c.l.b16 %v108
    %v127 = vunpack.c.l.b16 %v109
    %v128 = vpack.c.b16 %v127, %v126
    %v131 = vunpack.c.l.b16 %v110
    %v132 = vunpack.c.h.b16 %v110
    %v133 = vunpack.c.l.b16 %v111
    %v134 = vunpack.c.h.b16 %v111
    %v135 = vpack.c.b16 %v133, %v131
    %v136 = vpack.c.b16 %v134, %v132
    %vm139 = vcmask 130048
    %v141 = vsel %vm139, %v128, 0
    %143 = vmatprep.subr.bf16.mxu0 %v136
    %144 = vmatpush1.bf16.msra.mxu0 %v135
    %145 = vmatprep.subr.bf16.mxu0 0
    %146 = vmatpush1.bf16.msra.mxu0 0
    %147 = vmatprep.subr.bf16.mxu0 0
    %148 = vmatpush1.bf16.msra.mxu0 0
    %149 = vmatprep.subr.bf16.mxu0 0
    %150 = vmatpush1.bf16.msra.mxu0 0
    %151 = vmatprep.subr.bf16.mxu0 0
    %152 = vmatpush1.bf16.msra.mxu0 0
    %153 = vmatprep.subr.bf16.mxu0 0
    %154 = vmatpush1.bf16.msra.mxu0 0
    %155 = vmatprep.subr.bf16.mxu0 0
    %156 = vmatpush1.bf16.msra.mxu0 0
    %157 = vmatprep.subr.bf16.mxu0 0
    %158 = vmatpush1.bf16.msra.mxu0 0
    %159 = vmatprep.subr.bf16.mxu0 0
    %160 = vmatpush1.bf16.msra.mxu0 0
    %161 = vmatprep.subr.bf16.mxu0 0
    %162 = vmatpush1.bf16.msra.mxu0 0
    %163 = vmatprep.subr.bf16.mxu0 0
    %164 = vmatpush1.bf16.msra.mxu0 0
    %165 = vmatprep.subr.bf16.mxu0 0
    %166 = vmatpush1.bf16.msra.mxu0 0
    %167 = vmatprep.subr.bf16.mxu0 0
    %168 = vmatpush1.bf16.msra.mxu0 0
    %169 = vmatprep.subr.bf16.mxu0 0
    %170 = vmatpush1.bf16.msra.mxu0 0
    %171 = vmatprep.subr.bf16.mxu0 0
    %172 = vmatpush1.bf16.msra.mxu0 0
    %173 = vmatprep.subr.bf16.mxu0 0
    %174 = vmatpush1.bf16.msra.mxu0 0
    %175 = vmatprep.mubr.bf16.mxu0 0
    %176 = vmatmul.mubr.bf16.gmra.mrb[0].mxu0 %v141
    %v177 = vpop.f32.mrb[0].mxu0
    %v178 = vadd.f32 %v117, %v177
    %v179 = vpop.f32.mrb[0].mxu0
    %v180 = vadd.f32 %v121, %v179
    %v181 = vpop.f32.mrb[0].mxu0
    %v182 = vadd.f32 %v117, %v181
    %v183 = vpop.f32.mrb[0].mxu0
    %v184 = vadd.f32 %v121, %v183
    %185 = vdwg.mxu0
    %v186 = vld [vmem:[#allocation7] sm:$0xf]
    %v187 = vld [vmem:[#allocation7 + $0x4] sm:$0xf]
    %v188 = vld [vmem:[#allocation7 + $0x8] sm:$0xf]
    %v189 = vld [vmem:[#allocation7 + $0xc] sm:$0xf]
    %v194 = vunpack.c.l.b16 %v186
    %v195 = vunpack.c.l.b16 %v187
    %v196 = vunpack.c.l.b16 %v188
    %v197 = vunpack.c.l.b16 %v189
    %v198 = vpack.c.b16 %v195, %v194
    %v199 = vpack.c.b16 %v197, %v196
    %vm202 = vcmask 261120
    %v204 = vsel %vm202, 0, 0
    %206 = vmatprep.subr.bf16.mxu0 0
    %207 = vmatpush1.bf16.msra.mxu0 %v198
    %208 = vmatprep.subr.bf16.mxu0 0
    %209 = vmatpush1.bf16.msra.mxu0 %v199
    %210 = vmatprep.subr.bf16.mxu0 0
    %211 = vmatpush1.bf16.msra.mxu0 0
    %212 = vmatprep.subr.bf16.mxu0 0
    %213 = vmatpush1.bf16.msra.mxu0 0
    %214 = vmatprep.subr.bf16.mxu0 0
    %215 = vmatpush1.bf16.msra.mxu0 0
    %216 = vmatprep.subr.bf16.mxu0 0
    %217 = vmatpush1.bf16.msra.mxu0 0
    %218 = vmatprep.subr.bf16.mxu0 0
    %219 = vmatpush1.bf16.msra.mxu0 0
    %220 = vmatprep.subr.bf16.mxu0 0
    %221 = vmatpush1.bf16.msra.mxu0 0
    %222 = vmatprep.subr.bf16.mxu0 0
    %223 = vmatpush1.bf16.msra.mxu0 0
    %224 = vmatprep.subr.bf16.mxu0 0
    %225 = vmatpush1.bf16.msra.mxu0 0
    %226 = vmatprep.subr.bf16.mxu0 0
    %227 = vmatpush1.bf16.msra.mxu0 0
    %228 = vmatprep.subr.bf16.mxu0 0
    %229 = vmatpush1.bf16.msra.mxu0 0
    %230 = vmatprep.subr.bf16.mxu0 0
    %231 = vmatpush1.bf16.msra.mxu0 0
    %232 = vmatprep.subr.bf16.mxu0 0
    %233 = vmatpush1.bf16.msra.mxu0 0
    %234 = vmatprep.subr.bf16.mxu0 0
    %235 = vmatpush1.bf16.msra.mxu0 0
    %236 = vmatprep.subr.bf16.mxu0 0
    %237 = vmatpush1.bf16.msra.mxu0 0
    %238 = vmatprep.mubr.bf16.mxu0 0
    %239 = vmatmul.mubr.bf16.gmra.mrb[0].mxu0 %v204
    %v240 = vpop.f32.mrb[0].mxu0
    %v241 = vadd.f32 0.0, %v240
    %v242 = vpop.f32.mrb[0].mxu0
    %v243 = vpop.f32.mrb[0].mxu0
    %v244 = vpop.f32.mrb[0].mxu0
    %245 = vdwg.mxu0
    %v246 = vadd.f32 %v178, %v241
    %v247 = vld [vmem:[#allocation9] sm:$0xf]
    %v248 = vld [vmem:[#allocation9 + $0x4] sm:$0xf]
    %v249 = vld [vmem:[#allocation9 + $0x8] sm:$0xf]
    %v250 = vld [vmem:[#allocation9 + $0xc] sm:$0xf]
    %v255 = vunpack.c.l.b16 %v247
    %v256 = vunpack.c.l.b16 %v248
    %v257 = vunpack.c.l.b16 %v249
    %v258 = vunpack.c.l.b16 %v250
    %v259 = vpack.c.b16 %v256, %v255
    %v260 = vpack.c.b16 %v258, %v257
    %263 = vmatprep.subr.bf16.mxu0 0
    %264 = vmatpush1.bf16.msra.mxu0 %v259
    %265 = vmatprep.subr.bf16.mxu0 0
    %266 = vmatpush1.bf16.msra.mxu0 %v260
    %267 = vmatprep.subr.bf16.mxu0 0
    %268 = vmatpush1.bf16.msra.mxu0 0
    %269 = vmatprep.subr.bf16.mxu0 0
    %270 = vmatpush1.bf16.msra.mxu0 0
    %271 = vmatprep.subr.bf16.mxu0 0
    %272 = vmatpush1.bf16.msra.mxu0 0
    %273 = vmatprep.subr.bf16.mxu0 0
    %274 = vmatpush1.bf16.msra.mxu0 0
    %275 = vmatprep.subr.bf16.mxu0 0
    %276 = vmatpush1.bf16.msra.mxu0 0
    %277 = vmatprep.subr.bf16.mxu0 0
    %278 = vmatpush1.bf16.msra.mxu0 0
    %279 = vmatprep.subr.bf16.mxu0 0
    %280 = vmatpush1.bf16.msra.mxu0 0
    %281 = vmatprep.subr.bf16.mxu0 0
    %282 = vmatpush1.bf16.msra.mxu0 0
    %283 = vmatprep.subr.bf16.mxu0 0
    %284 = vmatpush1.bf16.msra.mxu0 0
    %285 = vmatprep.subr.bf16.mxu0 0
    %286 = vmatpush1.bf16.msra.mxu0 0
    %287 = vmatprep.subr.bf16.mxu0 0
    %288 = vmatpush1.bf16.msra.mxu0 0
    %289 = vmatprep.subr.bf16.mxu0 0
    %290 = vmatpush1.bf16.msra.mxu0 0
    %291 = vmatprep.subr.bf16.mxu0 0
    %292 = vmatpush1.bf16.msra.mxu0 0
    %293 = vmatprep.subr.bf16.mxu0 0
    %294 = vmatpush1.bf16.msra.mxu0 0
    %295 = vmatprep.mubr.bf16.mxu0 0
    %296 = vmatmul.mubr.bf16.gmra.mrb[0].mxu0 %v204
    %v297 = vpop.f32.mrb[0].mxu0
    %v298 = vadd.f32 0.0, %v297
    %v299 = vpop.f32.mrb[0].mxu0
    %v300 = vpop.f32.mrb[0].mxu0
    %v301 = vpop.f32.mrb[0].mxu0
    %302 = vdwg.mxu0
    %v304 = vrot.slane %v298, 2
    %v306 = vadd.f32 %v184, %v304
    %v307 = vxor.u32 %v246, 2147483648
    %v308 = vmul.f32 %v307, 1.442695
    %v309 = vpow.pop %v308
    %v310 = vadd.f32 %v309, 1.0
    %v311 = vrcp.pop %v310
    %v312 = vmul.f32 1.0, %v311
    %v313 = vtanh.pop %v246
    %v314 = vmul.f32 %v312, 0.0
    %316 = vrot.lane.b32.xlu0 %v313, 64
    %v317 = vpop.permute.xlu0 %316
    %v319 = vmul.f32 %v312, %v317
    %321 = vrot.lane.b32.xlu0 %v319, 32
    %v322 = vpop.permute.xlu0 %321
    %v324 = vadd.f32 %v314, %v322
    %v325 = vtanh.pop %v324
    %327 = vrot.lane.b32.xlu0 %v325, 64
    %v328 = vpop.permute.xlu0 %327
    %v330 = vmul.f32 %v312, %v328
    %v331 = vxor.u32 %v306, 2147483648
    %v332 = vmul.f32 %v331, 1.442695
    %v333 = vpow.pop %v332
    %v334 = vadd.f32 %v333, 1.0
    %v335 = vrcp.pop %v334
    %v336 = vmul.f32 1.0, %v335
    %v337 = vtanh.pop %v306
    %v338 = vmul.f32 %v336, 0.0
    %340 = vrot.lane.b32.xlu0 %v337, 64
    %v341 = vpop.permute.xlu0 %340
    %v343 = vmul.f32 %v336, %v341
    %345 = vrot.lane.b32.xlu0 %v343, 32
    %v346 = vpop.permute.xlu0 %345
    %v348 = vadd.f32 %v338, %v346
    %v349 = vtanh.pop %v348
    %351 = vrot.lane.b32.xlu0 %v349, 64
    %v352 = vpop.permute.xlu0 %351
    %v354 = vmul.f32 %v336, %v352
    %356 = vrot.lane.b32.xlu0 %v330, 32
    %v357 = vpop.permute.xlu0 %356
    %vm359 = vcmask 254976
    %360 = vst.msk [vmem:[#allocation2] sm:$0x3] %vm359, %v357
    %362 = vrot.lane.b32.xlu0 %v354, 32
    %v363 = vpop.permute.xlu0 %362
    %vm365 = vcmask 261126
    %366 = vst.msk [vmem:[#allocation3 + $0x8] sm:$0xc0] %vm365, %v363
    %v367 = vpack.c.bf16 %v330, %v330
    %v368 = vld [vmem:[#allocation7] sm:$0xf]
    %v369 = vld [vmem:[#allocation7 + $0x4] sm:$0xf]
    %v370 = vld [vmem:[#allocation7 + $0x8] sm:$0xf]
    %v371 = vld [vmem:[#allocation7 + $0xc] sm:$0xf]
    %373 = vrot.lane.b32.xlu0 %v367, 32
    %v374 = vpop.permute.xlu0 %373
    %v379 = vunpack.c.l.b16 %v368
    %v380 = vunpack.c.l.b16 %v369
    %v381 = vunpack.c.l.b16 %v370
    %v382 = vunpack.c.l.b16 %v371
    %v383 = vpack.c.b16 %v380, %v379
    %v384 = vpack.c.b16 %v382, %v381
    %v388 = vsel %vm202, %v374, 0
    %390 = vmatprep.subr.bf16.mxu0 0
    %391 = vmatpush1.bf16.msra.mxu0 %v383
    %392 = vmatprep.subr.bf16.mxu0 0
    %393 = vmatpush1.bf16.msra.mxu0 %v384
    %394 = vmatprep.subr.bf16.mxu0 0
    %395 = vmatpush1.bf16.msra.mxu0 0
    %396 = vmatprep.subr.bf16.mxu0 0
    %397 = vmatpush1.bf16.msra.mxu0 0
    %398 = vmatprep.subr.bf16.mxu0 0
    %399 = vmatpush1.bf16.msra.mxu0 0
    %400 = vmatprep.subr.bf16.mxu0 0
    %401 = vmatpush1.bf16.msra.mxu0 0
    %402 = vmatprep.subr.bf16.mxu0 0
    %403 = vmatpush1.bf16.msra.mxu0 0
    %404 = vmatprep.subr.bf16.mxu0 0
    %405 = vmatpush1.bf16.msra.mxu0 0
    %406 = vmatprep.subr.bf16.mxu0 0
    %407 = vmatpush1.bf16.msra.mxu0 0
    %408 = vmatprep.subr.bf16.mxu0 0
    %409 = vmatpush1.bf16.msra.mxu0 0
    %410 = vmatprep.subr.bf16.mxu0 0
    %411 = vmatpush1.bf16.msra.mxu0 0
    %412 = vmatprep.subr.bf16.mxu0 0
    %413 = vmatpush1.bf16.msra.mxu0 0
    %414 = vmatprep.subr.bf16.mxu0 0
    %415 = vmatpush1.bf16.msra.mxu0 0
    %416 = vmatprep.subr.bf16.mxu0 0
    %417 = vmatpush1.bf16.msra.mxu0 0
    %418 = vmatprep.subr.bf16.mxu0 0
    %419 = vmatpush1.bf16.msra.mxu0 0
    %420 = vmatprep.subr.bf16.mxu0 0
    %421 = vmatpush1.bf16.msra.mxu0 0
    %422 = vmatprep.mubr.bf16.mxu0 0
    %423 = vmatmul.mubr.bf16.gmra.mrb[0].mxu0 %v388
    %v424 = vpop.f32.mrb[0].mxu0
    %v425 = vadd.f32 0.0, %v424
    %v426 = vpop.f32.mrb[0].mxu0
    %v427 = vpop.f32.mrb[0].mxu0
    %v428 = vpop.f32.mrb[0].mxu0
    %429 = vdwg.mxu0
    %v431 = vrot.slane %v425, 6
    %v433 = vadd.f32 %v178, %v431
    %v434 = vpack.c.bf16 %v354, %v354
    %v435 = vld [vmem:[#allocation9] sm:$0xf]
    %v436 = vld [vmem:[#allocation9 + $0x4] sm:$0xf]
    %v437 = vld [vmem:[#allocation9 + $0x8] sm:$0xf]
    %v438 = vld [vmem:[#allocation9 + $0xc] sm:$0xf]
    %v440 = vrot.slane %v434, 3
    %441 = vrot.lane.b32.xlu0 %v440, 32
    %v442 = vpop.permute.xlu0 %441
    %v447 = vunpack.c.l.b16 %v435
    %v448 = vunpack.c.l.b16 %v436
    %v449 = vunpack.c.l.b16 %v437
    %v450 = vunpack.c.l.b16 %v438
    %v451 = vpack.c.b16 %v448, %v447
    %v452 = vpack.c.b16 %v450, %v449
    %v456 = vsel %vm202, %v442, 0
    %458 = vmatprep.subr.bf16.mxu0 0
    %459 = vmatpush1.bf16.msra.mxu0 %v451
    %460 = vmatprep.subr.bf16.mxu0 0
    %461 = vmatpush1.bf16.msra.mxu0 %v452
    %462 = vmatprep.subr.bf16.mxu0 0
    %463 = vmatpush1.bf16.msra.mxu0 0
    %464 = vmatprep.subr.bf16.mxu0 0
    %465 = vmatpush1.bf16.msra.mxu0 0
    %466 = vmatprep.subr.bf16.mxu0 0
    %467 = vmatpush1.bf16.msra.mxu0 0
    %468 = vmatprep.subr.bf16.mxu0 0
    %469 = vmatpush1.bf16.msra.mxu0 0
    %470 = vmatprep.subr.bf16.mxu0 0
    %471 = vmatpush1.bf16.msra.mxu0 0
    %472 = vmatprep.subr.bf16.mxu0 0
    %473 = vmatpush1.bf16.msra.mxu0 0
    %474 = vmatprep.subr.bf16.mxu0 0
    %475 = vmatpush1.bf16.msra.mxu0 0
    %476 = vmatprep.subr.bf16.mxu0 0
    %477 = vmatpush1.bf16.msra.mxu0 0
    %478 = vmatprep.subr.bf16.mxu0 0
    %479 = vmatpush1.bf16.msra.mxu0 0
    %480 = vmatprep.subr.bf16.mxu0 0
    %481 = vmatpush1.bf16.msra.mxu0 0
    %482 = vmatprep.subr.bf16.mxu0 0
    %483 = vmatpush1.bf16.msra.mxu0 0
    %484 = vmatprep.subr.bf16.mxu0 0
    %485 = vmatpush1.bf16.msra.mxu0 0
    %486 = vmatprep.subr.bf16.mxu0 0
    %487 = vmatpush1.bf16.msra.mxu0 0
    %488 = vmatprep.subr.bf16.mxu0 0
    %489 = vmatpush1.bf16.msra.mxu0 0
    %490 = vmatprep.mubr.bf16.mxu0 0
    %491 = vmatmul.mubr.bf16.gmra.mrb[0].mxu0 %v456
    %v492 = vpop.f32.mrb[0].mxu0
    %v493 = vadd.f32 0.0, %v492
    %v494 = vpop.f32.mrb[0].mxu0
    %v495 = vpop.f32.mrb[0].mxu0
    %v496 = vpop.f32.mrb[0].mxu0
    %497 = vdwg.mxu0
    %v499 = vrot.slane %v493, 4
    %v501 = vadd.f32 %v184, %v499
    %v502 = vxor.u32 %v433, 2147483648
    %v503 = vmul.f32 %v502, 1.442695
    %v504 = vpow.pop %v503
    %v505 = vadd.f32 %v504, 1.0
    %v506 = vrcp.pop %v505
    %v507 = vmul.f32 1.0, %v506
    %v508 = vtanh.pop %v433
    %v510 = vrot.slane %v324, 6
    %v512 = vmul.f32 %v507, %v510
    %514 = vrot.lane.b32.xlu0 %v508, 64
    %v515 = vpop.permute.xlu0 %514
    %v517 = vmul.f32 %v507, %v515
    %519 = vrot.lane.b32.xlu0 %v517, 32
    %v520 = vpop.permute.xlu0 %519
    %v522 = vadd.f32 %v512, %v520
    %v523 = vtanh.pop %v522
    %525 = vrot.lane.b32.xlu0 %v523, 64
    %v526 = vpop.permute.xlu0 %525
    %v528 = vmul.f32 %v507, %v526
    %v529 = vxor.u32 %v501, 2147483648
    %v530 = vmul.f32 %v529, 1.442695
    %v531 = vpow.pop %v530
    %v532 = vadd.f32 %v531, 1.0
    %v533 = vrcp.pop %v532
    %v534 = vmul.f32 1.0, %v533
    %v535 = vtanh.pop %v501
    %v537 = vrot.slane %v348, 2
    %v539 = vmul.f32 %v534, %v537
    %541 = vrot.lane.b32.xlu0 %v535, 64
    %v542 = vpop.permute.xlu0 %541
    %v544 = vmul.f32 %v534, %v542
    %546 = vrot.lane.b32.xlu0 %v544, 32
    %v547 = vpop.permute.xlu0 %546
    %v549 = vadd.f32 %v539, %v547
    %v550 = vtanh.pop %v549
    %552 = vrot.lane.b32.xlu0 %v550, 64
    %v553 = vpop.permute.xlu0 %552
    %v555 = vmul.f32 %v534, %v553
    %557 = vrot.lane.b32.xlu0 %v528, 32
    %v558 = vpop.permute.xlu0 %557
    %vm560 = vcmask 257026
    %561 = vst.msk [vmem:[#allocation2] sm:$0xc] %vm560, %v558
    %563 = vrot.lane.b32.xlu0 %v555, 32
    %v564 = vpop.permute.xlu0 %563
    %vm566 = vcmask 259076
    %567 = vst.msk [vmem:[#allocation3 + $0x8] sm:$0x30] %vm566, %v564
    %v568 = vpack.c.bf16 %v528, %v528
    %v569 = vld [vmem:[#allocation7] sm:$0xf]
    %v570 = vld [vmem:[#allocation7 + $0x4] sm:$0xf]
    %v571 = vld [vmem:[#allocation7 + $0x8] sm:$0xf]
    %v572 = vld [vmem:[#allocation7 + $0xc] sm:$0xf]
    %v574 = vrot.slane %v568, 1
    %575 = vrot.lane.b32.xlu0 %v574, 32
    %v576 = vpop.permute.xlu0 %575
    %v581 = vunpack.c.l.b16 %v569
    %v582 = vunpack.c.l.b16 %v570
    %v583 = vunpack.c.l.b16 %v571
    %v584 = vunpack.c.l.b16 %v572
    %v585 = vpack.c.b16 %v582, %v581
    %v586 = vpack.c.b16 %v584, %v583
    %v590 = vsel %vm202, %v576, 0
    %592 = vmatprep.subr.bf16.mxu0 0
    %593 = vmatpush1.bf16.msra.mxu0 %v585
    %594 = vmatprep.subr.bf16.mxu0 0
    %595 = vmatpush1.bf16.msra.mxu0 %v586
    %596 = vmatprep.subr.bf16.mxu0 0
    %597 = vmatpush1.bf16.msra.mxu0 0
    %598 = vmatprep.subr.bf16.mxu0 0
    %599 = vmatpush1.bf16.msra.mxu0 0
    %600 = vmatprep.subr.bf16.mxu0 0
    %601 = vmatpush1.bf16.msra.mxu0 0
    %602 = vmatprep.subr.bf16.mxu0 0
    %603 = vmatpush1.bf16.msra.mxu0 0
    %604 = vmatprep.subr.bf16.mxu0 0
    %605 = vmatpush1.bf16.msra.mxu0 0
    %606 = vmatprep.subr.bf16.mxu0 0
    %607 = vmatpush1.bf16.msra.mxu0 0
    %608 = vmatprep.subr.bf16.mxu0 0
    %609 = vmatpush1.bf16.msra.mxu0 0
    %610 = vmatprep.subr.bf16.mxu0 0
    %611 = vmatpush1.bf16.msra.mxu0 0
    %612 = vmatprep.subr.bf16.mxu0 0
    %613 = vmatpush1.bf16.msra.mxu0 0
    %614 = vmatprep.subr.bf16.mxu0 0
    %615 = vmatpush1.bf16.msra.mxu0 0
    %616 = vmatprep.subr.bf16.mxu0 0
    %617 = vmatpush1.bf16.msra.mxu0 0
    %618 = vmatprep.subr.bf16.mxu0 0
    %619 = vmatpush1.bf16.msra.mxu0 0
    %620 = vmatprep.subr.bf16.mxu0 0
    %621 = vmatpush1.bf16.msra.mxu0 0
    %622 = vmatprep.subr.bf16.mxu0 0
    %623 = vmatpush1.bf16.msra.mxu0 0
    %624 = vmatprep.mubr.bf16.mxu0 0
    %625 = vmatmul.mubr.bf16.gmra.mrb[0].mxu0 %v590
    %v626 = vpop.f32.mrb[0].mxu0
    %v627 = vadd.f32 0.0, %v626
    %v628 = vpop.f32.mrb[0].mxu0
    %v629 = vpop.f32.mrb[0].mxu0
    %v630 = vpop.f32.mrb[0].mxu0
    %631 = vdwg.mxu0
    %v633 = vrot.slane %v627, 4
    %v635 = vadd.f32 %v178, %v633
    %v636 = vpack.c.bf16 %v555, %v555
    %v637 = vld [vmem:[#allocation9] sm:$0xf]
    %v638 = vld [vmem:[#allocation9 + $0x4] sm:$0xf]
    %v639 = vld [vmem:[#allocation9 + $0x8] sm:$0xf]
    %v640 = vld [vmem:[#allocation9 + $0xc] sm:$0xf]
    %v642 = vrot.slane %v636, 2
    %643 = vrot.lane.b32.xlu0 %v642, 32
    %v644 = vpop.permute.xlu0 %643
    %v649 = vunpack.c.l.b16 %v637
    %v650 = vunpack.c.l.b16 %v638
    %v651 = vunpack.c.l.b16 %v639
    %v652 = vunpack.c.l.b16 %v640
    %v653 = vpack.c.b16 %v650, %v649
    %v654 = vpack.c.b16 %v652, %v651
    %v658 = vsel %vm202, %v644, 0
    %660 = vmatprep.subr.bf16.mxu0 0
    %661 = vmatpush1.bf16.msra.mxu0 %v653
    %662 = vmatprep.subr.bf16.mxu0 0
    %663 = vmatpush1.bf16.msra.mxu0 %v654
    %664 = vmatprep.subr.bf16.mxu0 0
    %665 = vmatpush1.bf16.msra.mxu0 0
    %666 = vmatprep.subr.bf16.mxu0 0
    %667 = vmatpush1.bf16.msra.mxu0 0
    %668 = vmatprep.subr.bf16.mxu0 0
    %669 = vmatpush1.bf16.msra.mxu0 0
    %670 = vmatprep.subr.bf16.mxu0 0
    %671 = vmatpush1.bf16.msra.mxu0 0
    %672 = vmatprep.subr.bf16.mxu0 0
    %673 = vmatpush1.bf16.msra.mxu0 0
    %674 = vmatprep.subr.bf16.mxu0 0
    %675 = vmatpush1.bf16.msra.mxu0 0
    %676 = vmatprep.subr.bf16.mxu0 0
    %677 = vmatpush1.bf16.msra.mxu0 0
    %678 = vmatprep.subr.bf16.mxu0 0
    %679 = vmatpush1.bf16.msra.mxu0 0
    %680 = vmatprep.subr.bf16.mxu0 0
    %681 = vmatpush1.bf16.msra.mxu0 0
    %682 = vmatprep.subr.bf16.mxu0 0
    %683 = vmatpush1.bf16.msra.mxu0 0
    %684 = vmatprep.subr.bf16.mxu0 0
    %685 = vmatpush1.bf16.msra.mxu0 0
    %686 = vmatprep.subr.bf16.mxu0 0
    %687 = vmatpush1.bf16.msra.mxu0 0
    %688 = vmatprep.subr.bf16.mxu0 0
    %689 = vmatpush1.bf16.msra.mxu0 0
    %690 = vmatprep.subr.bf16.mxu0 0
    %691 = vmatpush1.bf16.msra.mxu0 0
    %692 = vmatprep.mubr.bf16.mxu0 0
    %693 = vmatmul.mubr.bf16.gmra.mrb[0].mxu0 %v658
    %v694 = vpop.f32.mrb[0].mxu0
    %v695 = vadd.f32 0.0, %v694
    %v696 = vpop.f32.mrb[0].mxu0
    %v697 = vpop.f32.mrb[0].mxu0
    %v698 = vpop.f32.mrb[0].mxu0
    %699 = vdwg.mxu0
    %v701 = vrot.slane %v695, 6
    %v703 = vadd.f32 %v184, %v701
    %v704 = vxor.u32 %v635, 2147483648
    %v705 = vmul.f32 %v704, 1.442695
    %v706 = vpow.pop %v705
    %v707 = vadd.f32 %v706, 1.0
    %v708 = vrcp.pop %v707
    %v709 = vmul.f32 1.0, %v708
    %v710 = vtanh.pop %v635
    %v712 = vrot.slane %v522, 6
    %v714 = vmul.f32 %v709, %v712
    %716 = vrot.lane.b32.xlu0 %v710, 64
    %v717 = vpop.permute.xlu0 %716
    %v719 = vmul.f32 %v709, %v717
    %721 = vrot.lane.b32.xlu0 %v719, 32
    %v722 = vpop.permute.xlu0 %721
    %v724 = vadd.f32 %v714, %v722
    %v725 = vtanh.pop %v724
    %727 = vrot.lane.b32.xlu0 %v725, 64
    %v728 = vpop.permute.xlu0 %727
    %v730 = vmul.f32 %v709, %v728
    %v731 = vxor.u32 %v703, 2147483648
    %v732 = vmul.f32 %v731, 1.442695
    %v733 = vpow.pop %v732
    %v734 = vadd.f32 %v733, 1.0
    %v735 = vrcp.pop %v734
    %v736 = vmul.f32 1.0, %v735
    %v737 = vtanh.pop %v703
    %v739 = vrot.slane %v549, 2
    %v741 = vmul.f32 %v736, %v739
    %743 = vrot.lane.b32.xlu0 %v737, 64
    %v744 = vpop.permute.xlu0 %743
    %v746 = vmul.f32 %v736, %v744
    %748 = vrot.lane.b32.xlu0 %v746, 32
    %v749 = vpop.permute.xlu0 %748
    %v751 = vadd.f32 %v741, %v749
    %v752 = vtanh.pop %v751
    %754 = vrot.lane.b32.xlu0 %v752, 64
    %v755 = vpop.permute.xlu0 %754
    %v757 = vmul.f32 %v736, %v755
    %759 = vrot.lane.b32.xlu0 %v730, 32
    %v760 = vpop.permute.xlu0 %759
    %762 = vst.msk [vmem:[#allocation2] sm:$0x30] %vm566, %v760
    %764 = vrot.lane.b32.xlu0 %v757, 32
    %v765 = vpop.permute.xlu0 %764
    %767 = vst.msk [vmem:[#allocation3 + $0x8] sm:$0xc] %vm560, %v765
    %v768 = vpack.c.bf16 %v730, %v730
    %v769 = vld [vmem:[#allocation7] sm:$0xf]
    %v770 = vld [vmem:[#allocation7 + $0x4] sm:$0xf]
    %v771 = vld [vmem:[#allocation7 + $0x8] sm:$0xf]
    %v772 = vld [vmem:[#allocation7 + $0xc] sm:$0xf]
    %v774 = vrot.slane %v768, 2
    %775 = vrot.lane.b32.xlu0 %v774, 32
    %v776 = vpop.permute.xlu0 %775
    %v781 = vunpack.c.l.b16 %v769
    %v782 = vunpack.c.l.b16 %v770
    %v783 = vunpack.c.l.b16 %v771
    %v784 = vunpack.c.l.b16 %v772
    %v785 = vpack.c.b16 %v782, %v781
    %v786 = vpack.c.b16 %v784, %v783
    %v790 = vsel %vm202, %v776, 0
    %792 = vmatprep.subr.bf16.mxu0 0
    %793 = vmatpush1.bf16.msra.mxu0 %v785
    %794 = vmatprep.subr.bf16.mxu0 0
    %795 = vmatpush1.bf16.msra.mxu0 %v786
    %796 = vmatprep.subr.bf16.mxu0 0
    %797 = vmatpush1.bf16.msra.mxu0 0
    %798 = vmatprep.subr.bf16.mxu0 0
    %799 = vmatpush1.bf16.msra.mxu0 0
    %800 = vmatprep.subr.bf16.mxu0 0
    %801 = vmatpush1.bf16.msra.mxu0 0
    %802 = vmatprep.subr.bf16.mxu0 0
    %803 = vmatpush1.bf16.msra.mxu0 0
    %804 = vmatprep.subr.bf16.mxu0 0
    %805 = vmatpush1.bf16.msra.mxu0 0
    %806 = vmatprep.subr.bf16.mxu0 0
    %807 = vmatpush1.bf16.msra.mxu0 0
    %808 = vmatprep.subr.bf16.mxu0 0
    %809 = vmatpush1.bf16.msra.mxu0 0
    %810 = vmatprep.subr.bf16.mxu0 0
    %811 = vmatpush1.bf16.msra.mxu0 0
    %812 = vmatprep.subr.bf16.mxu0 0
    %813 = vmatpush1.bf16.msra.mxu0 0
    %814 = vmatprep.subr.bf16.mxu0 0
    %815 = vmatpush1.bf16.msra.mxu0 0
    %816 = vmatprep.subr.bf16.mxu0 0
    %817 = vmatpush1.bf16.msra.mxu0 0
    %818 = vmatprep.subr.bf16.mxu0 0
    %819 = vmatpush1.bf16.msra.mxu0 0
    %820 = vmatprep.subr.bf16.mxu0 0
    %821 = vmatpush1.bf16.msra.mxu0 0
    %822 = vmatprep.subr.bf16.mxu0 0
    %823 = vmatpush1.bf16.msra.mxu0 0
    %824 = vmatprep.mubr.bf16.mxu0 0
    %825 = vmatmul.mubr.bf16.gmra.mrb[0].mxu0 %v790
    %v826 = vpop.f32.mrb[0].mxu0
    %v827 = vadd.f32 0.0, %v826
    %v828 = vpop.f32.mrb[0].mxu0
    %v829 = vpop.f32.mrb[0].mxu0
    %v830 = vpop.f32.mrb[0].mxu0
    %831 = vdwg.mxu0
    %v833 = vrot.slane %v827, 2
    %v835 = vadd.f32 %v178, %v833
    %v836 = vpack.c.bf16 %v757, %v757
    %v837 = vld [vmem:[#allocation9] sm:$0xf]
    %v838 = vld [vmem:[#allocation9 + $0x4] sm:$0xf]
    %v839 = vld [vmem:[#allocation9 + $0x8] sm:$0xf]
    %v840 = vld [vmem:[#allocation9 + $0xc] sm:$0xf]
    %v842 = vrot.slane %v836, 1
    %843 = vrot.lane.b32.xlu0 %v842, 32
    %v844 = vpop.permute.xlu0 %843
    %v849 = vunpack.c.l.b16 %v837
    %v850 = vunpack.c.l.b16 %v838
    %v851 = vunpack.c.l.b16 %v839
    %v852 = vunpack.c.l.b16 %v840
    %v853 = vpack.c.b16 %v850, %v849
    %v854 = vpack.c.b16 %v852, %v851
    %v858 = vsel %vm202, %v844, 0
    %860 = vmatprep.subr.bf16.mxu0 0
    %861 = vmatpush1.bf16.msra.mxu0 %v853
    %862 = vmatprep.subr.bf16.mxu0 0
    %863 = vmatpush1.bf16.msra.mxu0 %v854
    %864 = vmatprep.subr.bf16.mxu0 0
    %865 = vmatpush1.bf16.msra.mxu0 0
    %866 = vmatprep.subr.bf16.mxu0 0
    %867 = vmatpush1.bf16.msra.mxu0 0
    %868 = vmatprep.subr.bf16.mxu0 0
    %869 = vmatpush1.bf16.msra.mxu0 0
    %870 = vmatprep.subr.bf16.mxu0 0
    %871 = vmatpush1.bf16.msra.mxu0 0
    %872 = vmatprep.subr.bf16.mxu0 0
    %873 = vmatpush1.bf16.msra.mxu0 0
    %874 = vmatprep.subr.bf16.mxu0 0
    %875 = vmatpush1.bf16.msra.mxu0 0
    %876 = vmatprep.subr.bf16.mxu0 0
    %877 = vmatpush1.bf16.msra.mxu0 0
    %878 = vmatprep.subr.bf16.mxu0 0
    %879 = vmatpush1.bf16.msra.mxu0 0
    %880 = vmatprep.subr.bf16.mxu0 0
    %881 = vmatpush1.bf16.msra.mxu0 0
    %882 = vmatprep.subr.bf16.mxu0 0
    %883 = vmatpush1.bf16.msra.mxu0 0
    %884 = vmatprep.subr.bf16.mxu0 0
    %885 = vmatpush1.bf16.msra.mxu0 0
    %886 = vmatprep.subr.bf16.mxu0 0
    %887 = vmatpush1.bf16.msra.mxu0 0
    %888 = vmatprep.subr.bf16.mxu0 0
    %889 = vmatpush1.bf16.msra.mxu0 0
    %890 = vmatprep.subr.bf16.mxu0 0
    %891 = vmatpush1.bf16.msra.mxu0 0
    %892 = vmatprep.mubr.bf16.mxu0 0
    %893 = vmatmul.mubr.bf16.gmra.mrb[0].mxu0 %v858
    %v894 = vpop.f32.mrb[0].mxu0
    %v895 = vadd.f32 0.0, %v894
    %v896 = vpop.f32.mrb[0].mxu0
    %v897 = vpop.f32.mrb[0].mxu0
    %v898 = vpop.f32.mrb[0].mxu0
    %899 = vdwg.mxu0
    %v900 = vadd.f32 %v184, %v895
    %v901 = vxor.u32 %v835, 2147483648
    %v902 = vmul.f32 %v901, 1.442695
    %v903 = vpow.pop %v902
    %v904 = vadd.f32 %v903, 1.0
    %v905 = vrcp.pop %v904
    %v906 = vmul.f32 1.0, %v905
    %v907 = vtanh.pop %v835
    %v909 = vrot.slane %v724, 6
    %v911 = vmul.f32 %v906, %v909
    %913 = vrot.lane.b32.xlu0 %v907, 64
    %v914 = vpop.permute.xlu0 %913
    %v916 = vmul.f32 %v906, %v914
    %918 = vrot.lane.b32.xlu0 %v916, 32
    %v919 = vpop.permute.xlu0 %918
    %v921 = vadd.f32 %v911, %v919
    %v922 = vtanh.pop %v921
    %924 = vrot.lane.b32.xlu0 %v922, 64
    %v925 = vpop.permute.xlu0 %924
    %v927 = vmul.f32 %v906, %v925
    %v928 = vxor.u32 %v900, 2147483648
    %v929 = vmul.f32 %v928, 1.442695
    %v930 = vpow.pop %v929
    %v931 = vadd.f32 %v930, 1.0
    %v932 = vrcp.pop %v931
    %v933 = vmul.f32 1.0, %v932
    %v934 = vtanh.pop %v900
    %v936 = vrot.slane %v751, 2
    %v938 = vmul.f32 %v933, %v936
    %940 = vrot.lane.b32.xlu0 %v934, 64
    %v941 = vpop.permute.xlu0 %940
    %v943 = vmul.f32 %v933, %v941
    %945 = vrot.lane.b32.xlu0 %v943, 32
    %v946 = vpop.permute.xlu0 %945
    %v948 = vadd.f32 %v938, %v946
    %v949 = vtanh.pop %v948
    %951 = vrot.lane.b32.xlu0 %v949, 64
    %v952 = vpop.permute.xlu0 %951
    %v954 = vmul.f32 %v933, %v952
    %956 = vrot.lane.b32.xlu0 %v927, 32
    %v957 = vpop.permute.xlu0 %956
    %959 = vst.msk [vmem:[#allocation2] sm:$0xc0] %vm365, %v957
    %961 = vrot.lane.b32.xlu0 %v954, 32
    %v962 = vpop.permute.xlu0 %961
    %964 = vst.msk [vmem:[#allocation3 + $0x8] sm:$0x3] %vm359, %v962
    %v965 = vpack.c.bf16 %v927, %v927
    %v966 = vld [vmem:[#allocation7] sm:$0xf]
    %v967 = vld [vmem:[#allocation7 + $0x4] sm:$0xf]
    %v968 = vld [vmem:[#allocation7 + $0x8] sm:$0xf]
    %v969 = vld [vmem:[#allocation7 + $0xc] sm:$0xf]
    %v971 = vrot.slane %v965, 3
    %972 = vrot.lane.b32.xlu0 %v971, 32
    %v973 = vpop.permute.xlu0 %972
    %v978 = vunpack.c.l.b16 %v966
    %v979 = vunpack.c.l.b16 %v967
    %v980 = vunpack.c.l.b16 %v968
    %v981 = vunpack.c.l.b16 %v969
    %v982 = vpack.c.b16 %v979, %v978
    %v983 = vpack.c.b16 %v981, %v980
    %v987 = vsel %vm202, %v973, 0
    %989 = vmatprep.subr.bf16.mxu0 0
    %990 = vmatpush1.bf16.msra.mxu0 %v982
    %991 = vmatprep.subr.bf16.mxu0 0
    %992 = vmatpush1.bf16.msra.mxu0 %v983
    %993 = vmatprep.subr.bf16.mxu0 0
    %994 = vmatpush1.bf16.msra.mxu0 0
    %995 = vmatprep.subr.bf16.mxu0 0
    %996 = vmatpush1.bf16.msra.mxu0 0
    %997 = vmatprep.subr.bf16.mxu0 0
    %998 = vmatpush1.bf16.msra.mxu0 0
    %999 = vmatprep.subr.bf16.mxu0 0
    %1000 = vmatpush1.bf16.msra.mxu0 0
    %1001 = vmatprep.subr.bf16.mxu0 0
    %1002 = vmatpush1.bf16.msra.mxu0 0
    %1003 = vmatprep.subr.bf16.mxu0 0
    %1004 = vmatpush1.bf16.msra.mxu0 0
    %1005 = vmatprep.subr.bf16.mxu0 0
    %1006 = vmatpush1.bf16.msra.mxu0 0
    %1007 = vmatprep.subr.bf16.mxu0 0
    %1008 = vmatpush1.bf16.msra.mxu0 0
    %1009 = vmatprep.subr.bf16.mxu0 0
    %1010 = vmatpush1.bf16.msra.mxu0 0
    %1011 = vmatprep.subr.bf16.mxu0 0
    %1012 = vmatpush1.bf16.msra.mxu0 0
    %1013 = vmatprep.subr.bf16.mxu0 0
    %1014 = vmatpush1.bf16.msra.mxu0 0
    %1015 = vmatprep.subr.bf16.mxu0 0
    %1016 = vmatpush1.bf16.msra.mxu0 0
    %1017 = vmatprep.subr.bf16.mxu0 0
    %1018 = vmatpush1.bf16.msra.mxu0 0
    %1019 = vmatprep.subr.bf16.mxu0 0
    %1020 = vmatpush1.bf16.msra.mxu0 0
    %1021 = vmatprep.mubr.bf16.mxu0 0
    %1022 = vmatmul.mubr.bf16.gmra.mrb[0].mxu0 %v987
    %v1023 = vpop.f32.mrb[0].mxu0
    %v1024 = vadd.f32 0.0, %v1023
    %v1025 = vpop.f32.mrb[0].mxu0
    %v1026 = vpop.f32.mrb[0].mxu0
    %v1027 = vpop.f32.mrb[0].mxu0
    %1028 = vdwg.mxu0
    %v1029 = vadd.f32 %v182, %v1024
    %v1030 = vpack.c.bf16 %v954, %v954
    %v1031 = vld [vmem:[#allocation9] sm:$0xf]
    %v1032 = vld [vmem:[#allocation9 + $0x4] sm:$0xf]
    %v1033 = vld [vmem:[#allocation9 + $0x8] sm:$0xf]
    %v1034 = vld [vmem:[#allocation9 + $0xc] sm:$0xf]
    %1036 = vrot.lane.b32.xlu0 %v1030, 32
    %v1037 = vpop.permute.xlu0 %1036
    %v1042 = vunpack.c.l.b16 %v1031
    %v1043 = vunpack.c.l.b16 %v1032
    %v1044 = vunpack.c.l.b16 %v1033
    %v1045 = vunpack.c.l.b16 %v1034
    %v1046 = vpack.c.b16 %v1043, %v1042
    %v1047 = vpack.c.b16 %v1045, %v1044
    %v1051 = vsel %vm202, %v1037, 0
    %1053 = vmatprep.subr.bf16.mxu0 0
    %1054 = vmatpush1.bf16.msra.mxu0 %v1046
    %1055 = vmatprep.subr.bf16.mxu0 0
    %1056 = vmatpush1.bf16.msra.mxu0 %v1047
    %1057 = vmatprep.subr.bf16.mxu0 0
    %1058 = vmatpush1.bf16.msra.mxu0 0
    %1059 = vmatprep.subr.bf16.mxu0 0
    %1060 = vmatpush1.bf16.msra.mxu0 0
    %1061 = vmatprep.subr.bf16.mxu0 0
    %1062 = vmatpush1.bf16.msra.mxu0 0
    %1063 = vmatprep.subr.bf16.mxu0 0
    %1064 = vmatpush1.bf16.msra.mxu0 0
    %1065 = vmatprep.subr.bf16.mxu0 0
    %1066 = vmatpush1.bf16.msra.mxu0 0
    %1067 = vmatprep.subr.bf16.mxu0 0
    %1068 = vmatpush1.bf16.msra.mxu0 0
    %1069 = vmatprep.subr.bf16.mxu0 0
    %1070 = vmatpush1.bf16.msra.mxu0 0
    %1071 = vmatprep.subr.bf16.mxu0 0
    %1072 = vmatpush1.bf16.msra.mxu0 0
    %1073 = vmatprep.subr.bf16.mxu0 0
    %1074 = vmatpush1.bf16.msra.mxu0 0
    %1075 = vmatprep.subr.bf16.mxu0 0
    %1076 = vmatpush1.bf16.msra.mxu0 0
    %1077 = vmatprep.subr.bf16.mxu0 0
    %1078 = vmatpush1.bf16.msra.mxu0 0
    %1079 = vmatprep.subr.bf16.mxu0 0
    %1080 = vmatpush1.bf16.msra.mxu0 0
    %1081 = vmatprep.subr.bf16.mxu0 0
    %1082 = vmatpush1.bf16.msra.mxu0 0
    %1083 = vmatprep.subr.bf16.mxu0 0
    %1084 = vmatpush1.bf16.msra.mxu0 0
    %1085 = vmatprep.mubr.bf16.mxu0 0
    %1086 = vmatmul.mubr.bf16.gmra.mrb[0].mxu0 %v1051
    %v1087 = vpop.f32.mrb[0].mxu0
    %v1088 = vadd.f32 0.0, %v1087
    %v1089 = vpop.f32.mrb[0].mxu0
    %v1090 = vpop.f32.mrb[0].mxu0
    %v1091 = vpop.f32.mrb[0].mxu0
    %1092 = vdwg.mxu0
    %v1094 = vrot.slane %v1088, 2
    %v1096 = vadd.f32 %v180, %v1094
    %v1097 = vxor.u32 %v1029, 2147483648
    %v1098 = vmul.f32 %v1097, 1.442695
    %v1099 = vpow.pop %v1098
    %v1100 = vadd.f32 %v1099, 1.0
    %v1101 = vrcp.pop %v1100
    %v1102 = vmul.f32 1.0, %v1101
    %v1103 = vtanh.pop %v1029
    %v1105 = vrot.slane %v921, 6
    %v1107 = vmul.f32 %v1102, %v1105
    %1109 = vrot.lane.b32.xlu0 %v1103, 64
    %v1110 = vpop.permute.xlu0 %1109
    %v1112 = vmul.f32 %v1102, %v1110
    %1114 = vrot.lane.b32.xlu0 %v1112, 32
    %v1115 = vpop.permute.xlu0 %1114
    %v1117 = vadd.f32 %v1107, %v1115
    %v1118 = vtanh.pop %v1117
    %1120 = vrot.lane.b32.xlu0 %v1118, 64
    %v1121 = vpop.permute.xlu0 %1120
    %v1123 = vmul.f32 %v1102, %v1121
    %v1124 = vxor.u32 %v1096, 2147483648
    %v1125 = vmul.f32 %v1124, 1.442695
    %v1126 = vpow.pop %v1125
    %v1127 = vadd.f32 %v1126, 1.0
    %v1128 = vrcp.pop %v1127
    %v1129 = vmul.f32 1.0, %v1128
    %v1130 = vtanh.pop %v1096
    %v1132 = vrot.slane %v948, 2
    %v1134 = vmul.f32 %v1129, %v1132
    %1136 = vrot.lane.b32.xlu0 %v1130, 64
    %v1137 = vpop.permute.xlu0 %1136
    %v1139 = vmul.f32 %v1129, %v1137
    %1141 = vrot.lane.b32.xlu0 %v1139, 32
    %v1142 = vpop.permute.xlu0 %1141
    %v1144 = vadd.f32 %v1134, %v1142
    %v1145 = vtanh.pop %v1144
    %1147 = vrot.lane.b32.xlu0 %v1145, 64
    %v1148 = vpop.permute.xlu0 %1147
    %v1150 = vmul.f32 %v1129, %v1148
    %1152 = vrot.lane.b32.xlu0 %v1123, 32
    %v1153 = vpop.permute.xlu0 %1152
    %1155 = vst.msk [vmem:[#allocation2 + $0x8] sm:$0x3] %vm359, %v1153
    %1157 = vrot.lane.b32.xlu0 %v1150, 32
    %v1158 = vpop.permute.xlu0 %1157
    %1160 = vst.msk [vmem:[#allocation3] sm:$0xc0] %vm365, %v1158
    %v1161 = vpack.c.bf16 %v1123, %v1123
    %v1162 = vld [vmem:[#allocation7] sm:$0xf]
    %v1163 = vld [vmem:[#allocation7 + $0x4] sm:$0xf]
    %v1164 = vld [vmem:[#allocation7 + $0x8] sm:$0xf]
    %v1165 = vld [vmem:[#allocation7 + $0xc] sm:$0xf]
    %1167 = vrot.lane.b32.xlu0 %v1161, 32
    %v1168 = vpop.permute.xlu0 %1167
    %v1173 = vunpack.c.l.b16 %v1162
    %v1174 = vunpack.c.l.b16 %v1163
    %v1175 = vunpack.c.l.b16 %v1164
    %v1176 = vunpack.c.l.b16 %v1165
    %v1177 = vpack.c.b16 %v1174, %v1173
    %v1178 = vpack.c.b16 %v1176, %v1175
    %v1182 = vsel %vm202, %v1168, 0
    %1184 = vmatprep.subr.bf16.mxu0 0
    %1185 = vmatpush1.bf16.msra.mxu0 %v1177
    %1186 = vmatprep.subr.bf16.mxu0 0
    %1187 = vmatpush1.bf16.msra.mxu0 %v1178
    %1188 = vmatprep.subr.bf16.mxu0 0
    %1189 = vmatpush1.bf16.msra.mxu0 0
    %1190 = vmatprep.subr.bf16.mxu0 0
    %1191 = vmatpush1.bf16.msra.mxu0 0
    %1192 = vmatprep.subr.bf16.mxu0 0
    %1193 = vmatpush1.bf16.msra.mxu0 0
    %1194 = vmatprep.subr.bf16.mxu0 0
    %1195 = vmatpush1.bf16.msra.mxu0 0
    %1196 = vmatprep.subr.bf16.mxu0 0
    %1197 = vmatpush1.bf16.msra.mxu0 0
    %1198 = vmatprep.subr.bf16.mxu0 0
    %1199 = vmatpush1.bf16.msra.mxu0 0
    %1200 = vmatprep.subr.bf16.mxu0 0
    %1201 = vmatpush1.bf16.msra.mxu0 0
    %1202 = vmatprep.subr.bf16.mxu0 0
    %1203 = vmatpush1.bf16.msra.mxu0 0
    %1204 = vmatprep.subr.bf16.mxu0 0
    %1205 = vmatpush1.bf16.msra.mxu0 0
    %1206 = vmatprep.subr.bf16.mxu0 0
    %1207 = vmatpush1.bf16.msra.mxu0 0
    %1208 = vmatprep.subr.bf16.mxu0 0
    %1209 = vmatpush1.bf16.msra.mxu0 0
    %1210 = vmatprep.subr.bf16.mxu0 0
    %1211 = vmatpush1.bf16.msra.mxu0 0
    %1212 = vmatprep.subr.bf16.mxu0 0
    %1213 = vmatpush1.bf16.msra.mxu0 0
    %1214 = vmatprep.subr.bf16.mxu0 0
    %1215 = vmatpush1.bf16.msra.mxu0 0
    %1216 = vmatprep.mubr.bf16.mxu0 0
    %1217 = vmatmul.mubr.bf16.gmra.mrb[0].mxu0 %v1182
    %v1218 = vpop.f32.mrb[0].mxu0
    %v1219 = vadd.f32 0.0, %v1218
    %v1220 = vpop.f32.mrb[0].mxu0
    %v1221 = vpop.f32.mrb[0].mxu0
    %v1222 = vpop.f32.mrb[0].mxu0
    %1223 = vdwg.mxu0
    %v1225 = vrot.slane %v1219, 6
    %v1227 = vadd.f32 %v182, %v1225
    %v1228 = vpack.c.bf16 %v1150, %v1150
    %v1229 = vld [vmem:[#allocation9] sm:$0xf]
    %v1230 = vld [vmem:[#allocation9 + $0x4] sm:$0xf]
    %v1231 = vld [vmem:[#allocation9 + $0x8] sm:$0xf]
    %v1232 = vld [vmem:[#allocation9 + $0xc] sm:$0xf]
    %v1234 = vrot.slane %v1228, 3
    %1235 = vrot.lane.b32.xlu0 %v1234, 32
    %v1236 = vpop.permute.xlu0 %1235
    %v1241 = vunpack.c.l.b16 %v1229
    %v1242 = vunpack.c.l.b16 %v1230
    %v1243 = vunpack.c.l.b16 %v1231
    %v1244 = vunpack.c.l.b16 %v1232
    %v1245 = vpack.c.b16 %v1242, %v1241
    %v1246 = vpack.c.b16 %v1244, %v1243
    %v1250 = vsel %vm202, %v1236, 0
    %1252 = vmatprep.subr.bf16.mxu0 0
    %1253 = vmatpush1.bf16.msra.mxu0 %v1245
    %1254 = vmatprep.subr.bf16.mxu0 0
    %1255 = vmatpush1.bf16.msra.mxu0 %v1246
    %1256 = vmatprep.subr.bf16.mxu0 0
    %1257 = vmatpush1.bf16.msra.mxu0 0
    %1258 = vmatprep.subr.bf16.mxu0 0
    %1259 = vmatpush1.bf16.msra.mxu0 0
    %1260 = vmatprep.subr.bf16.mxu0 0
    %1261 = vmatpush1.bf16.msra.mxu0 0
    %1262 = vmatprep.subr.bf16.mxu0 0
    %1263 = vmatpush1.bf16.msra.mxu0 0
    %1264 = vmatprep.subr.bf16.mxu0 0
    %1265 = vmatpush1.bf16.msra.mxu0 0
    %1266 = vmatprep.subr.bf16.mxu0 0
    %1267 = vmatpush1.bf16.msra.mxu0 0
    %1268 = vmatprep.subr.bf16.mxu0 0
    %1269 = vmatpush1.bf16.msra.mxu0 0
    %1270 = vmatprep.subr.bf16.mxu0 0
    %1271 = vmatpush1.bf16.msra.mxu0 0
    %1272 = vmatprep.subr.bf16.mxu0 0
    %1273 = vmatpush1.bf16.msra.mxu0 0
    %1274 = vmatprep.subr.bf16.mxu0 0
    %1275 = vmatpush1.bf16.msra.mxu0 0
    %1276 = vmatprep.subr.bf16.mxu0 0
    %1277 = vmatpush1.bf16.msra.mxu0 0
    %1278 = vmatprep.subr.bf16.mxu0 0
    %1279 = vmatpush1.bf16.msra.mxu0 0
    %1280 = vmatprep.subr.bf16.mxu0 0
    %1281 = vmatpush1.bf16.msra.mxu0 0
    %1282 = vmatprep.subr.bf16.mxu0 0
    %1283 = vmatpush1.bf16.msra.mxu0 0
    %1284 = vmatprep.mubr.bf16.mxu0 0
    %1285 = vmatmul.mubr.bf16.gmra.mrb[0].mxu0 %v1250
    %v1286 = vpop.f32.mrb[0].mxu0
    %v1287 = vadd.f32 0.0, %v1286
    %v1288 = vpop.f32.mrb[0].mxu0
    %v1289 = vpop.f32.mrb[0].mxu0
    %v1290 = vpop.f32.mrb[0].mxu0
    %1291 = vdwg.mxu0
    %v1293 = vrot.slane %v1287, 4
    %v1295 = vadd.f32 %v180, %v1293
    %v1296 = vxor.u32 %v1227, 2147483648
    %v1297 = vmul.f32 %v1296, 1.442695
    %v1298 = vpow.pop %v1297
    %v1299 = vadd.f32 %v1298, 1.0
    %v1300 = vrcp.pop %v1299
    %v1301 = vmul.f32 1.0, %v1300
    %v1302 = vtanh.pop %v1227
    %v1304 = vrot.slane %v1117, 6
    %v1306 = vmul.f32 %v1301, %v1304
    %1308 = vrot.lane.b32.xlu0 %v1302, 64
    %v1309 = vpop.permute.xlu0 %1308
    %v1311 = vmul.f32 %v1301, %v1309
    %1313 = vrot.lane.b32.xlu0 %v1311, 32
    %v1314 = vpop.permute.xlu0 %1313
    %v1316 = vadd.f32 %v1306, %v1314
    %v1317 = vtanh.pop %v1316
    %1319 = vrot.lane.b32.xlu0 %v1317, 64
    %v1320 = vpop.permute.xlu0 %1319
    %v1322 = vmul.f32 %v1301, %v1320
    %v1323 = vxor.u32 %v1295, 2147483648
    %v1324 = vmul.f32 %v1323, 1.442695
    %v1325 = vpow.pop %v1324
    %v1326 = vadd.f32 %v1325, 1.0
    %v1327 = vrcp.pop %v1326
    %v1328 = vmul.f32 1.0, %v1327
    %v1329 = vtanh.pop %v1295
    %v1331 = vrot.slane %v1144, 2
    %v1333 = vmul.f32 %v1328, %v1331
    %1335 = vrot.lane.b32.xlu0 %v1329, 64
    %v1336 = vpop.permute.xlu0 %1335
    %v1338 = vmul.f32 %v1328, %v1336
    %1340 = vrot.lane.b32.xlu0 %v1338, 32
    %v1341 = vpop.permute.xlu0 %1340
    %v1343 = vadd.f32 %v1333, %v1341
    %v1344 = vtanh.pop %v1343
    %1346 = vrot.lane.b32.xlu0 %v1344, 64
    %v1347 = vpop.permute.xlu0 %1346
    %v1349 = vmul.f32 %v1328, %v1347
    %1351 = vrot.lane.b32.xlu0 %v1322, 32
    %v1352 = vpop.permute.xlu0 %1351
    %1354 = vst.msk [vmem:[#allocation2 + $0x8] sm:$0xc] %vm560, %v1352
    %1356 = vrot.lane.b32.xlu0 %v1349, 32
    %v1357 = vpop.permute.xlu0 %1356
    %1359 = vst.msk [vmem:[#allocation3] sm:$0x30] %vm566, %v1357
    %v1360 = vpack.c.bf16 %v1322, %v1322
    %v1361 = vld [vmem:[#allocation7] sm:$0xf]
    %v1362 = vld [vmem:[#allocation7 + $0x4] sm:$0xf]
    %v1363 = vld [vmem:[#allocation7 + $0x8] sm:$0xf]
    %v1364 = vld [vmem:[#allocation7 + $0xc] sm:$0xf]
    %v1366 = vrot.slane %v1360, 1
    %1367 = vrot.lane.b32.xlu0 %v1366, 32
    %v1368 = vpop.permute.xlu0 %1367
    %v1373 = vunpack.c.l.b16 %v1361
    %v1374 = vunpack.c.l.b16 %v1362
    %v1375 = vunpack.c.l.b16 %v1363
    %v1376 = vunpack.c.l.b16 %v1364
    %v1377 = vpack.c.b16 %v1374, %v1373
    %v1378 = vpack.c.b16 %v1376, %v1375
    %v1382 = vsel %vm202, %v1368, 0
    %1384 = vmatprep.subr.bf16.mxu0 0
    %1385 = vmatpush1.bf16.msra.mxu0 %v1377
    %1386 = vmatprep.subr.bf16.mxu0 0
    %1387 = vmatpush1.bf16.msra.mxu0 %v1378
    %1388 = vmatprep.subr.bf16.mxu0 0
    %1389 = vmatpush1.bf16.msra.mxu0 0
    %1390 = vmatprep.subr.bf16.mxu0 0
    %1391 = vmatpush1.bf16.msra.mxu0 0
    %1392 = vmatprep.subr.bf16.mxu0 0
    %1393 = vmatpush1.bf16.msra.mxu0 0
    %1394 = vmatprep.subr.bf16.mxu0 0
    %1395 = vmatpush1.bf16.msra.mxu0 0
    %1396 = vmatprep.subr.bf16.mxu0 0
    %1397 = vmatpush1.bf16.msra.mxu0 0
    %1398 = vmatprep.subr.bf16.mxu0 0
    %1399 = vmatpush1.bf16.msra.mxu0 0
    %1400 = vmatprep.subr.bf16.mxu0 0
    %1401 = vmatpush1.bf16.msra.mxu0 0
    %1402 = vmatprep.subr.bf16.mxu0 0
    %1403 = vmatpush1.bf16.msra.mxu0 0
    %1404 = vmatprep.subr.bf16.mxu0 0
    %1405 = vmatpush1.bf16.msra.mxu0 0
    %1406 = vmatprep.subr.bf16.mxu0 0
    %1407 = vmatpush1.bf16.msra.mxu0 0
    %1408 = vmatprep.subr.bf16.mxu0 0
    %1409 = vmatpush1.bf16.msra.mxu0 0
    %1410 = vmatprep.subr.bf16.mxu0 0
    %1411 = vmatpush1.bf16.msra.mxu0 0
    %1412 = vmatprep.subr.bf16.mxu0 0
    %1413 = vmatpush1.bf16.msra.mxu0 0
    %1414 = vmatprep.subr.bf16.mxu0 0
    %1415 = vmatpush1.bf16.msra.mxu0 0
    %1416 = vmatprep.mubr.bf16.mxu0 0
    %1417 = vmatmul.mubr.bf16.gmra.mrb[0].mxu0 %v1382
    %v1418 = vpop.f32.mrb[0].mxu0
    %v1419 = vadd.f32 0.0, %v1418
    %v1420 = vpop.f32.mrb[0].mxu0
    %v1421 = vpop.f32.mrb[0].mxu0
    %v1422 = vpop.f32.mrb[0].mxu0
    %1423 = vdwg.mxu0
    %v1425 = vrot.slane %v1419, 4
    %v1427 = vadd.f32 %v182, %v1425
    %v1428 = vpack.c.bf16 %v1349, %v1349
    %v1429 = vld [vmem:[#allocation9] sm:$0xf]
    %v1430 = vld [vmem:[#allocation9 + $0x4] sm:$0xf]
    %v1431 = vld [vmem:[#allocation9 + $0x8] sm:$0xf]
    %v1432 = vld [vmem:[#allocation9 + $0xc] sm:$0xf]
    %v1434 = vrot.slane %v1428, 2
    %1435 = vrot.lane.b32.xlu0 %v1434, 32
    %v1436 = vpop.permute.xlu0 %1435
    %v1441 = vunpack.c.l.b16 %v1429
    %v1442 = vunpack.c.l.b16 %v1430
    %v1443 = vunpack.c.l.b16 %v1431
    %v1444 = vunpack.c.l.b16 %v1432
    %v1445 = vpack.c.b16 %v1442, %v1441
    %v1446 = vpack.c.b16 %v1444, %v1443
    %v1450 = vsel %vm202, %v1436, 0
    %1452 = vmatprep.subr.bf16.mxu0 0
    %1453 = vmatpush1.bf16.msra.mxu0 %v1445
    %1454 = vmatprep.subr.bf16.mxu0 0
    %1455 = vmatpush1.bf16.msra.mxu0 %v1446
    %1456 = vmatprep.subr.bf16.mxu0 0
    %1457 = vmatpush1.bf16.msra.mxu0 0
    %1458 = vmatprep.subr.bf16.mxu0 0
    %1459 = vmatpush1.bf16.msra.mxu0 0
    %1460 = vmatprep.subr.bf16.mxu0 0
    %1461 = vmatpush1.bf16.msra.mxu0 0
    %1462 = vmatprep.subr.bf16.mxu0 0
    %1463 = vmatpush1.bf16.msra.mxu0 0
    %1464 = vmatprep.subr.bf16.mxu0 0
    %1465 = vmatpush1.bf16.msra.mxu0 0
    %1466 = vmatprep.subr.bf16.mxu0 0
    %1467 = vmatpush1.bf16.msra.mxu0 0
    %1468 = vmatprep.subr.bf16.mxu0 0
    %1469 = vmatpush1.bf16.msra.mxu0 0
    %1470 = vmatprep.subr.bf16.mxu0 0
    %1471 = vmatpush1.bf16.msra.mxu0 0
    %1472 = vmatprep.subr.bf16.mxu0 0
    %1473 = vmatpush1.bf16.msra.mxu0 0
    %1474 = vmatprep.subr.bf16.mxu0 0
    %1475 = vmatpush1.bf16.msra.mxu0 0
    %1476 = vmatprep.subr.bf16.mxu0 0
    %1477 = vmatpush1.bf16.msra.mxu0 0
    %1478 = vmatprep.subr.bf16.mxu0 0
    %1479 = vmatpush1.bf16.msra.mxu0 0
    %1480 = vmatprep.subr.bf16.mxu0 0
    %1481 = vmatpush1.bf16.msra.mxu0 0
    %1482 = vmatprep.subr.bf16.mxu0 0
    %1483 = vmatpush1.bf16.msra.mxu0 0
    %1484 = vmatprep.mubr.bf16.mxu0 0
    %1485 = vmatmul.mubr.bf16.gmra.mrb[0].mxu0 %v1450
    %v1486 = vpop.f32.mrb[0].mxu0
    %v1487 = vadd.f32 0.0, %v1486
    %v1488 = vpop.f32.mrb[0].mxu0
    %v1489 = vpop.f32.mrb[0].mxu0
    %v1490 = vpop.f32.mrb[0].mxu0
    %1491 = vdwg.mxu0
    %v1493 = vrot.slane %v1487, 6
    %v1495 = vadd.f32 %v180, %v1493
    %v1496 = vxor.u32 %v1427, 2147483648
    %v1497 = vmul.f32 %v1496, 1.442695
    %v1498 = vpow.pop %v1497
    %v1499 = vadd.f32 %v1498, 1.0
    %v1500 = vrcp.pop %v1499
    %v1501 = vmul.f32 1.0, %v1500
    %v1502 = vtanh.pop %v1427
    %v1504 = vrot.slane %v1316, 6
    %v1506 = vmul.f32 %v1501, %v1504
    %1508 = vrot.lane.b32.xlu0 %v1502, 64
    %v1509 = vpop.permute.xlu0 %1508
    %v1511 = vmul.f32 %v1501, %v1509
    %1513 = vrot.lane.b32.xlu0 %v1511, 32
    %v1514 = vpop.permute.xlu0 %1513
    %v1516 = vadd.f32 %v1506, %v1514
    %v1517 = vtanh.pop %v1516
    %1519 = vrot.lane.b32.xlu0 %v1517, 64
    %v1520 = vpop.permute.xlu0 %1519
    %v1522 = vmul.f32 %v1501, %v1520
    %v1523 = vxor.u32 %v1495, 2147483648
    %v1524 = vmul.f32 %v1523, 1.442695
    %v1525 = vpow.pop %v1524
    %v1526 = vadd.f32 %v1525, 1.0
    %v1527 = vrcp.pop %v1526
    %v1528 = vmul.f32 1.0, %v1527
    %v1529 = vtanh.pop %v1495
    %v1531 = vrot.slane %v1343, 2
    %v1533 = vmul.f32 %v1528, %v1531
    %1535 = vrot.lane.b32.xlu0 %v1529, 64
    %v1536 = vpop.permute.xlu0 %1535
    %v1538 = vmul.f32 %v1528, %v1536
    %1540 = vrot.lane.b32.xlu0 %v1538, 32
    %v1541 = vpop.permute.xlu0 %1540
    %v1543 = vadd.f32 %v1533, %v1541
    %v1544 = vtanh.pop %v1543
    %1546 = vrot.lane.b32.xlu0 %v1544, 64
    %v1547 = vpop.permute.xlu0 %1546
    %v1549 = vmul.f32 %v1528, %v1547
    %1551 = vrot.lane.b32.xlu0 %v1522, 32
    %v1552 = vpop.permute.xlu0 %1551
    %1554 = vst.msk [vmem:[#allocation2 + $0x8] sm:$0x30] %vm566, %v1552
    %1556 = vrot.lane.b32.xlu0 %v1549, 32
    %v1557 = vpop.permute.xlu0 %1556
    %1559 = vst.msk [vmem:[#allocation3] sm:$0xc] %vm560, %v1557
    %v1560 = vpack.c.bf16 %v1522, %v1522
    %v1561 = vld [vmem:[#allocation7] sm:$0xf]
    %v1562 = vld [vmem:[#allocation7 + $0x4] sm:$0xf]
    %v1563 = vld [vmem:[#allocation7 + $0x8] sm:$0xf]
    %v1564 = vld [vmem:[#allocation7 + $0xc] sm:$0xf]
    %v1566 = vrot.slane %v1560, 2
    %1567 = vrot.lane.b32.xlu0 %v1566, 32
    %v1568 = vpop.permute.xlu0 %1567
    %v1573 = vunpack.c.l.b16 %v1561
    %v1574 = vunpack.c.l.b16 %v1562
    %v1575 = vunpack.c.l.b16 %v1563
    %v1576 = vunpack.c.l.b16 %v1564
    %v1577 = vpack.c.b16 %v1574, %v1573
    %v1578 = vpack.c.b16 %v1576, %v1575
    %v1582 = vsel %vm202, %v1568, 0
    %1584 = vmatprep.subr.bf16.mxu0 0
    %1585 = vmatpush1.bf16.msra.mxu0 %v1577
    %1586 = vmatprep.subr.bf16.mxu0 0
    %1587 = vmatpush1.bf16.msra.mxu0 %v1578
    %1588 = vmatprep.subr.bf16.mxu0 0
    %1589 = vmatpush1.bf16.msra.mxu0 0
    %1590 = vmatprep.subr.bf16.mxu0 0
    %1591 = vmatpush1.bf16.msra.mxu0 0
    %1592 = vmatprep.subr.bf16.mxu0 0
    %1593 = vmatpush1.bf16.msra.mxu0 0
    %1594 = vmatprep.subr.bf16.mxu0 0
    %1595 = vmatpush1.bf16.msra.mxu0 0
    %1596 = vmatprep.subr.bf16.mxu0 0
    %1597 = vmatpush1.bf16.msra.mxu0 0
    %1598 = vmatprep.subr.bf16.mxu0 0
    %1599 = vmatpush1.bf16.msra.mxu0 0
    %1600 = vmatprep.subr.bf16.mxu0 0
    %1601 = vmatpush1.bf16.msra.mxu0 0
    %1602 = vmatprep.subr.bf16.mxu0 0
    %1603 = vmatpush1.bf16.msra.mxu0 0
    %1604 = vmatprep.subr.bf16.mxu0 0
    %1605 = vmatpush1.bf16.msra.mxu0 0
    %1606 = vmatprep.subr.bf16.mxu0 0
    %1607 = vmatpush1.bf16.msra.mxu0 0
    %1608 = vmatprep.subr.bf16.mxu0 0
    %1609 = vmatpush1.bf16.msra.mxu0 0
    %1610 = vmatprep.subr.bf16.mxu0 0
    %1611 = vmatpush1.bf16.msra.mxu0 0
    %1612 = vmatprep.subr.bf16.mxu0 0
    %1613 = vmatpush1.bf16.msra.mxu0 0
    %1614 = vmatprep.subr.bf16.mxu0 0
    %1615 = vmatpush1.bf16.msra.mxu0 0
    %1616 = vmatprep.mubr.bf16.mxu0 0
    %1617 = vmatmul.mubr.bf16.gmra.mrb[0].mxu0 %v1582
    %v1618 = vpop.f32.mrb[0].mxu0
    %v1619 = vadd.f32 0.0, %v1618
    %v1620 = vpop.f32.mrb[0].mxu0
    %v1621 = vpop.f32.mrb[0].mxu0
    %v1622 = vpop.f32.mrb[0].mxu0
    %1623 = vdwg.mxu0
    %v1625 = vrot.slane %v1619, 2
    %v1627 = vadd.f32 %v182, %v1625
    %v1628 = vpack.c.bf16 %v1549, %v1549
    %v1629 = vld [vmem:[#allocation9] sm:$0xf]
    %v1630 = vld [vmem:[#allocation9 + $0x4] sm:$0xf]
    %v1631 = vld [vmem:[#allocation9 + $0x8] sm:$0xf]
    %v1632 = vld [vmem:[#allocation9 + $0xc] sm:$0xf]
    %v1634 = vrot.slane %v1628, 1
    %1635 = vrot.lane.b32.xlu0 %v1634, 32
    %v1636 = vpop.permute.xlu0 %1635
    %v1641 = vunpack.c.l.b16 %v1629
    %v1642 = vunpack.c.l.b16 %v1630
    %v1643 = vunpack.c.l.b16 %v1631
    %v1644 = vunpack.c.l.b16 %v1632
    %v1645 = vpack.c.b16 %v1642, %v1641
    %v1646 = vpack.c.b16 %v1644, %v1643
    %v1650 = vsel %vm202, %v1636, 0
    %1652 = vmatprep.subr.bf16.mxu0 0
    %1653 = vmatpush1.bf16.msra.mxu0 %v1645
    %1654 = vmatprep.subr.bf16.mxu0 0
    %1655 = vmatpush1.bf16.msra.mxu0 %v1646
    %1656 = vmatprep.subr.bf16.mxu0 0
    %1657 = vmatpush1.bf16.msra.mxu0 0
    %1658 = vmatprep.subr.bf16.mxu0 0
    %1659 = vmatpush1.bf16.msra.mxu0 0
    %1660 = vmatprep.subr.bf16.mxu0 0
    %1661 = vmatpush1.bf16.msra.mxu0 0
    %1662 = vmatprep.subr.bf16.mxu0 0
    %1663 = vmatpush1.bf16.msra.mxu0 0
    %1664 = vmatprep.subr.bf16.mxu0 0
    %1665 = vmatpush1.bf16.msra.mxu0 0
    %1666 = vmatprep.subr.bf16.mxu0 0
    %1667 = vmatpush1.bf16.msra.mxu0 0
    %1668 = vmatprep.subr.bf16.mxu0 0
    %1669 = vmatpush1.bf16.msra.mxu0 0
    %1670 = vmatprep.subr.bf16.mxu0 0
    %1671 = vmatpush1.bf16.msra.mxu0 0
    %1672 = vmatprep.subr.bf16.mxu0 0
    %1673 = vmatpush1.bf16.msra.mxu0 0
    %1674 = vmatprep.subr.bf16.mxu0 0
    %1675 = vmatpush1.bf16.msra.mxu0 0
    %1676 = vmatprep.subr.bf16.mxu0 0
    %1677 = vmatpush1.bf16.msra.mxu0 0
    %1678 = vmatprep.subr.bf16.mxu0 0
    %1679 = vmatpush1.bf16.msra.mxu0 0
    %1680 = vmatprep.subr.bf16.mxu0 0
    %1681 = vmatpush1.bf16.msra.mxu0 0
    %1682 = vmatprep.subr.bf16.mxu0 0
    %1683 = vmatpush1.bf16.msra.mxu0 0
    %1684 = vmatprep.mubr.bf16.mxu0 0
    %1685 = vmatmul.mubr.bf16.gmra.mrb[0].mxu0 %v1650
    %v1686 = vpop.f32.mrb[0].mxu0
    %v1687 = vadd.f32 0.0, %v1686
    %v1688 = vpop.f32.mrb[0].mxu0
    %v1689 = vpop.f32.mrb[0].mxu0
    %v1690 = vpop.f32.mrb[0].mxu0
    %1691 = vdwg.mxu0
    %v1692 = vadd.f32 %v180, %v1687
    %v1693 = vxor.u32 %v1627, 2147483648
    %v1694 = vmul.f32 %v1693, 1.442695
    %v1695 = vpow.pop %v1694
    %v1696 = vadd.f32 %v1695, 1.0
    %v1697 = vrcp.pop %v1696
    %v1698 = vmul.f32 1.0, %v1697
    %v1699 = vtanh.pop %v1627
    %v1701 = vrot.slane %v1516, 6
    %v1703 = vmul.f32 %v1698, %v1701
    %1705 = vrot.lane.b32.xlu0 %v1699, 64
    %v1706 = vpop.permute.xlu0 %1705
    %v1708 = vmul.f32 %v1698, %v1706
    %1710 = vrot.lane.b32.xlu0 %v1708, 32
    %v1711 = vpop.permute.xlu0 %1710
    %v1713 = vadd.f32 %v1703, %v1711
    %v1714 = vtanh.pop %v1713
    %1716 = vrot.lane.b32.xlu0 %v1714, 64
    %v1717 = vpop.permute.xlu0 %1716
    %v1719 = vmul.f32 %v1698, %v1717
    %v1720 = vxor.u32 %v1692, 2147483648
    %v1721 = vmul.f32 %v1720, 1.442695
    %v1722 = vpow.pop %v1721
    %v1723 = vadd.f32 %v1722, 1.0
    %v1724 = vrcp.pop %v1723
    %v1725 = vmul.f32 1.0, %v1724
    %v1726 = vtanh.pop %v1692
    %v1728 = vrot.slane %v1543, 2
    %v1730 = vmul.f32 %v1725, %v1728
    %1732 = vrot.lane.b32.xlu0 %v1726, 64
    %v1733 = vpop.permute.xlu0 %1732
    %v1735 = vmul.f32 %v1725, %v1733
    %1737 = vrot.lane.b32.xlu0 %v1735, 32
    %v1738 = vpop.permute.xlu0 %1737
    %v1740 = vadd.f32 %v1730, %v1738
    %v1741 = vtanh.pop %v1740
    %1743 = vrot.lane.b32.xlu0 %v1741, 64
    %v1744 = vpop.permute.xlu0 %1743
    %v1746 = vmul.f32 %v1725, %v1744
    %1748 = vrot.lane.b32.xlu0 %v1719, 32
    %v1749 = vpop.permute.xlu0 %1748
    %1751 = vst.msk [vmem:[#allocation2 + $0x8] sm:$0xc0] %vm365, %v1749
    %1753 = vrot.lane.b32.xlu0 %v1746, 32
    %v1754 = vpop.permute.xlu0 %1753
    %1756 = vst.msk [vmem:[#allocation3] sm:$0x3] %vm359, %v1754
    %v1757 = vld [vmem:[#allocation2] sm:$0xff]
    %v1758 = vld [vmem:[#allocation2 + $0x8] sm:$0xff]
    %v1759 = vpack.c.bf16 %v1758, %v1757
    %v1760 = vld [vmem:[%s5] sm:$0xff]
    %v1761 = vld [vmem:[%s5 + $0x8] sm:$0xff]
    %v1762 = vld [vmem:[%s5 + $0x10] sm:$0xff]
    %v1763 = vld [vmem:[%s5 + $0x18] sm:$0xff]
    %v1764 = vld [vmem:[#allocation3] sm:$0xff]
    %v1765 = vld [vmem:[#allocation3 + $0x8] sm:$0xff]
    %v1766 = vpack.c.bf16 %v1765, %v1764
    %v1767 = vld [vmem:[%s5 + $0x20] sm:$0xff]
    %v1768 = vld [vmem:[%s5 + $0x28] sm:$0xff]
    %v1769 = vld [vmem:[%s5 + $0x30] sm:$0xff]
    %v1770 = vld [vmem:[%s5 + $0x38] sm:$0xff]
    %v1775 = vunpack.c.l.b16 %v1767
    %v1776 = vunpack.c.h.b16 %v1767
    %v1777 = vunpack.c.l.b16 %v1768
    %v1778 = vunpack.c.h.b16 %v1768
    %v1779 = vunpack.c.l.b16 %v1769
    %v1780 = vunpack.c.h.b16 %v1769
    %v1781 = vunpack.c.l.b16 %v1770
    %v1782 = vunpack.c.h.b16 %v1770
    %v1783 = vpack.c.b16 %v1777, %v1775
    %v1784 = vpack.c.b16 %v1778, %v1776
    %v1785 = vpack.c.b16 %v1781, %v1779
    %v1786 = vpack.c.b16 %v1782, %v1780
    %v1792 = vsel %vm202, %v1766, 0
    %1794 = vmatprep.subr.bf16.mxu0 %v1784
    %1795 = vmatpush1.bf16.msra.mxu0 %v1783
    %1796 = vmatprep.subr.bf16.mxu0 %v1786
    %1797 = vmatpush1.bf16.msra.mxu0 %v1785
    %1798 = vmatprep.subr.bf16.mxu0 0
    %1799 = vmatpush1.bf16.msra.mxu0 0
    %1800 = vmatprep.subr.bf16.mxu0 0
    %1801 = vmatpush1.bf16.msra.mxu0 0
    %1802 = vmatprep.subr.bf16.mxu0 0
    %1803 = vmatpush1.bf16.msra.mxu0 0
    %1804 = vmatprep.subr.bf16.mxu0 0
    %1805 = vmatpush1.bf16.msra.mxu0 0
    %1806 = vmatprep.subr.bf16.mxu0 0
    %1807 = vmatpush1.bf16.msra.mxu0 0
    %1808 = vmatprep.subr.bf16.mxu0 0
    %1809 = vmatpush1.bf16.msra.mxu0 0
    %1810 = vmatprep.subr.bf16.mxu0 0
    %1811 = vmatpush1.bf16.msra.mxu0 0
    %1812 = vmatprep.subr.bf16.mxu0 0
    %1813 = vmatpush1.bf16.msra.mxu0 0
    %1814 = vmatprep.subr.bf16.mxu0 0
    %1815 = vmatpush1.bf16.msra.mxu0 0
    %1816 = vmatprep.subr.bf16.mxu0 0
    %1817 = vmatpush1.bf16.msra.mxu0 0
    %1818 = vmatprep.subr.bf16.mxu0 0
    %1819 = vmatpush1.bf16.msra.mxu0 0
    %1820 = vmatprep.subr.bf16.mxu0 0
    %1821 = vmatpush1.bf16.msra.mxu0 0
    %1822 = vmatprep.subr.bf16.mxu0 0
    %1823 = vmatpush1.bf16.msra.mxu0 0
    %1824 = vmatprep.subr.bf16.mxu0 0
    %1825 = vmatpush1.bf16.msra.mxu0 0
    %1826 = vmatprep.mubr.bf16.mxu0 0
    %1827 = vmatmul.mubr.bf16.gmra.mrb[0].mxu0 %v1792
    %v1828 = vpop.f32.mrb[0].mxu0
    %v1829 = vadd.f32 0.0, %v1828
    %v1830 = vpop.f32.mrb[0].mxu0
    %v1831 = vadd.f32 0.0, %v1830
    %v1832 = vpop.f32.mrb[0].mxu0
    %v1833 = vadd.f32 0.0, %v1832
    %v1834 = vpop.f32.mrb[0].mxu0
    %v1835 = vadd.f32 0.0, %v1834
    %1836 = vdwg.mxu0
    %v1841 = vunpack.c.l.b16 %v1760
    %v1842 = vunpack.c.h.b16 %v1760
    %v1843 = vunpack.c.l.b16 %v1761
    %v1844 = vunpack.c.h.b16 %v1761
    %v1845 = vunpack.c.l.b16 %v1762
    %v1846 = vunpack.c.h.b16 %v1762
    %v1847 = vunpack.c.l.b16 %v1763
    %v1848 = vunpack.c.h.b16 %v1763
    %v1849 = vpack.c.b16 %v1843, %v1841
    %v1850 = vpack.c.b16 %v1844, %v1842
    %v1851 = vpack.c.b16 %v1847, %v1845
    %v1852 = vpack.c.b16 %v1848, %v1846
    %v1858 = vsel %vm202, %v1759, 0
    %1860 = vmatprep.subr.bf16.mxu0 %v1850
    %1861 = vmatpush1.bf16.msra.mxu0 %v1849
    %1862 = vmatprep.subr.bf16.mxu0 %v1852
    %1863 = vmatpush1.bf16.msra.mxu0 %v1851
    %1864 = vmatprep.subr.bf16.mxu0 0
    %1865 = vmatpush1.bf16.msra.mxu0 0
    %1866 = vmatprep.subr.bf16.mxu0 0
    %1867 = vmatpush1.bf16.msra.mxu0 0
    %1868 = vmatprep.subr.bf16.mxu0 0
    %1869 = vmatpush1.bf16.msra.mxu0 0
    %1870 = vmatprep.subr.bf16.mxu0 0
    %1871 = vmatpush1.bf16.msra.mxu0 0
    %1872 = vmatprep.subr.bf16.mxu0 0
    %1873 = vmatpush1.bf16.msra.mxu0 0
    %1874 = vmatprep.subr.bf16.mxu0 0
    %1875 = vmatpush1.bf16.msra.mxu0 0
    %1876 = vmatprep.subr.bf16.mxu0 0
    %1877 = vmatpush1.bf16.msra.mxu0 0
    %1878 = vmatprep.subr.bf16.mxu0 0
    %1879 = vmatpush1.bf16.msra.mxu0 0
    %1880 = vmatprep.subr.bf16.mxu0 0
    %1881 = vmatpush1.bf16.msra.mxu0 0
    %1882 = vmatprep.subr.bf16.mxu0 0
    %1883 = vmatpush1.bf16.msra.mxu0 0
    %1884 = vmatprep.subr.bf16.mxu0 0
    %1885 = vmatpush1.bf16.msra.mxu0 0
    %1886 = vmatprep.subr.bf16.mxu0 0
    %1887 = vmatpush1.bf16.msra.mxu0 0
    %1888 = vmatprep.subr.bf16.mxu0 0
    %1889 = vmatpush1.bf16.msra.mxu0 0
    %1890 = vmatprep.subr.bf16.mxu0 0
    %1891 = vmatpush1.bf16.msra.mxu0 0
    %1892 = vmatprep.mubr.bf16.mxu0 0
    %1893 = vmatmul.mubr.bf16.gmra.mrb[0].mxu0 %v1858
    %v1894 = vpop.f32.mrb[0].mxu0
    %v1895 = vadd.f32 %v1829, %v1894
    %v1896 = vpop.f32.mrb[0].mxu0
    %v1897 = vadd.f32 %v1831, %v1896
    %v1898 = vpop.f32.mrb[0].mxu0
    %v1899 = vadd.f32 %v1833, %v1898
    %v1900 = vpop.f32.mrb[0].mxu0
    %v1901 = vadd.f32 %v1835, %v1900
    %1902 = vdwg.mxu0
    %v1903 = vld [vmem:[%s8] sm:$0x3]
    %v1905 = vlaneseq
    %v1906 = vshrl.u32 %v1905, 7
    %v1907 = vsub.s32 0, %v1906
    %v1908 = vrot.slane %v1903, %v1907
    %v1909 = vlaneseq
    %v1910 = vshrl.u32 %v1909, 7
    %v1911 = vsub.s32 1, %v1910
    %v1912 = vrot.slane %v1903, %v1911
    %v1915 = vadd.f32 %v1895, %v1908
    %v1916 = vadd.f32 %v1897, %v1912
    %v1917 = vadd.f32 %v1899, %v1908
    %v1918 = vadd.f32 %v1901, %v1912
    %v1919 = vld [vmem:[#allocation10] sm:$0xf]
    %v1920 = vld [vmem:[#allocation10 + $0x4] sm:$0xf]
    %v1921 = vld [vmem:[#allocation10 + $0x8] sm:$0xf]
    %v1922 = vld [vmem:[#allocation10 + $0xc] sm:$0xf]
    %v1927 = vunpack.c.l.b16 %v1919
    %v1928 = vunpack.c.l.b16 %v1920
    %v1929 = vunpack.c.l.b16 %v1921
    %v1930 = vunpack.c.l.b16 %v1922
    %v1931 = vpack.c.b16 %v1928, %v1927
    %v1932 = vpack.c.b16 %v1930, %v1929
    %1935 = vmatprep.subr.bf16.mxu0 0
    %1936 = vmatpush1.bf16.msra.mxu0 %v1931
    %1937 = vmatprep.subr.bf16.mxu0 0
    %1938 = vmatpush1.bf16.msra.mxu0 %v1932
    %1939 = vmatprep.subr.bf16.mxu0 0
    %1940 = vmatpush1.bf16.msra.mxu0 0
    %1941 = vmatprep.subr.bf16.mxu0 0
    %1942 = vmatpush1.bf16.msra.mxu0 0
    %1943 = vmatprep.subr.bf16.mxu0 0
    %1944 = vmatpush1.bf16.msra.mxu0 0
    %1945 = vmatprep.subr.bf16.mxu0 0
    %1946 = vmatpush1.bf16.msra.mxu0 0
    %1947 = vmatprep.subr.bf16.mxu0 0
    %1948 = vmatpush1.bf16.msra.mxu0 0
    %1949 = vmatprep.subr.bf16.mxu0 0
    %1950 = vmatpush1.bf16.msra.mxu0 0
    %1951 = vmatprep.subr.bf16.mxu0 0
    %1952 = vmatpush1.bf16.msra.mxu0 0
    %1953 = vmatprep.subr.bf16.mxu0 0
    %1954 = vmatpush1.bf16.msra.mxu0 0
    %1955 = vmatprep.subr.bf16.mxu0 0
    %1956 = vmatpush1.bf16.msra.mxu0 0
    %1957 = vmatprep.subr.bf16.mxu0 0
    %1958 = vmatpush1.bf16.msra.mxu0 0
    %1959 = vmatprep.subr.bf16.mxu0 0
    %1960 = vmatpush1.bf16.msra.mxu0 0
    %1961 = vmatprep.subr.bf16.mxu0 0
    %1962 = vmatpush1.bf16.msra.mxu0 0
    %1963 = vmatprep.subr.bf16.mxu0 0
    %1964 = vmatpush1.bf16.msra.mxu0 0
    %1965 = vmatprep.subr.bf16.mxu0 0
    %1966 = vmatpush1.bf16.msra.mxu0 0
    %1967 = vmatprep.mubr.bf16.mxu0 0
    %1968 = vmatmul.mubr.bf16.gmra.mrb[0].mxu0 %v204
    %v1969 = vpop.f32.mrb[0].mxu0
    %v1970 = vadd.f32 0.0, %v1969
    %v1971 = vpop.f32.mrb[0].mxu0
    %v1972 = vpop.f32.mrb[0].mxu0
    %v1973 = vpop.f32.mrb[0].mxu0
    %1974 = vdwg.mxu0
    %v1975 = vadd.f32 %v1915, %v1970
    %v1976 = vld [vmem:[#allocation12] sm:$0xf]
    %v1977 = vld [vmem:[#allocation12 + $0x4] sm:$0xf]
    %v1978 = vld [vmem:[#allocation12 + $0x8] sm:$0xf]
    %v1979 = vld [vmem:[#allocation12 + $0xc] sm:$0xf]
    %v1984 = vunpack.c.l.b16 %v1976
    %v1985 = vunpack.c.l.b16 %v1977
    %v1986 = vunpack.c.l.b16 %v1978
    %v1987 = vunpack.c.l.b16 %v1979
    %v1988 = vpack.c.b16 %v1985, %v1984
    %v1989 = vpack.c.b16 %v1987, %v1986
    %1992 = vmatprep.subr.bf16.mxu0 0
    %1993 = vmatpush1.bf16.msra.mxu0 %v1988
    %1994 = vmatprep.subr.bf16.mxu0 0
    %1995 = vmatpush1.bf16.msra.mxu0 %v1989
    %1996 = vmatprep.subr.bf16.mxu0 0
    %1997 = vmatpush1.bf16.msra.mxu0 0
    %1998 = vmatprep.subr.bf16.mxu0 0
    %1999 = vmatpush1.bf16.msra.mxu0 0
    %2000 = vmatprep.subr.bf16.mxu0 0
    %2001 = vmatpush1.bf16.msra.mxu0 0
    %2002 = vmatprep.subr.bf16.mxu0 0
    %2003 = vmatpush1.bf16.msra.mxu0 0
    %2004 = vmatprep.subr.bf16.mxu0 0
    %2005 = vmatpush1.bf16.msra.mxu0 0
    %2006 = vmatprep.subr.bf16.mxu0 0
    %2007 = vmatpush1.bf16.msra.mxu0 0
    %2008 = vmatprep.subr.bf16.mxu0 0
    %2009 = vmatpush1.bf16.msra.mxu0 0
    %2010 = vmatprep.subr.bf16.mxu0 0
    %2011 = vmatpush1.bf16.msra.mxu0 0
    %2012 = vmatprep.subr.bf16.mxu0 0
    %2013 = vmatpush1.bf16.msra.mxu0 0
    %2014 = vmatprep.subr.bf16.mxu0 0
    %2015 = vmatpush1.bf16.msra.mxu0 0
    %2016 = vmatprep.subr.bf16.mxu0 0
    %2017 = vmatpush1.bf16.msra.mxu0 0
    %2018 = vmatprep.subr.bf16.mxu0 0
    %2019 = vmatpush1.bf16.msra.mxu0 0
    %2020 = vmatprep.subr.bf16.mxu0 0
    %2021 = vmatpush1.bf16.msra.mxu0 0
    %2022 = vmatprep.subr.bf16.mxu0 0
    %2023 = vmatpush1.bf16.msra.mxu0 0
    %2024 = vmatprep.mubr.bf16.mxu0 0
    %2025 = vmatmul.mubr.bf16.gmra.mrb[0].mxu0 %v204
    %v2026 = vpop.f32.mrb[0].mxu0
    %v2027 = vadd.f32 0.0, %v2026
    %v2028 = vpop.f32.mrb[0].mxu0
    %v2029 = vpop.f32.mrb[0].mxu0
    %v2030 = vpop.f32.mrb[0].mxu0
    %2031 = vdwg.mxu0
    %v2033 = vrot.slane %v2027, 2
    %v2035 = vadd.f32 %v1918, %v2033
    %v2036 = vxor.u32 %v1975, 2147483648
    %v2037 = vmul.f32 %v2036, 1.442695
    %v2038 = vpow.pop %v2037
    %v2039 = vadd.f32 %v2038, 1.0
    %v2040 = vrcp.pop %v2039
    %v2041 = vmul.f32 1.0, %v2040
    %v2042 = vtanh.pop %v1975
    %v2043 = vmul.f32 %v2041, 0.0
    %2045 = vrot.lane.b32.xlu0 %v2042, 64
    %v2046 = vpop.permute.xlu0 %2045
    %v2048 = vmul.f32 %v2041, %v2046
    %2050 = vrot.lane.b32.xlu0 %v2048, 32
    %v2051 = vpop.permute.xlu0 %2050
    %v2053 = vadd.f32 %v2043, %v2051
    %v2054 = vtanh.pop %v2053
    %2056 = vrot.lane.b32.xlu0 %v2054, 64
    %v2057 = vpop.permute.xlu0 %2056
    %v2059 = vmul.f32 %v2041, %v2057
    %v2060 = vxor.u32 %v2035, 2147483648
    %v2061 = vmul.f32 %v2060, 1.442695
    %v2062 = vpow.pop %v2061
    %v2063 = vadd.f32 %v2062, 1.0
    %v2064 = vrcp.pop %v2063
    %v2065 = vmul.f32 1.0, %v2064
    %v2066 = vtanh.pop %v2035
    %v2067 = vmul.f32 %v2065, 0.0
    %2069 = vrot.lane.b32.xlu0 %v2066, 64
    %v2070 = vpop.permute.xlu0 %2069
    %v2072 = vmul.f32 %v2065, %v2070
    %2074 = vrot.lane.b32.xlu0 %v2072, 32
    %v2075 = vpop.permute.xlu0 %2074
    %v2077 = vadd.f32 %v2067, %v2075
    %v2078 = vtanh.pop %v2077
    %2080 = vrot.lane.b32.xlu0 %v2078, 64
    %v2081 = vpop.permute.xlu0 %2080
    %v2083 = vmul.f32 %v2065, %v2081
    %v2084 = vpack.c.bf16 %v2059, %v2059
    %2086 = vrot.lane.b32.xlu0 %v2084, 32
    %v2087 = vpop.permute.xlu0 %2086
    %v2089 = vsel %vm202, %v2087, 0
    %2091 = vmatprep.subr.bf16.mxu0 0
    %2092 = vmatpush1.bf16.msra.mxu0 %v1931
    %2093 = vmatprep.subr.bf16.mxu0 0
    %2094 = vmatpush1.bf16.msra.mxu0 %v1932
    %2095 = vmatprep.subr.bf16.mxu0 0
    %2096 = vmatpush1.bf16.msra.mxu0 0
    %2097 = vmatprep.subr.bf16.mxu0 0
    %2098 = vmatpush1.bf16.msra.mxu0 0
    %2099 = vmatprep.subr.bf16.mxu0 0
    %2100 = vmatpush1.bf16.msra.mxu0 0
    %2101 = vmatprep.subr.bf16.mxu0 0
    %2102 = vmatpush1.bf16.msra.mxu0 0
    %2103 = vmatprep.subr.bf16.mxu0 0
    %2104 = vmatpush1.bf16.msra.mxu0 0
    %2105 = vmatprep.subr.bf16.mxu0 0
    %2106 = vmatpush1.bf16.msra.mxu0 0
    %2107 = vmatprep.subr.bf16.mxu0 0
    %2108 = vmatpush1.bf16.msra.mxu0 0
    %2109 = vmatprep.subr.bf16.mxu0 0
    %2110 = vmatpush1.bf16.msra.mxu0 0
    %2111 = vmatprep.subr.bf16.mxu0 0
    %2112 = vmatpush1.bf16.msra.mxu0 0
    %2113 = vmatprep.subr.bf16.mxu0 0
    %2114 = vmatpush1.bf16.msra.mxu0 0
    %2115 = vmatprep.subr.bf16.mxu0 0
    %2116 = vmatpush1.bf16.msra.mxu0 0
    %2117 = vmatprep.subr.bf16.mxu0 0
    %2118 = vmatpush1.bf16.msra.mxu0 0
    %2119 = vmatprep.subr.bf16.mxu0 0
    %2120 = vmatpush1.bf16.msra.mxu0 0
    %2121 = vmatprep.subr.bf16.mxu0 0
    %2122 = vmatpush1.bf16.msra.mxu0 0
    %2123 = vmatprep.mubr.bf16.mxu0 0
    %2124 = vmatmul.mubr.bf16.gmra.mrb[0].mxu0 %v2089
    %v2125 = vpop.f32.mrb[0].mxu0
    %v2126 = vadd.f32 0.0, %v2125
    %v2127 = vpop.f32.mrb[0].mxu0
    %v2128 = vpop.f32.mrb[0].mxu0
    %v2129 = vpop.f32.mrb[0].mxu0
    %2130 = vdwg.mxu0
    %v2132 = vrot.slane %v2126, 6
    %v2134 = vadd.f32 %v1915, %v2132
    %v2135 = vpack.c.bf16 %v2083, %v2083
    %v2137 = vrot.slane %v2135, 3
    %2138 = vrot.lane.b32.xlu0 %v2137, 32
    %v2139 = vpop.permute.xlu0 %2138
    %v2141 = vsel %vm202, %v2139, 0
    %2143 = vmatprep.subr.bf16.mxu0 0
    %2144 = vmatpush1.bf16.msra.mxu0 %v1988
    %2145 = vmatprep.subr.bf16.mxu0 0
    %2146 = vmatpush1.bf16.msra.mxu0 %v1989
    %2147 = vmatprep.subr.bf16.mxu0 0
    %2148 = vmatpush1.bf16.msra.mxu0 0
    %2149 = vmatprep.subr.bf16.mxu0 0
    %2150 = vmatpush1.bf16.msra.mxu0 0
    %2151 = vmatprep.subr.bf16.mxu0 0
    %2152 = vmatpush1.bf16.msra.mxu0 0
    %2153 = vmatprep.subr.bf16.mxu0 0
    %2154 = vmatpush1.bf16.msra.mxu0 0
    %2155 = vmatprep.subr.bf16.mxu0 0
    %2156 = vmatpush1.bf16.msra.mxu0 0
    %2157 = vmatprep.subr.bf16.mxu0 0
    %2158 = vmatpush1.bf16.msra.mxu0 0
    %2159 = vmatprep.subr.bf16.mxu0 0
    %2160 = vmatpush1.bf16.msra.mxu0 0
    %2161 = vmatprep.subr.bf16.mxu0 0
    %2162 = vmatpush1.bf16.msra.mxu0 0
    %2163 = vmatprep.subr.bf16.mxu0 0
    %2164 = vmatpush1.bf16.msra.mxu0 0
    %2165 = vmatprep.subr.bf16.mxu0 0
    %2166 = vmatpush1.bf16.msra.mxu0 0
    %2167 = vmatprep.subr.bf16.mxu0 0
    %2168 = vmatpush1.bf16.msra.mxu0 0
    %2169 = vmatprep.subr.bf16.mxu0 0
    %2170 = vmatpush1.bf16.msra.mxu0 0
    %2171 = vmatprep.subr.bf16.mxu0 0
    %2172 = vmatpush1.bf16.msra.mxu0 0
    %2173 = vmatprep.subr.bf16.mxu0 0
    %2174 = vmatpush1.bf16.msra.mxu0 0
    %2175 = vmatprep.mubr.bf16.mxu0 0
    %2176 = vmatmul.mubr.bf16.gmra.mrb[0].mxu0 %v2141
    %v2177 = vpop.f32.mrb[0].mxu0
    %v2178 = vadd.f32 0.0, %v2177
    %v2179 = vpop.f32.mrb[0].mxu0
    %v2180 = vpop.f32.mrb[0].mxu0
    %v2181 = vpop.f32.mrb[0].mxu0
    %2182 = vdwg.mxu0
    %v2184 = vrot.slane %v2178, 4
    %v2186 = vadd.f32 %v1918, %v2184
    %v2187 = vxor.u32 %v2134, 2147483648
    %v2188 = vmul.f32 %v2187, 1.442695
    %v2189 = vpow.pop %v2188
    %v2190 = vadd.f32 %v2189, 1.0
    %v2191 = vrcp.pop %v2190
    %v2192 = vmul.f32 1.0, %v2191
    %v2193 = vtanh.pop %v2134
    %v2195 = vrot.slane %v2053, 6
    %v2197 = vmul.f32 %v2192, %v2195
    %2199 = vrot.lane.b32.xlu0 %v2193, 64
    %v2200 = vpop.permute.xlu0 %2199
    %v2202 = vmul.f32 %v2192, %v2200
    %2204 = vrot.lane.b32.xlu0 %v2202, 32
    %v2205 = vpop.permute.xlu0 %2204
    %v2207 = vadd.f32 %v2197, %v2205
    %v2208 = vtanh.pop %v2207
    %2210 = vrot.lane.b32.xlu0 %v2208, 64
    %v2211 = vpop.permute.xlu0 %2210
    %v2213 = vmul.f32 %v2192, %v2211
    %v2214 = vxor.u32 %v2186, 2147483648
    %v2215 = vmul.f32 %v2214, 1.442695
    %v2216 = vpow.pop %v2215
    %v2217 = vadd.f32 %v2216, 1.0
    %v2218 = vrcp.pop %v2217
    %v2219 = vmul.f32 1.0, %v2218
    %v2220 = vtanh.pop %v2186
    %v2222 = vrot.slane %v2077, 2
    %v2224 = vmul.f32 %v2219, %v2222
    %2226 = vrot.lane.b32.xlu0 %v2220, 64
    %v2227 = vpop.permute.xlu0 %2226
    %v2229 = vmul.f32 %v2219, %v2227
    %2231 = vrot.lane.b32.xlu0 %v2229, 32
    %v2232 = vpop.permute.xlu0 %2231
    %v2234 = vadd.f32 %v2224, %v2232
    %v2235 = vtanh.pop %v2234
    %2237 = vrot.lane.b32.xlu0 %v2235, 64
    %v2238 = vpop.permute.xlu0 %2237
    %v2240 = vmul.f32 %v2219, %v2238
    %v2241 = vpack.c.bf16 %v2213, %v2213
    %v2243 = vrot.slane %v2241, 1
    %2244 = vrot.lane.b32.xlu0 %v2243, 32
    %v2245 = vpop.permute.xlu0 %2244
    %v2247 = vsel %vm202, %v2245, 0
    %2249 = vmatprep.subr.bf16.mxu0 0
    %2250 = vmatpush1.bf16.msra.mxu0 %v1931
    %2251 = vmatprep.subr.bf16.mxu0 0
    %2252 = vmatpush1.bf16.msra.mxu0 %v1932
    %2253 = vmatprep.subr.bf16.mxu0 0
    %2254 = vmatpush1.bf16.msra.mxu0 0
    %2255 = vmatprep.subr.bf16.mxu0 0
    %2256 = vmatpush1.bf16.msra.mxu0 0
    %2257 = vmatprep.subr.bf16.mxu0 0
    %2258 = vmatpush1.bf16.msra.mxu0 0
    %2259 = vmatprep.subr.bf16.mxu0 0
    %2260 = vmatpush1.bf16.msra.mxu0 0
    %2261 = vmatprep.subr.bf16.mxu0 0
    %2262 = vmatpush1.bf16.msra.mxu0 0
    %2263 = vmatprep.subr.bf16.mxu0 0
    %2264 = vmatpush1.bf16.msra.mxu0 0
    %2265 = vmatprep.subr.bf16.mxu0 0
    %2266 = vmatpush1.bf16.msra.mxu0 0
    %2267 = vmatprep.subr.bf16.mxu0 0
    %2268 = vmatpush1.bf16.msra.mxu0 0
    %2269 = vmatprep.subr.bf16.mxu0 0
    %2270 = vmatpush1.bf16.msra.mxu0 0
    %2271 = vmatprep.subr.bf16.mxu0 0
    %2272 = vmatpush1.bf16.msra.mxu0 0
    %2273 = vmatprep.subr.bf16.mxu0 0
    %2274 = vmatpush1.bf16.msra.mxu0 0
    %2275 = vmatprep.subr.bf16.mxu0 0
    %2276 = vmatpush1.bf16.msra.mxu0 0
    %2277 = vmatprep.subr.bf16.mxu0 0
    %2278 = vmatpush1.bf16.msra.mxu0 0
    %2279 = vmatprep.subr.bf16.mxu0 0
    %2280 = vmatpush1.bf16.msra.mxu0 0
    %2281 = vmatprep.mubr.bf16.mxu0 0
    %2282 = vmatmul.mubr.bf16.gmra.mrb[0].mxu0 %v2247
    %v2283 = vpop.f32.mrb[0].mxu0
    %v2284 = vadd.f32 0.0, %v2283
    %v2285 = vpop.f32.mrb[0].mxu0
    %v2286 = vpop.f32.mrb[0].mxu0
    %v2287 = vpop.f32.mrb[0].mxu0
    %2288 = vdwg.mxu0
    %v2290 = vrot.slane %v2284, 4
    %v2292 = vadd.f32 %v1915, %v2290
    %v2293 = vpack.c.bf16 %v2240, %v2240
    %v2295 = vrot.slane %v2293, 2
    %2296 = vrot.lane.b32.xlu0 %v2295, 32
    %v2297 = vpop.permute.xlu0 %2296
    %v2299 = vsel %vm202, %v2297, 0
    %2301 = vmatprep.subr.bf16.mxu0 0
    %2302 = vmatpush1.bf16.msra.mxu0 %v1988
    %2303 = vmatprep.subr.bf16.mxu0 0
    %2304 = vmatpush1.bf16.msra.mxu0 %v1989
    %2305 = vmatprep.subr.bf16.mxu0 0
    %2306 = vmatpush1.bf16.msra.mxu0 0
    %2307 = vmatprep.subr.bf16.mxu0 0
    %2308 = vmatpush1.bf16.msra.mxu0 0
    %2309 = vmatprep.subr.bf16.mxu0 0
    %2310 = vmatpush1.bf16.msra.mxu0 0
    %2311 = vmatprep.subr.bf16.mxu0 0
    %2312 = vmatpush1.bf16.msra.mxu0 0
    %2313 = vmatprep.subr.bf16.mxu0 0
    %2314 = vmatpush1.bf16.msra.mxu0 0
    %2315 = vmatprep.subr.bf16.mxu0 0
    %2316 = vmatpush1.bf16.msra.mxu0 0
    %2317 = vmatprep.subr.bf16.mxu0 0
    %2318 = vmatpush1.bf16.msra.mxu0 0
    %2319 = vmatprep.subr.bf16.mxu0 0
    %2320 = vmatpush1.bf16.msra.mxu0 0
    %2321 = vmatprep.subr.bf16.mxu0 0
    %2322 = vmatpush1.bf16.msra.mxu0 0
    %2323 = vmatprep.subr.bf16.mxu0 0
    %2324 = vmatpush1.bf16.msra.mxu0 0
    %2325 = vmatprep.subr.bf16.mxu0 0
    %2326 = vmatpush1.bf16.msra.mxu0 0
    %2327 = vmatprep.subr.bf16.mxu0 0
    %2328 = vmatpush1.bf16.msra.mxu0 0
    %2329 = vmatprep.subr.bf16.mxu0 0
    %2330 = vmatpush1.bf16.msra.mxu0 0
    %2331 = vmatprep.subr.bf16.mxu0 0
    %2332 = vmatpush1.bf16.msra.mxu0 0
    %2333 = vmatprep.mubr.bf16.mxu0 0
    %2334 = vmatmul.mubr.bf16.gmra.mrb[0].mxu0 %v2299
    %v2335 = vpop.f32.mrb[0].mxu0
    %v2336 = vadd.f32 0.0, %v2335
    %v2337 = vpop.f32.mrb[0].mxu0
    %v2338 = vpop.f32.mrb[0].mxu0
    %v2339 = vpop.f32.mrb[0].mxu0
    %2340 = vdwg.mxu0
    %v2342 = vrot.slane %v2336, 6
    %v2344 = vadd.f32 %v1918, %v2342
    %v2345 = vxor.u32 %v2292, 2147483648
    %v2346 = vmul.f32 %v2345, 1.442695
    %v2347 = vpow.pop %v2346
    %v2348 = vadd.f32 %v2347, 1.0
    %v2349 = vrcp.pop %v2348
    %v2350 = vmul.f32 1.0, %v2349
    %v2351 = vtanh.pop %v2292
    %v2353 = vrot.slane %v2207, 6
    %v2355 = vmul.f32 %v2350, %v2353
    %2357 = vrot.lane.b32.xlu0 %v2351, 64
    %v2358 = vpop.permute.xlu0 %2357
    %v2360 = vmul.f32 %v2350, %v2358
    %2362 = vrot.lane.b32.xlu0 %v2360, 32
    %v2363 = vpop.permute.xlu0 %2362
    %v2365 = vadd.f32 %v2355, %v2363
    %v2366 = vtanh.pop %v2365
    %2368 = vrot.lane.b32.xlu0 %v2366, 64
    %v2369 = vpop.permute.xlu0 %2368
    %v2371 = vmul.f32 %v2350, %v2369
    %v2372 = vxor.u32 %v2344, 2147483648
    %v2373 = vmul.f32 %v2372, 1.442695
    %v2374 = vpow.pop %v2373
    %v2375 = vadd.f32 %v2374, 1.0
    %v2376 = vrcp.pop %v2375
    %v2377 = vmul.f32 1.0, %v2376
    %v2378 = vtanh.pop %v2344
    %v2380 = vrot.slane %v2234, 2
    %v2382 = vmul.f32 %v2377, %v2380
    %2384 = vrot.lane.b32.xlu0 %v2378, 64
    %v2385 = vpop.permute.xlu0 %2384
    %v2387 = vmul.f32 %v2377, %v2385
    %2389 = vrot.lane.b32.xlu0 %v2387, 32
    %v2390 = vpop.permute.xlu0 %2389
    %v2392 = vadd.f32 %v2382, %v2390
    %v2393 = vtanh.pop %v2392
    %2395 = vrot.lane.b32.xlu0 %v2393, 64
    %v2396 = vpop.permute.xlu0 %2395
    %v2398 = vmul.f32 %v2377, %v2396
    %v2399 = vpack.c.bf16 %v2371, %v2371
    %v2401 = vrot.slane %v2399, 2
    %2402 = vrot.lane.b32.xlu0 %v2401, 32
    %v2403 = vpop.permute.xlu0 %2402
    %v2405 = vsel %vm202, %v2403, 0
    %2407 = vmatprep.subr.bf16.mxu0 0
    %2408 = vmatpush1.bf16.msra.mxu0 %v1931
    %2409 = vmatprep.subr.bf16.mxu0 0
    %2410 = vmatpush1.bf16.msra.mxu0 %v1932
    %2411 = vmatprep.subr.bf16.mxu0 0
    %2412 = vmatpush1.bf16.msra.mxu0 0
    %2413 = vmatprep.subr.bf16.mxu0 0
    %2414 = vmatpush1.bf16.msra.mxu0 0
    %2415 = vmatprep.subr.bf16.mxu0 0
    %2416 = vmatpush1.bf16.msra.mxu0 0
    %2417 = vmatprep.subr.bf16.mxu0 0
    %2418 = vmatpush1.bf16.msra.mxu0 0
    %2419 = vmatprep.subr.bf16.mxu0 0
    %2420 = vmatpush1.bf16.msra.mxu0 0
    %2421 = vmatprep.subr.bf16.mxu0 0
    %2422 = vmatpush1.bf16.msra.mxu0 0
    %2423 = vmatprep.subr.bf16.mxu0 0
    %2424 = vmatpush1.bf16.msra.mxu0 0
    %2425 = vmatprep.subr.bf16.mxu0 0
    %2426 = vmatpush1.bf16.msra.mxu0 0
    %2427 = vmatprep.subr.bf16.mxu0 0
    %2428 = vmatpush1.bf16.msra.mxu0 0
    %2429 = vmatprep.subr.bf16.mxu0 0
    %2430 = vmatpush1.bf16.msra.mxu0 0
    %2431 = vmatprep.subr.bf16.mxu0 0
    %2432 = vmatpush1.bf16.msra.mxu0 0
    %2433 = vmatprep.subr.bf16.mxu0 0
    %2434 = vmatpush1.bf16.msra.mxu0 0
    %2435 = vmatprep.subr.bf16.mxu0 0
    %2436 = vmatpush1.bf16.msra.mxu0 0
    %2437 = vmatprep.subr.bf16.mxu0 0
    %2438 = vmatpush1.bf16.msra.mxu0 0
    %2439 = vmatprep.mubr.bf16.mxu0 0
    %2440 = vmatmul.mubr.bf16.gmra.mrb[0].mxu0 %v2405
    %v2441 = vpop.f32.mrb[0].mxu0
    %v2442 = vadd.f32 0.0, %v2441
    %v2443 = vpop.f32.mrb[0].mxu0
    %v2444 = vpop.f32.mrb[0].mxu0
    %v2445 = vpop.f32.mrb[0].mxu0
    %2446 = vdwg.mxu0
    %v2448 = vrot.slane %v2442, 2
    %v2450 = vadd.f32 %v1915, %v2448
    %v2451 = vpack.c.bf16 %v2398, %v2398
    %v2453 = vrot.slane %v2451, 1
    %2454 = vrot.lane.b32.xlu0 %v2453, 32
    %v2455 = vpop.permute.xlu0 %2454
    %v2457 = vsel %vm202, %v2455, 0
    %2459 = vmatprep.subr.bf16.mxu0 0
    %2460 = vmatpush1.bf16.msra.mxu0 %v1988
    %2461 = vmatprep.subr.bf16.mxu0 0
    %2462 = vmatpush1.bf16.msra.mxu0 %v1989
    %2463 = vmatprep.subr.bf16.mxu0 0
    %2464 = vmatpush1.bf16.msra.mxu0 0
    %2465 = vmatprep.subr.bf16.mxu0 0
    %2466 = vmatpush1.bf16.msra.mxu0 0
    %2467 = vmatprep.subr.bf16.mxu0 0
    %2468 = vmatpush1.bf16.msra.mxu0 0
    %2469 = vmatprep.subr.bf16.mxu0 0
    %2470 = vmatpush1.bf16.msra.mxu0 0
    %2471 = vmatprep.subr.bf16.mxu0 0
    %2472 = vmatpush1.bf16.msra.mxu0 0
    %2473 = vmatprep.subr.bf16.mxu0 0
    %2474 = vmatpush1.bf16.msra.mxu0 0
    %2475 = vmatprep.subr.bf16.mxu0 0
    %2476 = vmatpush1.bf16.msra.mxu0 0
    %2477 = vmatprep.subr.bf16.mxu0 0
    %2478 = vmatpush1.bf16.msra.mxu0 0
    %2479 = vmatprep.subr.bf16.mxu0 0
    %2480 = vmatpush1.bf16.msra.mxu0 0
    %2481 = vmatprep.subr.bf16.mxu0 0
    %2482 = vmatpush1.bf16.msra.mxu0 0
    %2483 = vmatprep.subr.bf16.mxu0 0
    %2484 = vmatpush1.bf16.msra.mxu0 0
    %2485 = vmatprep.subr.bf16.mxu0 0
    %2486 = vmatpush1.bf16.msra.mxu0 0
    %2487 = vmatprep.subr.bf16.mxu0 0
    %2488 = vmatpush1.bf16.msra.mxu0 0
    %2489 = vmatprep.subr.bf16.mxu0 0
    %2490 = vmatpush1.bf16.msra.mxu0 0
    %2491 = vmatprep.mubr.bf16.mxu0 0
    %2492 = vmatmul.mubr.bf16.gmra.mrb[0].mxu0 %v2457
    %v2493 = vpop.f32.mrb[0].mxu0
    %v2494 = vadd.f32 0.0, %v2493
    %v2495 = vpop.f32.mrb[0].mxu0
    %v2496 = vpop.f32.mrb[0].mxu0
    %v2497 = vpop.f32.mrb[0].mxu0
    %2498 = vdwg.mxu0
    %v2499 = vadd.f32 %v1918, %v2494
    %v2500 = vxor.u32 %v2450, 2147483648
    %v2501 = vmul.f32 %v2500, 1.442695
    %v2502 = vpow.pop %v2501
    %v2503 = vadd.f32 %v2502, 1.0
    %v2504 = vrcp.pop %v2503
    %v2505 = vmul.f32 1.0, %v2504
    %v2506 = vtanh.pop %v2450
    %v2508 = vrot.slane %v2365, 6
    %v2510 = vmul.f32 %v2505, %v2508
    %2512 = vrot.lane.b32.xlu0 %v2506, 64
    %v2513 = vpop.permute.xlu0 %2512
    %v2515 = vmul.f32 %v2505, %v2513
    %2517 = vrot.lane.b32.xlu0 %v2515, 32
    %v2518 = vpop.permute.xlu0 %2517
    %v2520 = vadd.f32 %v2510, %v2518
    %v2521 = vtanh.pop %v2520
    %2523 = vrot.lane.b32.xlu0 %v2521, 64
    %v2524 = vpop.permute.xlu0 %2523
    %v2526 = vmul.f32 %v2505, %v2524
    %v2527 = vxor.u32 %v2499, 2147483648
    %v2528 = vmul.f32 %v2527, 1.442695
    %v2529 = vpow.pop %v2528
    %v2530 = vadd.f32 %v2529, 1.0
    %v2531 = vrcp.pop %v2530
    %v2532 = vmul.f32 1.0, %v2531
    %v2533 = vtanh.pop %v2499
    %v2535 = vrot.slane %v2392, 2
    %v2537 = vmul.f32 %v2532, %v2535
    %2539 = vrot.lane.b32.xlu0 %v2533, 64
    %v2540 = vpop.permute.xlu0 %2539
    %v2542 = vmul.f32 %v2532, %v2540
    %2544 = vrot.lane.b32.xlu0 %v2542, 32
    %v2545 = vpop.permute.xlu0 %2544
    %v2547 = vadd.f32 %v2537, %v2545
    %v2548 = vtanh.pop %v2547
    %2550 = vrot.lane.b32.xlu0 %v2548, 64
    %v2551 = vpop.permute.xlu0 %2550
    %v2553 = vmul.f32 %v2532, %v2551
    %v2554 = vpack.c.bf16 %v2526, %v2526
    %v2556 = vrot.slane %v2554, 3
    %2557 = vrot.lane.b32.xlu0 %v2556, 32
    %v2558 = vpop.permute.xlu0 %2557
    %v2560 = vsel %vm202, %v2558, 0
    %2562 = vmatprep.subr.bf16.mxu0 0
    %2563 = vmatpush1.bf16.msra.mxu0 %v1931
    %2564 = vmatprep.subr.bf16.mxu0 0
    %2565 = vmatpush1.bf16.msra.mxu0 %v1932
    %2566 = vmatprep.subr.bf16.mxu0 0
    %2567 = vmatpush1.bf16.msra.mxu0 0
    %2568 = vmatprep.subr.bf16.mxu0 0
    %2569 = vmatpush1.bf16.msra.mxu0 0
    %2570 = vmatprep.subr.bf16.mxu0 0
    %2571 = vmatpush1.bf16.msra.mxu0 0
    %2572 = vmatprep.subr.bf16.mxu0 0
    %2573 = vmatpush1.bf16.msra.mxu0 0
    %2574 = vmatprep.subr.bf16.mxu0 0
    %2575 = vmatpush1.bf16.msra.mxu0 0
    %2576 = vmatprep.subr.bf16.mxu0 0
    %2577 = vmatpush1.bf16.msra.mxu0 0
    %2578 = vmatprep.subr.bf16.mxu0 0
    %2579 = vmatpush1.bf16.msra.mxu0 0
    %2580 = vmatprep.subr.bf16.mxu0 0
    %2581 = vmatpush1.bf16.msra.mxu0 0
    %2582 = vmatprep.subr.bf16.mxu0 0
    %2583 = vmatpush1.bf16.msra.mxu0 0
    %2584 = vmatprep.subr.bf16.mxu0 0
    %2585 = vmatpush1.bf16.msra.mxu0 0
    %2586 = vmatprep.subr.bf16.mxu0 0
    %2587 = vmatpush1.bf16.msra.mxu0 0
    %2588 = vmatprep.subr.bf16.mxu0 0
    %2589 = vmatpush1.bf16.msra.mxu0 0
    %2590 = vmatprep.subr.bf16.mxu0 0
    %2591 = vmatpush1.bf16.msra.mxu0 0
    %2592 = vmatprep.subr.bf16.mxu0 0
    %2593 = vmatpush1.bf16.msra.mxu0 0
    %2594 = vmatprep.mubr.bf16.mxu0 0
    %2595 = vmatmul.mubr.bf16.gmra.mrb[0].mxu0 %v2560
    %v2596 = vpop.f32.mrb[0].mxu0
    %v2597 = vadd.f32 0.0, %v2596
    %v2598 = vpop.f32.mrb[0].mxu0
    %v2599 = vpop.f32.mrb[0].mxu0
    %v2600 = vpop.f32.mrb[0].mxu0
    %2601 = vdwg.mxu0
    %v2602 = vadd.f32 %v1917, %v2597
    %v2603 = vpack.c.bf16 %v2553, %v2553
    %2605 = vrot.lane.b32.xlu0 %v2603, 32
    %v2606 = vpop.permute.xlu0 %2605
    %v2608 = vsel %vm202, %v2606, 0
    %2610 = vmatprep.subr.bf16.mxu0 0
    %2611 = vmatpush1.bf16.msra.mxu0 %v1988
    %2612 = vmatprep.subr.bf16.mxu0 0
    %2613 = vmatpush1.bf16.msra.mxu0 %v1989
    %2614 = vmatprep.subr.bf16.mxu0 0
    %2615 = vmatpush1.bf16.msra.mxu0 0
    %2616 = vmatprep.subr.bf16.mxu0 0
    %2617 = vmatpush1.bf16.msra.mxu0 0
    %2618 = vmatprep.subr.bf16.mxu0 0
    %2619 = vmatpush1.bf16.msra.mxu0 0
    %2620 = vmatprep.subr.bf16.mxu0 0
    %2621 = vmatpush1.bf16.msra.mxu0 0
    %2622 = vmatprep.subr.bf16.mxu0 0
    %2623 = vmatpush1.bf16.msra.mxu0 0
    %2624 = vmatprep.subr.bf16.mxu0 0
    %2625 = vmatpush1.bf16.msra.mxu0 0
    %2626 = vmatprep.subr.bf16.mxu0 0
    %2627 = vmatpush1.bf16.msra.mxu0 0
    %2628 = vmatprep.subr.bf16.mxu0 0
    %2629 = vmatpush1.bf16.msra.mxu0 0
    %2630 = vmatprep.subr.bf16.mxu0 0
    %2631 = vmatpush1.bf16.msra.mxu0 0
    %2632 = vmatprep.subr.bf16.mxu0 0
    %2633 = vmatpush1.bf16.msra.mxu0 0
    %2634 = vmatprep.subr.bf16.mxu0 0
    %2635 = vmatpush1.bf16.msra.mxu0 0
    %2636 = vmatprep.subr.bf16.mxu0 0
    %2637 = vmatpush1.bf16.msra.mxu0 0
    %2638 = vmatprep.subr.bf16.mxu0 0
    %2639 = vmatpush1.bf16.msra.mxu0 0
    %2640 = vmatprep.subr.bf16.mxu0 0
    %2641 = vmatpush1.bf16.msra.mxu0 0
    %2642 = vmatprep.mubr.bf16.mxu0 0
    %2643 = vmatmul.mubr.bf16.gmra.mrb[0].mxu0 %v2608
    %v2644 = vpop.f32.mrb[0].mxu0
    %v2645 = vadd.f32 0.0, %v2644
    %v2646 = vpop.f32.mrb[0].mxu0
    %v2647 = vpop.f32.mrb[0].mxu0
    %v2648 = vpop.f32.mrb[0].mxu0
    %2649 = vdwg.mxu0
    %v2651 = vrot.slane %v2645, 2
    %v2653 = vadd.f32 %v1916, %v2651
    %v2654 = vxor.u32 %v2602, 2147483648
    %v2655 = vmul.f32 %v2654, 1.442695
    %v2656 = vpow.pop %v2655
    %v2657 = vadd.f32 %v2656, 1.0
    %v2658 = vrcp.pop %v2657
    %v2659 = vmul.f32 1.0, %v2658
    %v2660 = vtanh.pop %v2602
    %v2662 = vrot.slane %v2520, 6
    %v2664 = vmul.f32 %v2659, %v2662
    %2666 = vrot.lane.b32.xlu0 %v2660, 64
    %v2667 = vpop.permute.xlu0 %2666
    %v2669 = vmul.f32 %v2659, %v2667
    %2671 = vrot.lane.b32.xlu0 %v2669, 32
    %v2672 = vpop.permute.xlu0 %2671
    %v2674 = vadd.f32 %v2664, %v2672
    %v2675 = vtanh.pop %v2674
    %2677 = vrot.lane.b32.xlu0 %v2675, 64
    %v2678 = vpop.permute.xlu0 %2677
    %v2680 = vmul.f32 %v2659, %v2678
    %v2681 = vxor.u32 %v2653, 2147483648
    %v2682 = vmul.f32 %v2681, 1.442695
    %v2683 = vpow.pop %v2682
    %v2684 = vadd.f32 %v2683, 1.0
    %v2685 = vrcp.pop %v2684
    %v2686 = vmul.f32 1.0, %v2685
    %v2687 = vtanh.pop %v2653
    %v2689 = vrot.slane %v2547, 2
    %v2691 = vmul.f32 %v2686, %v2689
    %2693 = vrot.lane.b32.xlu0 %v2687, 64
    %v2694 = vpop.permute.xlu0 %2693
    %v2696 = vmul.f32 %v2686, %v2694
    %2698 = vrot.lane.b32.xlu0 %v2696, 32
    %v2699 = vpop.permute.xlu0 %2698
    %v2701 = vadd.f32 %v2691, %v2699
    %v2702 = vtanh.pop %v2701
    %2704 = vrot.lane.b32.xlu0 %v2702, 64
    %v2705 = vpop.permute.xlu0 %2704
    %v2707 = vmul.f32 %v2686, %v2705
    %v2708 = vpack.c.bf16 %v2680, %v2680
    %2710 = vrot.lane.b32.xlu0 %v2708, 32
    %v2711 = vpop.permute.xlu0 %2710
    %v2713 = vsel %vm202, %v2711, 0
    %2715 = vmatprep.subr.bf16.mxu0 0
    %2716 = vmatpush1.bf16.msra.mxu0 %v1931
    %2717 = vmatprep.subr.bf16.mxu0 0
    %2718 = vmatpush1.bf16.msra.mxu0 %v1932
    %2719 = vmatprep.subr.bf16.mxu0 0
    %2720 = vmatpush1.bf16.msra.mxu0 0
    %2721 = vmatprep.subr.bf16.mxu0 0
    %2722 = vmatpush1.bf16.msra.mxu0 0
    %2723 = vmatprep.subr.bf16.mxu0 0
    %2724 = vmatpush1.bf16.msra.mxu0 0
    %2725 = vmatprep.subr.bf16.mxu0 0
    %2726 = vmatpush1.bf16.msra.mxu0 0
    %2727 = vmatprep.subr.bf16.mxu0 0
    %2728 = vmatpush1.bf16.msra.mxu0 0
    %2729 = vmatprep.subr.bf16.mxu0 0
    %2730 = vmatpush1.bf16.msra.mxu0 0
    %2731 = vmatprep.subr.bf16.mxu0 0
    %2732 = vmatpush1.bf16.msra.mxu0 0
    %2733 = vmatprep.subr.bf16.mxu0 0
    %2734 = vmatpush1.bf16.msra.mxu0 0
    %2735 = vmatprep.subr.bf16.mxu0 0
    %2736 = vmatpush1.bf16.msra.mxu0 0
    %2737 = vmatprep.subr.bf16.mxu0 0
    %2738 = vmatpush1.bf16.msra.mxu0 0
    %2739 = vmatprep.subr.bf16.mxu0 0
    %2740 = vmatpush1.bf16.msra.mxu0 0
    %2741 = vmatprep.subr.bf16.mxu0 0
    %2742 = vmatpush1.bf16.msra.mxu0 0
    %2743 = vmatprep.subr.bf16.mxu0 0
    %2744 = vmatpush1.bf16.msra.mxu0 0
    %2745 = vmatprep.subr.bf16.mxu0 0
    %2746 = vmatpush1.bf16.msra.mxu0 0
    %2747 = vmatprep.mubr.bf16.mxu0 0
    %2748 = vmatmul.mubr.bf16.gmra.mrb[0].mxu0 %v2713
    %v2749 = vpop.f32.mrb[0].mxu0
    %v2750 = vadd.f32 0.0, %v2749
    %v2751 = vpop.f32.mrb[0].mxu0
    %v2752 = vpop.f32.mrb[0].mxu0
    %v2753 = vpop.f32.mrb[0].mxu0
    %2754 = vdwg.mxu0
    %v2756 = vrot.slane %v2750, 6
    %v2758 = vadd.f32 %v1917, %v2756
    %v2759 = vpack.c.bf16 %v2707, %v2707
    %v2761 = vrot.slane %v2759, 3
    %2762 = vrot.lane.b32.xlu0 %v2761, 32
    %v2763 = vpop.permute.xlu0 %2762
    %v2765 = vsel %vm202, %v2763, 0
    %2767 = vmatprep.subr.bf16.mxu0 0
    %2768 = vmatpush1.bf16.msra.mxu0 %v1988
    %2769 = vmatprep.subr.bf16.mxu0 0
    %2770 = vmatpush1.bf16.msra.mxu0 %v1989
    %2771 = vmatprep.subr.bf16.mxu0 0
    %2772 = vmatpush1.bf16.msra.mxu0 0
    %2773 = vmatprep.subr.bf16.mxu0 0
    %2774 = vmatpush1.bf16.msra.mxu0 0
    %2775 = vmatprep.subr.bf16.mxu0 0
    %2776 = vmatpush1.bf16.msra.mxu0 0
    %2777 = vmatprep.subr.bf16.mxu0 0
    %2778 = vmatpush1.bf16.msra.mxu0 0
    %2779 = vmatprep.subr.bf16.mxu0 0
    %2780 = vmatpush1.bf16.msra.mxu0 0
    %2781 = vmatprep.subr.bf16.mxu0 0
    %2782 = vmatpush1.bf16.msra.mxu0 0
    %2783 = vmatprep.subr.bf16.mxu0 0
    %2784 = vmatpush1.bf16.msra.mxu0 0
    %2785 = vmatprep.subr.bf16.mxu0 0
    %2786 = vmatpush1.bf16.msra.mxu0 0
    %2787 = vmatprep.subr.bf16.mxu0 0
    %2788 = vmatpush1.bf16.msra.mxu0 0
    %2789 = vmatprep.subr.bf16.mxu0 0
    %2790 = vmatpush1.bf16.msra.mxu0 0
    %2791 = vmatprep.subr.bf16.mxu0 0
    %2792 = vmatpush1.bf16.msra.mxu0 0
    %2793 = vmatprep.subr.bf16.mxu0 0
    %2794 = vmatpush1.bf16.msra.mxu0 0
    %2795 = vmatprep.subr.bf16.mxu0 0
    %2796 = vmatpush1.bf16.msra.mxu0 0
    %2797 = vmatprep.subr.bf16.mxu0 0
    %2798 = vmatpush1.bf16.msra.mxu0 0
    %2799 = vmatprep.mubr.bf16.mxu0 0
    %2800 = vmatmul.mubr.bf16.gmra.mrb[0].mxu0 %v2765
    %v2801 = vpop.f32.mrb[0].mxu0
    %v2802 = vadd.f32 0.0, %v2801
    %v2803 = vpop.f32.mrb[0].mxu0
    %v2804 = vpop.f32.mrb[0].mxu0
    %v2805 = vpop.f32.mrb[0].mxu0
    %2806 = vdwg.mxu0
    %v2808 = vrot.slane %v2802, 4
    %v2810 = vadd.f32 %v1916, %v2808
    %v2811 = vxor.u32 %v2758, 2147483648
    %v2812 = vmul.f32 %v2811, 1.442695
    %v2813 = vpow.pop %v2812
    %v2814 = vadd.f32 %v2813, 1.0
    %v2815 = vrcp.pop %v2814
    %v2816 = vmul.f32 1.0, %v2815
    %v2817 = vtanh.pop %v2758
    %v2819 = vrot.slane %v2674, 6
    %v2821 = vmul.f32 %v2816, %v2819
    %2823 = vrot.lane.b32.xlu0 %v2817, 64
    %v2824 = vpop.permute.xlu0 %2823
    %v2826 = vmul.f32 %v2816, %v2824
    %2828 = vrot.lane.b32.xlu0 %v2826, 32
    %v2829 = vpop.permute.xlu0 %2828
    %v2831 = vadd.f32 %v2821, %v2829
    %v2832 = vtanh.pop %v2831
    %2834 = vrot.lane.b32.xlu0 %v2832, 64
    %v2835 = vpop.permute.xlu0 %2834
    %v2837 = vmul.f32 %v2816, %v2835
    %v2838 = vxor.u32 %v2810, 2147483648
    %v2839 = vmul.f32 %v2838, 1.442695
    %v2840 = vpow.pop %v2839
    %v2841 = vadd.f32 %v2840, 1.0
    %v2842 = vrcp.pop %v2841
    %v2843 = vmul.f32 1.0, %v2842
    %v2844 = vtanh.pop %v2810
    %v2846 = vrot.slane %v2701, 2
    %v2848 = vmul.f32 %v2843, %v2846
    %2850 = vrot.lane.b32.xlu0 %v2844, 64
    %v2851 = vpop.permute.xlu0 %2850
    %v2853 = vmul.f32 %v2843, %v2851
    %2855 = vrot.lane.b32.xlu0 %v2853, 32
    %v2856 = vpop.permute.xlu0 %2855
    %v2858 = vadd.f32 %v2848, %v2856
    %v2859 = vtanh.pop %v2858
    %2861 = vrot.lane.b32.xlu0 %v2859, 64
    %v2862 = vpop.permute.xlu0 %2861
    %v2864 = vmul.f32 %v2843, %v2862
    %v2865 = vpack.c.bf16 %v2837, %v2837
    %v2867 = vrot.slane %v2865, 1
    %2868 = vrot.lane.b32.xlu0 %v2867, 32
    %v2869 = vpop.permute.xlu0 %2868
    %v2871 = vsel %vm202, %v2869, 0
    %2873 = vmatprep.subr.bf16.mxu0 0
    %2874 = vmatpush1.bf16.msra.mxu0 %v1931
    %2875 = vmatprep.subr.bf16.mxu0 0
    %2876 = vmatpush1.bf16.msra.mxu0 %v1932
    %2877 = vmatprep.subr.bf16.mxu0 0
    %2878 = vmatpush1.bf16.msra.mxu0 0
    %2879 = vmatprep.subr.bf16.mxu0 0
    %2880 = vmatpush1.bf16.msra.mxu0 0
    %2881 = vmatprep.subr.bf16.mxu0 0
    %2882 = vmatpush1.bf16.msra.mxu0 0
    %2883 = vmatprep.subr.bf16.mxu0 0
    %2884 = vmatpush1.bf16.msra.mxu0 0
    %2885 = vmatprep.subr.bf16.mxu0 0
    %2886 = vmatpush1.bf16.msra.mxu0 0
    %2887 = vmatprep.subr.bf16.mxu0 0
    %2888 = vmatpush1.bf16.msra.mxu0 0
    %2889 = vmatprep.subr.bf16.mxu0 0
    %2890 = vmatpush1.bf16.msra.mxu0 0
    %2891 = vmatprep.subr.bf16.mxu0 0
    %2892 = vmatpush1.bf16.msra.mxu0 0
    %2893 = vmatprep.subr.bf16.mxu0 0
    %2894 = vmatpush1.bf16.msra.mxu0 0
    %2895 = vmatprep.subr.bf16.mxu0 0
    %2896 = vmatpush1.bf16.msra.mxu0 0
    %2897 = vmatprep.subr.bf16.mxu0 0
    %2898 = vmatpush1.bf16.msra.mxu0 0
    %2899 = vmatprep.subr.bf16.mxu0 0
    %2900 = vmatpush1.bf16.msra.mxu0 0
    %2901 = vmatprep.subr.bf16.mxu0 0
    %2902 = vmatpush1.bf16.msra.mxu0 0
    %2903 = vmatprep.subr.bf16.mxu0 0
    %2904 = vmatpush1.bf16.msra.mxu0 0
    %2905 = vmatprep.mubr.bf16.mxu0 0
    %2906 = vmatmul.mubr.bf16.gmra.mrb[0].mxu0 %v2871
    %v2907 = vpop.f32.mrb[0].mxu0
    %v2908 = vadd.f32 0.0, %v2907
    %v2909 = vpop.f32.mrb[0].mxu0
    %v2910 = vpop.f32.mrb[0].mxu0
    %v2911 = vpop.f32.mrb[0].mxu0
    %2912 = vdwg.mxu0
    %v2914 = vrot.slane %v2908, 4
    %v2916 = vadd.f32 %v1917, %v2914
    %v2917 = vpack.c.bf16 %v2864, %v2864
    %v2919 = vrot.slane %v2917, 2
    %2920 = vrot.lane.b32.xlu0 %v2919, 32
    %v2921 = vpop.permute.xlu0 %2920
    %v2923 = vsel %vm202, %v2921, 0
    %2925 = vmatprep.subr.bf16.mxu0 0
    %2926 = vmatpush1.bf16.msra.mxu0 %v1988
    %2927 = vmatprep.subr.bf16.mxu0 0
    %2928 = vmatpush1.bf16.msra.mxu0 %v1989
    %2929 = vmatprep.subr.bf16.mxu0 0
    %2930 = vmatpush1.bf16.msra.mxu0 0
    %2931 = vmatprep.subr.bf16.mxu0 0
    %2932 = vmatpush1.bf16.msra.mxu0 0
    %2933 = vmatprep.subr.bf16.mxu0 0
    %2934 = vmatpush1.bf16.msra.mxu0 0
    %2935 = vmatprep.subr.bf16.mxu0 0
    %2936 = vmatpush1.bf16.msra.mxu0 0
    %2937 = vmatprep.subr.bf16.mxu0 0
    %2938 = vmatpush1.bf16.msra.mxu0 0
    %2939 = vmatprep.subr.bf16.mxu0 0
    %2940 = vmatpush1.bf16.msra.mxu0 0
    %2941 = vmatprep.subr.bf16.mxu0 0
    %2942 = vmatpush1.bf16.msra.mxu0 0
    %2943 = vmatprep.subr.bf16.mxu0 0
    %2944 = vmatpush1.bf16.msra.mxu0 0
    %2945 = vmatprep.subr.bf16.mxu0 0
    %2946 = vmatpush1.bf16.msra.mxu0 0
    %2947 = vmatprep.subr.bf16.mxu0 0
    %2948 = vmatpush1.bf16.msra.mxu0 0
    %2949 = vmatprep.subr.bf16.mxu0 0
    %2950 = vmatpush1.bf16.msra.mxu0 0
    %2951 = vmatprep.subr.bf16.mxu0 0
    %2952 = vmatpush1.bf16.msra.mxu0 0
    %2953 = vmatprep.subr.bf16.mxu0 0
    %2954 = vmatpush1.bf16.msra.mxu0 0
    %2955 = vmatprep.subr.bf16.mxu0 0
    %2956 = vmatpush1.bf16.msra.mxu0 0
    %2957 = vmatprep.mubr.bf16.mxu0 0
    %2958 = vmatmul.mubr.bf16.gmra.mrb[0].mxu0 %v2923
    %v2959 = vpop.f32.mrb[0].mxu0
    %v2960 = vadd.f32 0.0, %v2959
    %v2961 = vpop.f32.mrb[0].mxu0
    %v2962 = vpop.f32.mrb[0].mxu0
    %v2963 = vpop.f32.mrb[0].mxu0
    %2964 = vdwg.mxu0
    %v2966 = vrot.slane %v2960, 6
    %v2968 = vadd.f32 %v1916, %v2966
    %v2969 = vxor.u32 %v2916, 2147483648
    %v2970 = vmul.f32 %v2969, 1.442695
    %v2971 = vpow.pop %v2970
    %v2972 = vadd.f32 %v2971, 1.0
    %v2973 = vrcp.pop %v2972
    %v2974 = vmul.f32 1.0, %v2973
    %v2975 = vtanh.pop %v2916
    %v2977 = vrot.slane %v2831, 6
    %v2979 = vmul.f32 %v2974, %v2977
    %2981 = vrot.lane.b32.xlu0 %v2975, 64
    %v2982 = vpop.permute.xlu0 %2981
    %v2984 = vmul.f32 %v2974, %v2982
    %2986 = vrot.lane.b32.xlu0 %v2984, 32
    %v2987 = vpop.permute.xlu0 %2986
    %v2989 = vadd.f32 %v2979, %v2987
    %v2990 = vtanh.pop %v2989
    %2992 = vrot.lane.b32.xlu0 %v2990, 64
    %v2993 = vpop.permute.xlu0 %2992
    %v2995 = vmul.f32 %v2974, %v2993
    %v2996 = vxor.u32 %v2968, 2147483648
    %v2997 = vmul.f32 %v2996, 1.442695
    %v2998 = vpow.pop %v2997
    %v2999 = vadd.f32 %v2998, 1.0
    %v3000 = vrcp.pop %v2999
    %v3001 = vmul.f32 1.0, %v3000
    %v3002 = vtanh.pop %v2968
    %v3004 = vrot.slane %v2858, 2
    %v3006 = vmul.f32 %v3001, %v3004
    %3008 = vrot.lane.b32.xlu0 %v3002, 64
    %v3009 = vpop.permute.xlu0 %3008
    %v3011 = vmul.f32 %v3001, %v3009
    %3013 = vrot.lane.b32.xlu0 %v3011, 32
    %v3014 = vpop.permute.xlu0 %3013
    %v3016 = vadd.f32 %v3006, %v3014
    %v3017 = vtanh.pop %v3016
    %3019 = vrot.lane.b32.xlu0 %v3017, 64
    %v3020 = vpop.permute.xlu0 %3019
    %v3022 = vmul.f32 %v3001, %v3020
    %v3023 = vpack.c.bf16 %v2995, %v2995
    %v3025 = vrot.slane %v3023, 2
    %3026 = vrot.lane.b32.xlu0 %v3025, 32
    %v3027 = vpop.permute.xlu0 %3026
    %v3029 = vsel %vm202, %v3027, 0
    %3031 = vmatprep.subr.bf16.mxu0 0
    %3032 = vmatpush1.bf16.msra.mxu0 %v1931
    %3033 = vmatprep.subr.bf16.mxu0 0
    %3034 = vmatpush1.bf16.msra.mxu0 %v1932
    %3035 = vmatprep.subr.bf16.mxu0 0
    %3036 = vmatpush1.bf16.msra.mxu0 0
    %3037 = vmatprep.subr.bf16.mxu0 0
    %3038 = vmatpush1.bf16.msra.mxu0 0
    %3039 = vmatprep.subr.bf16.mxu0 0
    %3040 = vmatpush1.bf16.msra.mxu0 0
    %3041 = vmatprep.subr.bf16.mxu0 0
    %3042 = vmatpush1.bf16.msra.mxu0 0
    %3043 = vmatprep.subr.bf16.mxu0 0
    %3044 = vmatpush1.bf16.msra.mxu0 0
    %3045 = vmatprep.subr.bf16.mxu0 0
    %3046 = vmatpush1.bf16.msra.mxu0 0
    %3047 = vmatprep.subr.bf16.mxu0 0
    %3048 = vmatpush1.bf16.msra.mxu0 0
    %3049 = vmatprep.subr.bf16.mxu0 0
    %3050 = vmatpush1.bf16.msra.mxu0 0
    %3051 = vmatprep.subr.bf16.mxu0 0
    %3052 = vmatpush1.bf16.msra.mxu0 0
    %3053 = vmatprep.subr.bf16.mxu0 0
    %3054 = vmatpush1.bf16.msra.mxu0 0
    %3055 = vmatprep.subr.bf16.mxu0 0
    %3056 = vmatpush1.bf16.msra.mxu0 0
    %3057 = vmatprep.subr.bf16.mxu0 0
    %3058 = vmatpush1.bf16.msra.mxu0 0
    %3059 = vmatprep.subr.bf16.mxu0 0
    %3060 = vmatpush1.bf16.msra.mxu0 0
    %3061 = vmatprep.subr.bf16.mxu0 0
    %3062 = vmatpush1.bf16.msra.mxu0 0
    %3063 = vmatprep.mubr.bf16.mxu0 0
    %3064 = vmatmul.mubr.bf16.gmra.mrb[0].mxu0 %v3029
    %v3065 = vpop.f32.mrb[0].mxu0
    %v3066 = vadd.f32 0.0, %v3065
    %v3067 = vpop.f32.mrb[0].mxu0
    %v3068 = vpop.f32.mrb[0].mxu0
    %v3069 = vpop.f32.mrb[0].mxu0
    %3070 = vdwg.mxu0
    %v3072 = vrot.slane %v3066, 2
    %v3074 = vadd.f32 %v1917, %v3072
    %v3075 = vpack.c.bf16 %v3022, %v3022
    %v3077 = vrot.slane %v3075, 1
    %3078 = vrot.lane.b32.xlu0 %v3077, 32
    %v3079 = vpop.permute.xlu0 %3078
    %v3081 = vsel %vm202, %v3079, 0
    %3083 = vmatprep.subr.bf16.mxu0 0
    %3084 = vmatpush1.bf16.msra.mxu0 %v1988
    %3085 = vmatprep.subr.bf16.mxu0 0
    %3086 = vmatpush1.bf16.msra.mxu0 %v1989
    %3087 = vmatprep.subr.bf16.mxu0 0
    %3088 = vmatpush1.bf16.msra.mxu0 0
    %3089 = vmatprep.subr.bf16.mxu0 0
    %3090 = vmatpush1.bf16.msra.mxu0 0
    %3091 = vmatprep.subr.bf16.mxu0 0
    %3092 = vmatpush1.bf16.msra.mxu0 0
    %3093 = vmatprep.subr.bf16.mxu0 0
    %3094 = vmatpush1.bf16.msra.mxu0 0
    %3095 = vmatprep.subr.bf16.mxu0 0
    %3096 = vmatpush1.bf16.msra.mxu0 0
    %3097 = vmatprep.subr.bf16.mxu0 0
    %3098 = vmatpush1.bf16.msra.mxu0 0
    %3099 = vmatprep.subr.bf16.mxu0 0
    %3100 = vmatpush1.bf16.msra.mxu0 0
    %3101 = vmatprep.subr.bf16.mxu0 0
    %3102 = vmatpush1.bf16.msra.mxu0 0
    %3103 = vmatprep.subr.bf16.mxu0 0
    %3104 = vmatpush1.bf16.msra.mxu0 0
    %3105 = vmatprep.subr.bf16.mxu0 0
    %3106 = vmatpush1.bf16.msra.mxu0 0
    %3107 = vmatprep.subr.bf16.mxu0 0
    %3108 = vmatpush1.bf16.msra.mxu0 0
    %3109 = vmatprep.subr.bf16.mxu0 0
    %3110 = vmatpush1.bf16.msra.mxu0 0
    %3111 = vmatprep.subr.bf16.mxu0 0
    %3112 = vmatpush1.bf16.msra.mxu0 0
    %3113 = vmatprep.subr.bf16.mxu0 0
    %3114 = vmatpush1.bf16.msra.mxu0 0
    %3115 = vmatprep.mubr.bf16.mxu0 0
    %3116 = vmatmul.mubr.bf16.gmra.mrb[0].mxu0 %v3081
    %v3117 = vpop.f32.mrb[0].mxu0
    %v3118 = vadd.f32 0.0, %v3117
    %v3119 = vpop.f32.mrb[0].mxu0
    %v3120 = vpop.f32.mrb[0].mxu0
    %v3121 = vpop.f32.mrb[0].mxu0
    %3122 = vdwg.mxu0
    %v3123 = vadd.f32 %v1916, %v3118
    %v3124 = vxor.u32 %v3074, 2147483648
    %v3125 = vmul.f32 %v3124, 1.442695
    %v3126 = vpow.pop %v3125
    %v3127 = vadd.f32 %v3126, 1.0
    %v3128 = vrcp.pop %v3127
    %v3129 = vmul.f32 1.0, %v3128
    %v3130 = vtanh.pop %v3074
    %v3132 = vrot.slane %v2989, 6
    %v3134 = vmul.f32 %v3129, %v3132
    %3136 = vrot.lane.b32.xlu0 %v3130, 64
    %v3137 = vpop.permute.xlu0 %3136
    %v3139 = vmul.f32 %v3129, %v3137
    %3141 = vrot.lane.b32.xlu0 %v3139, 32
    %v3142 = vpop.permute.xlu0 %3141
    %v3144 = vadd.f32 %v3134, %v3142
    %v3145 = vtanh.pop %v3144
    %3147 = vrot.lane.b32.xlu0 %v3145, 64
    %v3148 = vpop.permute.xlu0 %3147
    %v3150 = vmul.f32 %v3129, %v3148
    %v3151 = vxor.u32 %v3123, 2147483648
    %v3152 = vmul.f32 %v3151, 1.442695
    %v3153 = vpow.pop %v3152
    %v3154 = vadd.f32 %v3153, 1.0
    %v3155 = vrcp.pop %v3154
    %v3156 = vmul.f32 1.0, %v3155
    %v3157 = vtanh.pop %v3123
    %v3159 = vrot.slane %v3016, 2
    %v3161 = vmul.f32 %v3156, %v3159
    %3163 = vrot.lane.b32.xlu0 %v3157, 64
    %v3164 = vpop.permute.xlu0 %3163
    %v3166 = vmul.f32 %v3156, %v3164
    %3168 = vrot.lane.b32.xlu0 %v3166, 32
    %v3169 = vpop.permute.xlu0 %3168
    %v3171 = vadd.f32 %v3161, %v3169
    %v3172 = vtanh.pop %v3171
    %3174 = vrot.lane.b32.xlu0 %v3172, 64
    %v3175 = vpop.permute.xlu0 %3174
    %v3177 = vmul.f32 %v3156, %v3175
    %v3178 = vld [vmem:[%s9] sm:$0xff]
    %v3179 = vld [vmem:[%s9 + $0x8] sm:$0xff]
    %v3180 = vld [vmem:[%s9 + $0x10] sm:$0xff]
    %v3181 = vld [vmem:[%s9 + $0x18] sm:$0xff]
    %v3182 = vld [vmem:[%s9 + $0x20] sm:$0xff]
    %v3183 = vld [vmem:[%s9 + $0x28] sm:$0xff]
    %v3184 = vld [vmem:[%s9 + $0x30] sm:$0xff]
    %v3185 = vld [vmem:[%s9 + $0x38] sm:$0xff]
    %v3187 = vrot.slane %v3150, 6
    %3188 = vrot.lane.b32.xlu0 %v3187, 32
    %v3189 = vpop.permute.xlu0 %3188
    %v3190 = vsel %vm202, %v3189, 0
    %3192 = vmatprep.subr.mxu0 0.0
    %3193 = vmatpush1.msra.mxu0 %v3182
    %3194 = vmatprep.subr.mxu0 0.0
    %3195 = vmatpush1.msra.mxu0 %v3183
    %3196 = vmatprep.subr.mxu0 0.0
    %3197 = vmatpush1.msra.mxu0 %v3184
    %3198 = vmatprep.subr.mxu0 0.0
    %3199 = vmatpush1.msra.mxu0 %v3185
    %3200 = vmatprep.subr.mxu0 0.0
    %3201 = vmatpush1.msra.mxu0 0.0
    %3202 = vmatprep.subr.mxu0 0.0
    %3203 = vmatpush1.msra.mxu0 0.0
    %3204 = vmatprep.subr.mxu0 0.0
    %3205 = vmatpush1.msra.mxu0 0.0
    %3206 = vmatprep.subr.mxu0 0.0
    %3207 = vmatpush1.msra.mxu0 0.0
    %3208 = vmatprep.subr.mxu0 0.0
    %3209 = vmatpush1.msra.mxu0 0.0
    %3210 = vmatprep.subr.mxu0 0.0
    %3211 = vmatpush1.msra.mxu0 0.0
    %3212 = vmatprep.subr.mxu0 0.0
    %3213 = vmatpush1.msra.mxu0 0.0
    %3214 = vmatprep.subr.mxu0 0.0
    %3215 = vmatpush1.msra.mxu0 0.0
    %3216 = vmatprep.subr.mxu0 0.0
    %3217 = vmatpush1.msra.mxu0 0.0
    %3218 = vmatprep.subr.mxu0 0.0
    %3219 = vmatpush1.msra.mxu0 0.0
    %3220 = vmatprep.subr.mxu0 0.0
    %3221 = vmatpush1.msra.mxu0 0.0
    %3222 = vmatprep.subr.mxu0 0.0
    %3223 = vmatpush1.msra.mxu0 0.0
    %3224 = vmatprep.subr.mxu0 0.0
    %3225 = vmatpush1.msra.mxu0 0.0
    %3226 = vmatprep.subr.mxu0 0.0
    %3227 = vmatpush1.msra.mxu0 0.0
    %3228 = vmatprep.subr.mxu0 0.0
    %3229 = vmatpush1.msra.mxu0 0.0
    %3230 = vmatprep.subr.mxu0 0.0
    %3231 = vmatpush1.msra.mxu0 0.0
    %3232 = vmatprep.subr.mxu0 0.0
    %3233 = vmatpush1.msra.mxu0 0.0
    %3234 = vmatprep.subr.mxu0 0.0
    %3235 = vmatpush1.msra.mxu0 0.0
    %3236 = vmatprep.subr.mxu0 0.0
    %3237 = vmatpush1.msra.mxu0 0.0
    %3238 = vmatprep.subr.mxu0 0.0
    %3239 = vmatpush1.msra.mxu0 0.0
    %3240 = vmatprep.subr.mxu0 0.0
    %3241 = vmatpush1.msra.mxu0 0.0
    %3242 = vmatprep.subr.mxu0 0.0
    %3243 = vmatpush1.msra.mxu0 0.0
    %3244 = vmatprep.subr.mxu0 0.0
    %3245 = vmatpush1.msra.mxu0 0.0
    %3246 = vmatprep.subr.mxu0 0.0
    %3247 = vmatpush1.msra.mxu0 0.0
    %3248 = vmatprep.subr.mxu0 0.0
    %3249 = vmatpush1.msra.mxu0 0.0
    %3250 = vmatprep.subr.mxu0 0.0
    %3251 = vmatpush1.msra.mxu0 0.0
    %3252 = vmatprep.subr.mxu0 0.0
    %3253 = vmatpush1.msra.mxu0 0.0
    %3254 = vmatprep.subr.mxu0 0.0
    %3255 = vmatpush1.msra.mxu0 0.0
    %3256 = vmatprep.mubr.f32.mxu0 0.0
    %3257 = vmatmul.mubr.f32.gmra.mrb[0].mxu0 %v3190
    %v3258 = vpop.f32.mrb[0].mxu0
    %v3259 = vadd.f32 0.0, %v3258
    %v3260 = vpop.f32.mrb[0].mxu0
    %3261 = vdwg.mxu0
    %3263 = vrot.lane.b32.xlu0 %v3177, 32
    %v3264 = vpop.permute.xlu0 %3263
    %v3265 = vsel %vm202, %v3264, 0
    %3267 = vmatprep.subr.mxu0 0.0
    %3268 = vmatpush1.msra.mxu0 %v3178
    %3269 = vmatprep.subr.mxu0 0.0
    %3270 = vmatpush1.msra.mxu0 %v3179
    %3271 = vmatprep.subr.mxu0 0.0
    %3272 = vmatpush1.msra.mxu0 %v3180
    %3273 = vmatprep.subr.mxu0 0.0
    %3274 = vmatpush1.msra.mxu0 %v3181
    %3275 = vmatprep.subr.mxu0 0.0
    %3276 = vmatpush1.msra.mxu0 0.0
    %3277 = vmatprep.subr.mxu0 0.0
    %3278 = vmatpush1.msra.mxu0 0.0
    %3279 = vmatprep.subr.mxu0 0.0
    %3280 = vmatpush1.msra.mxu0 0.0
    %3281 = vmatprep.subr.mxu0 0.0
    %3282 = vmatpush1.msra.mxu0 0.0
    %3283 = vmatprep.subr.mxu0 0.0
    %3284 = vmatpush1.msra.mxu0 0.0
    %3285 = vmatprep.subr.mxu0 0.0
    %3286 = vmatpush1.msra.mxu0 0.0
    %3287 = vmatprep.subr.mxu0 0.0
    %3288 = vmatpush1.msra.mxu0 0.0
    %3289 = vmatprep.subr.mxu0 0.0
    %3290 = vmatpush1.msra.mxu0 0.0
    %3291 = vmatprep.subr.mxu0 0.0
    %3292 = vmatpush1.msra.mxu0 0.0
    %3293 = vmatprep.subr.mxu0 0.0
    %3294 = vmatpush1.msra.mxu0 0.0
    %3295 = vmatprep.subr.mxu0 0.0
    %3296 = vmatpush1.msra.mxu0 0.0
    %3297 = vmatprep.subr.mxu0 0.0
    %3298 = vmatpush1.msra.mxu0 0.0
    %3299 = vmatprep.subr.mxu0 0.0
    %3300 = vmatpush1.msra.mxu0 0.0
    %3301 = vmatprep.subr.mxu0 0.0
    %3302 = vmatpush1.msra.mxu0 0.0
    %3303 = vmatprep.subr.mxu0 0.0
    %3304 = vmatpush1.msra.mxu0 0.0
    %3305 = vmatprep.subr.mxu0 0.0
    %3306 = vmatpush1.msra.mxu0 0.0
    %3307 = vmatprep.subr.mxu0 0.0
    %3308 = vmatpush1.msra.mxu0 0.0
    %3309 = vmatprep.subr.mxu0 0.0
    %3310 = vmatpush1.msra.mxu0 0.0
    %3311 = vmatprep.subr.mxu0 0.0
    %3312 = vmatpush1.msra.mxu0 0.0
    %3313 = vmatprep.subr.mxu0 0.0
    %3314 = vmatpush1.msra.mxu0 0.0
    %3315 = vmatprep.subr.mxu0 0.0
    %3316 = vmatpush1.msra.mxu0 0.0
    %3317 = vmatprep.subr.mxu0 0.0
    %3318 = vmatpush1.msra.mxu0 0.0
    %3319 = vmatprep.subr.mxu0 0.0
    %3320 = vmatpush1.msra.mxu0 0.0
    %3321 = vmatprep.subr.mxu0 0.0
    %3322 = vmatpush1.msra.mxu0 0.0
    %3323 = vmatprep.subr.mxu0 0.0
    %3324 = vmatpush1.msra.mxu0 0.0
    %3325 = vmatprep.subr.mxu0 0.0
    %3326 = vmatpush1.msra.mxu0 0.0
    %3327 = vmatprep.subr.mxu0 0.0
    %3328 = vmatpush1.msra.mxu0 0.0
    %3329 = vmatprep.subr.mxu0 0.0
    %3330 = vmatpush1.msra.mxu0 0.0
    %3331 = vmatprep.mubr.f32.mxu0 0.0
    %3332 = vmatmul.mubr.f32.gmra.mrb[0].mxu0 %v3265
    %v3333 = vpop.f32.mrb[0].mxu0
    %v3334 = vadd.f32 %v3259, %v3333
    %v3335 = vpop.f32.mrb[0].mxu0
    %3336 = vdwg.mxu0
    %v3337 = vld [vmem:[%s10] sm:$0x1]
    %v3339 = vlaneseq
    %v3340 = vshrl.u32 %v3339, 7
    %v3341 = vsub.s32 0, %v3340
    %v3342 = vrot.slane %v3337, %v3341
    %v3344 = vadd.f32 %v3334, %v3342
    %vm3345 = vcmask 9216
    %3346 = vst.msk [vmem:[#allocation13] sm:$0x3] %vm3345, %v3344
    // Predicated region
    $region66: #{tpu_custom_call.1} parent=1 // pred_check
      _
    $region67: #{tpu_custom_call.1} parent=1 // pred_check_branch
      %3348 = sbr.rel (0) target = $region69
    $region68: #{tpu_custom_call.1} parent=1 // pred_region
      %s3350 = ssub.s32 32, 32
      %3351 = vsyncadd [#allocation6], %s3350
      %s3353 = sshll.u32 [#allocation13], 4
      %s3354 = int_to_ptr.vmem [resolvable:$true] %s3353
      %3356 = dma.vmem_to_hbm [thread:$0]  %s3354, 32, %s11, [#allocation6]
    $region69: #{tpu_custom_call.1} parent=1 // pred_fallthru
      _
    // Predicated region
    $region70: #{tpu_custom_call.1} parent=1 // pred_check
      _
    $region71: #{tpu_custom_call.1} parent=1 // pred_check_branch
      %3358 = sbr.rel (0) target = $region73
    $region72: #{tpu_custom_call.1} parent=1 // pred_region
      %3359 = dma.done [#allocation6], 32
    $region73: #{tpu_custom_call.1} parent=1 // pred_fallthru
      _
    %3360 = vsyncpa [#allocation5], 1
    %3361 = vsyncpa [#allocation8], 1
    %3362 = vsyncpa [#allocation11], 1
    %3363 = vsyncpa [#allocation6], 1

</llo_original>
